<compile_context>
chip_gen: v5e
topology: v5e:2x2
jax: 0.10.0
libtpu: 0.0.40
codegen_flags: <defaults>
</compile_context>

<pallas_src>
import functools

import jax
import jax.numpy as jnp
from jax.experimental import pallas as pl
from jax.experimental.pallas import tpu as pltpu

# compressedSigmoid constants (IIM PBM):  out = para * sigmoid(x) + bias
SIG_PARA = 1.0
SIG_BIAS = 0.2

_VMEM_LIMIT = 48 * 1024 * 1024  # safe on v7x (64 MiB); raise toward ~100 MiB on v5e/v6e.

# Tap order t = kh*3 + kw  <->  spatial offsets (dh, dw) = (kh-1, kw-1), padding = 1.
_TAPS = [(kh - 1, kw - 1) for kh in range(3) for kw in range(3)]


# ----------------------------------------------------------------------------
# Fused kernel: extractor conv + density head + Binar module + binarize + loss.
# All values live in the channel-major (C, H*W) layout (pixels on lanes).
# ----------------------------------------------------------------------------
def _fused_kernel(*refs, H, W, Cin, Cf, Ct, compute_loss):
    if compute_loss:
        (x_ref, mask_ref, wext_ref, wb1_ref, wpre_ref, wthr_ref,
         thr_ref, pre_ref, bin_ref, l1_ref, sq_ref) = refs
    else:
        (x_ref, wext_ref, wb1_ref, wpre_ref, wthr_ref,
         thr_ref, pre_ref, bin_ref) = refs
        mask_ref = l1_ref = sq_ref = None

    HW = H * W

    # W-boundary validity masks for the horizontal taps (built once, lane-dense).
    wpos = jax.lax.broadcasted_iota(jnp.int32, (1, HW), 1) % W
    w_ok = {
        -1: (wpos >= 1).astype(jnp.bfloat16),
        0: None,
        1: (wpos <= W - 2).astype(jnp.bfloat16),
    }

    def shift_tap(x2d, dh, dw):
        """x2d (C, HW): value of pixel (h+dh, w+dw), zero outside the image."""
        d = dh * W + dw
        C = x2d.shape[0]
        if d > 0:
            sh = jnp.concatenate([x2d[:, d:], jnp.zeros((C, d), x2d.dtype)], axis=1)
        elif d < 0:
            sh = jnp.concatenate([jnp.zeros((C, -d), x2d.dtype), x2d[:, :d]], axis=1)
        else:
            sh = x2d
        m = w_ok[dw]
        return sh if m is None else sh * m

    # ---- Extractor stand-in: 3x3 conv + ReLU as ONE MXU matmul (K = 9*Cin). ----
    x2d = x_ref[0]                                                     # (Cin, HW) bf16
    xcols = jnp.concatenate([shift_tap(x2d, dh, dw) for dh, dw in _TAPS],
                            axis=0)                                    # (9*Cin, HW) bf16
    feat = jnp.dot(wext_ref[...], xcols, preferred_element_type=jnp.float32)
    feat = jnp.maximum(feat, 0.0)                                      # ReLU, (Cf, HW) f32
    fbf = feat.astype(jnp.bfloat16)                                    # MXU operand

    # ---- Density head: 1x1 conv (Cf -> 1) on the MXU, then sigmoid. ----
    pre_l = jnp.dot(wpre_ref[...], fbf, preferred_element_type=jnp.float32)  # (8, HW)
    pre = jax.nn.sigmoid(pre_l[0:1, :])                                # (1, HW) f32

    # ---- Binar 3x3 conv: tap-PAIR matmuls (K = 2*Cf = 256), f32 accumulation. ----
    hid = jnp.zeros((Ct, HW), jnp.float32)
    for p in range(4):                                                 # taps (0,1)(2,3)(4,5)(6,7)
        t0, t1 = 2 * p, 2 * p + 1
        v = jnp.concatenate([shift_tap(fbf, *_TAPS[t0]),
                             shift_tap(fbf, *_TAPS[t1])], axis=0)      # (2*Cf, HW) bf16
        hid = hid + jnp.dot(wb1_ref[:, t0 * Cf:(t1 + 1) * Cf], v,
                            preferred_element_type=jnp.float32)
    hid = hid + jnp.dot(wb1_ref[:, 8 * Cf:9 * Cf], shift_tap(fbf, *_TAPS[8]),
                        preferred_element_type=jnp.float32)            # last tap alone
    hid = jnp.maximum(hid, 0.0).astype(jnp.bfloat16)                   # ReLU, (Ct, HW)

    # ---- Threshold head: 1x1 conv (MXU) + compressedSigmoid; hard binarization. ----
    thr_l = jnp.dot(wthr_ref[...], hid, preferred_element_type=jnp.float32)  # (8, HW)
    thr = SIG_PARA * jax.nn.sigmoid(thr_l[0:1, :]) + SIG_BIAS          # (1, HW) f32
    binar = jnp.where(pre >= thr, 1.0, 0.0)                            # BinarizedF.forward

    # ---- Lane-dense map stores (last dim = H*W, multiple of 128). ----
    thr_ref[0] = thr
    pre_ref[0] = pre
    bin_ref[0] = binar

    # ---- Per-image loss partial sums (train only; skipped entirely at inference). ----
    if compute_loss:
        m = mask_ref[0]                                                # (1, HW) f32
        l1_ref[0] = jnp.zeros((1, 128), jnp.float32) + jnp.sum(jnp.abs(binar - m))
        sq_ref[0] = jnp.zeros((1, 128), jnp.float32) + jnp.sum((pre - m) ** 2)


# ----------------------------------------------------------------------------
# Crowd_locator.forward equivalent.
# ----------------------------------------------------------------------------
def crowd_locator_forward(img_nchw, mask_gt_nchw, params, mode="train"):
    B, Cin, H, W = img_nchw.shape
    Cf = params["w_ext"].shape[-1]
    Ct = params["w_b1"].shape[-1]
    HW = H * W

    # Channel-major weight packing (host side, tiny, done once per call).
    #   w_ext_t[cf, t*Cin + cin] = w_ext[kh, kw, cin, cf],  t = kh*3 + kw
    w_ext_t = jnp.transpose(params["w_ext"].reshape(9, Cin, Cf), (2, 0, 1)) \
                 .reshape(Cf, 9 * Cin).astype(jnp.bfloat16)
    w_b1_t = jnp.transpose(params["w_b1"].reshape(9, Cf, Ct), (2, 0, 1)) \
                 .reshape(Ct, 9 * Cf).astype(jnp.bfloat16)
    # 1x1 head weights padded to 8 MXU rows (row 0 is the real head, rest zeros).
    w_pre_pad = jnp.zeros((8, Cf), jnp.float32).at[0, :].set(params["w_pre"][:, 0]) \
                   .astype(jnp.bfloat16)
    w_thr_pad = jnp.zeros((8, Ct), jnp.float32).at[0, :].set(params["w_b2"][:, 0]) \
                   .astype(jnp.bfloat16)

    compute_loss = (mode == "train") and (mask_gt_nchw is not None)

    # NCHW image flattened to (B, Cin, H*W): no host transpose, lane-dense pixels, bf16 DMA.
    img_in = img_nchw.reshape(B, Cin, HW).astype(jnp.bfloat16)

    map_shape = jax.ShapeDtypeStruct((B, 1, HW), jnp.float32)
    map_spec = pl.BlockSpec((1, 1, HW), lambda b: (b, 0, 0))

    in_specs = [pl.BlockSpec((1, Cin, HW), lambda b: (b, 0, 0))]
    inputs = [img_in]
    out_shape = [map_shape, map_shape, map_shape]
    out_specs = [map_spec, map_spec, map_spec]

    if compute_loss:
        assert mask_gt_nchw.shape[2] == H and mask_gt_nchw.shape[3] == W
        mask_flat = mask_gt_nchw.reshape(B, 1, HW).astype(jnp.float32)
        in_specs.append(pl.BlockSpec((1, 1, HW), lambda b: (b, 0, 0)))
        inputs.append(mask_flat)
        part_shape = jax.ShapeDtypeStruct((B, 1, 128), jnp.float32)
        part_spec = pl.BlockSpec((1, 1, 128), lambda b: (b, 0, 0))
        out_shape += [part_shape, part_shape]
        out_specs += [part_spec, part_spec]

    in_specs += [
        pl.BlockSpec((Cf, 9 * Cin), lambda b: (0, 0)),
        pl.BlockSpec((Ct, 9 * Cf), lambda b: (0, 0)),
        pl.BlockSpec((8, Cf), lambda b: (0, 0)),
        pl.BlockSpec((8, Ct), lambda b: (0, 0)),
    ]
    inputs += [w_ext_t, w_b1_t, w_pre_pad, w_thr_pad]

    kern = functools.partial(_fused_kernel, H=H, W=W, Cin=Cin, Cf=Cf, Ct=Ct,
                             compute_loss=compute_loss)

    outs = pl.pallas_call(
        kern,
        out_shape=tuple(out_shape),
        grid_spec=pltpu.PrefetchScalarGridSpec(
            num_scalar_prefetch=0,
            grid=(B,),
            in_specs=in_specs,
            out_specs=tuple(out_specs)),
        compiler_params=pltpu.CompilerParams(
            dimension_semantics=("parallel",),
            vmem_limit_bytes=_VMEM_LIMIT),
    )(*inputs)

    thr_flat, pre_flat, bin_flat = outs[0], outs[1], outs[2]
    # Lane-dense (B, 1, H*W) -> PyTorch NCHW (B, 1, H, W): pure reshape, no transpose.
    threshold = thr_flat.reshape(B, 1, H, W)
    pre_map = pre_flat.reshape(B, 1, H, W)
    binar_map = bin_flat.reshape(B, 1, H, W)

    loss_out = None
    if compute_loss:
        assert pre_map.shape[2] == mask_gt_nchw.shape[2]
        l1_part, sq_part = outs[3], outs[4]
        inv_n = 1.0 / float(B * H * W)
        binar_map_loss = l1_part[:, 0, 0].sum() * inv_n                 # mean(|binar - mask|)
        head_map_loss = sq_part[:, 0, 0].sum() * inv_n                  # mse(pre, mask)
        loss_out = (head_map_loss, binar_map_loss)                      # matches .loss ordering

    return threshold, pre_map, binar_map, loss_out


if __name__ == "__main__":
    key = jax.random.PRNGKey(0)
    k_img, k_msk, k1, k2, k3, k4 = jax.random.split(key, 6)

    B, C, H, W = 2, 3, 16, 16
    C_FEAT, C_THR = 128, 128   # lane-friendly stand-ins for the 720/768-channel backbone

    img = jax.random.normal(k_img, (B, C, H, W), jnp.float32)
    mask_gt = (jax.random.uniform(k_msk, (B, 1, H, W)) > 0.8).astype(jnp.float32)

    params = {
        "w_ext": 0.1 * jax.random.normal(k1, (3, 3, C, C_FEAT), jnp.float32),
        "w_pre": 0.1 * jax.random.normal(k2, (C_FEAT, 1), jnp.float32),
        "w_b1":  0.1 * jax.random.normal(k3, (3, 3, C_FEAT, C_THR), jnp.float32),
        "w_b2":  0.1 * jax.random.normal(k4, (C_THR, 1), jnp.float32),
    }

    # Training path: fused kernel also emits per-image loss partial sums.
    thr, pre, binar, losses = crowd_locator_forward(img, mask_gt, params, mode="train")
    jax.block_until_ready((thr, pre, binar) + losses)
    head_loss, binar_loss = losses

    assert thr.shape == (B, 1, H, W) and pre.shape == (B, 1, H, W) and binar.shape == (B, 1, H, W)
    assert bool(jnp.all(jnp.isfinite(pre))) and bool(jnp.all(jnp.isfinite(thr)))
    assert bool(jnp.all((binar == 0) | (binar == 1)))
    assert bool(jnp.isfinite(head_loss)) and bool(jnp.isfinite(binar_loss))

    # Inference path: loss branch skipped entirely (no mask DMA, no partial-sum outputs).
    thr_e, pre_e, bin_e, loss_e = crowd_locator_forward(img, None, params, mode="test")
    jax.block_until_ready((thr_e, pre_e, bin_e))
    assert loss_e is None
    assert bool(jnp.all(jnp.isclose(pre_e, pre)))

    print("KERNEL_OK")
</pallas_src>

<mosaic_0001>
module attributes {stable_mosaic.version = 11 : i64} {
  func.func @_fused_kernel(%arg0: i32, %arg1: memref<1x3x256xbf16, #tpu.memory_space<vmem>>, %arg2: memref<1x1x256xf32, #tpu.memory_space<vmem>>, %arg3: memref<128x27xbf16, #tpu.memory_space<vmem>>, %arg4: memref<128x1152xbf16, #tpu.memory_space<vmem>>, %arg5: memref<8x128xbf16, #tpu.memory_space<vmem>>, %arg6: memref<8x128xbf16, #tpu.memory_space<vmem>>, %arg7: memref<1x1x256xf32, #tpu.memory_space<vmem>>, %arg8: memref<1x1x256xf32, #tpu.memory_space<vmem>>, %arg9: memref<1x1x256xf32, #tpu.memory_space<vmem>>, %arg10: memref<1x1x128xf32, #tpu.memory_space<vmem>>, %arg11: memref<1x1x128xf32, #tpu.memory_space<vmem>>) attributes {dimension_semantics = [#tpu.dimension_semantics<parallel>], iteration_bounds = array<i64: 2>, scalar_prefetch = 0 : i64, scratch_operands = 0 : i64, tpu.core_type = #tpu.core_type<tc>, window_params = [{transform_indices = @transform_0, window_bounds = array<i64: 1, 3, 256>}, {transform_indices = @transform_1, window_bounds = array<i64: 1, 1, 256>}, {pipeline_mode = #tpu.pipeline_mode<synchronous>, transform_indices = @transform_2, window_bounds = array<i64: 128, 27>}, {pipeline_mode = #tpu.pipeline_mode<synchronous>, transform_indices = @transform_3, window_bounds = array<i64: 128, 1152>}, {pipeline_mode = #tpu.pipeline_mode<synchronous>, transform_indices = @transform_4, window_bounds = array<i64: 8, 128>}, {pipeline_mode = #tpu.pipeline_mode<synchronous>, transform_indices = @transform_5, window_bounds = array<i64: 8, 128>}, {transform_indices = @transform_6, window_bounds = array<i64: 1, 1, 256>}, {transform_indices = @transform_7, window_bounds = array<i64: 1, 1, 256>}, {transform_indices = @transform_8, window_bounds = array<i64: 1, 1, 256>}, {transform_indices = @transform_9, window_bounds = array<i64: 1, 1, 128>}, {transform_indices = @transform_10, window_bounds = array<i64: 1, 1, 128>}]} {
    %0 = tpu.iota {dimensions = array<i32: 1>} : vector<1x256xi32>
    %c16_i32 = arith.constant 16 : i32
    %c0_i32 = arith.constant 0 : i32
    %1 = arith.cmpi eq, %c16_i32, %c0_i32 : i32
    %c1_i32 = arith.constant 1 : i32
    %2 = arith.select %1, %c1_i32, %c16_i32 : i32
    %3 = vector.broadcast %2 : i32 to vector<1x256xi32>
    %4 = arith.remsi %0, %3 : vector<1x256xi32>
    %c0_i32_0 = arith.constant 0 : i32
    %5 = vector.broadcast %c0_i32_0 : i32 to vector<1x256xi32>
    %6 = arith.cmpi ne, %4, %5 : vector<1x256xi32>
    %c0_i32_1 = arith.constant 0 : i32
    %7 = vector.broadcast %c0_i32_1 : i32 to vector<1x256xi32>
    %8 = arith.cmpi slt, %4, %7 : vector<1x256xi32>
    %c0_i32_2 = arith.constant 0 : i32
    %9 = arith.cmpi slt, %2, %c0_i32_2 : i32
    %10 = vector.broadcast %9 : i1 to vector<1x256xi1>
    %11 = vector.broadcast %10 : vector<1x256xi1> to vector<1x256xi1>
    %12 = arith.xori %8, %11 : vector<1x256xi1>
    %13 = arith.andi %12, %6 : vector<1x256xi1>
    %14 = vector.broadcast %2 : i32 to vector<1x256xi32>
    %15 = arith.addi %4, %14 : vector<1x256xi32>
    %16 = arith.select %13, %15, %4 : vector<1x256xi1>, vector<1x256xi32>
    %c1_i32_3 = arith.constant 1 : i32
    %17 = vector.broadcast %c1_i32_3 : i32 to vector<1x256xi32>
    %18 = arith.cmpi sge, %16, %17 : vector<1x256xi32>
    %19 = arith.extui %18 : vector<1x256xi1> to vector<1x256xi32>
    %20 = arith.sitofp %19 : vector<1x256xi32> to vector<1x256xf32>
    %21 = arith.truncf %20 : vector<1x256xf32> to vector<1x256xbf16>
    %c14_i32 = arith.constant 14 : i32
    %22 = vector.broadcast %c14_i32 : i32 to vector<1x256xi32>
    %23 = arith.cmpi sle, %16, %22 : vector<1x256xi32>
    %24 = arith.extui %23 : vector<1x256xi1> to vector<1x256xi32>
    %25 = arith.sitofp %24 : vector<1x256xi32> to vector<1x256xf32>
    %26 = arith.truncf %25 : vector<1x256xf32> to vector<1x256xbf16>
    %c0 = arith.constant 0 : index
    %c0_4 = arith.constant 0 : index
    %c0_5 = arith.constant 0 : index
    %27 = vector.load %arg1[%c0, %c0_4, %c0_5] : memref<1x3x256xbf16, #tpu.memory_space<vmem>>, vector<1x3x256xbf16>
    %28 = vector.shape_cast %27 : vector<1x3x256xbf16> to vector<3x256xbf16>
    %cst = arith.constant 0.000000e+00 : bf16
    %29 = vector.broadcast %cst : bf16 to vector<3x17xbf16>
    %30 = vector.extract_strided_slice %28 {offsets = [0, 0], sizes = [3, 239], strides = [1, 1]} : vector<3x256xbf16> to vector<3x239xbf16>
    %31 = tpu.concatenate %29, %30 in 1 : vector<3x17xbf16>, vector<3x239xbf16> -> vector<3x256xbf16>
    %32 = vector.broadcast %21 : vector<1x256xbf16> to vector<3x256xbf16>
    %33 = arith.mulf %31, %32 : vector<3x256xbf16>
    %cst_6 = arith.constant 0.000000e+00 : bf16
    %34 = vector.broadcast %cst_6 : bf16 to vector<3x16xbf16>
    %35 = vector.extract_strided_slice %28 {offsets = [0, 0], sizes = [3, 240], strides = [1, 1]} : vector<3x256xbf16> to vector<3x240xbf16>
    %36 = tpu.concatenate %34, %35 in 1 : vector<3x16xbf16>, vector<3x240xbf16> -> vector<3x256xbf16>
    %cst_7 = arith.constant 0.000000e+00 : bf16
    %37 = vector.broadcast %cst_7 : bf16 to vector<3x15xbf16>
    %38 = vector.extract_strided_slice %28 {offsets = [0, 0], sizes = [3, 241], strides = [1, 1]} : vector<3x256xbf16> to vector<3x241xbf16>
    %39 = tpu.concatenate %37, %38 in 1 : vector<3x15xbf16>, vector<3x241xbf16> -> vector<3x256xbf16>
    %40 = vector.broadcast %26 : vector<1x256xbf16> to vector<3x256xbf16>
    %41 = arith.mulf %39, %40 : vector<3x256xbf16>
    %cst_8 = arith.constant 0.000000e+00 : bf16
    %42 = vector.broadcast %cst_8 : bf16 to vector<3x1xbf16>
    %43 = vector.extract_strided_slice %28 {offsets = [0, 0], sizes = [3, 255], strides = [1, 1]} : vector<3x256xbf16> to vector<3x255xbf16>
    %44 = tpu.concatenate %42, %43 in 1 : vector<3x1xbf16>, vector<3x255xbf16> -> vector<3x256xbf16>
    %45 = vector.broadcast %21 : vector<1x256xbf16> to vector<3x256xbf16>
    %46 = arith.mulf %44, %45 : vector<3x256xbf16>
    %47 = vector.extract_strided_slice %28 {offsets = [0, 1], sizes = [3, 255], strides = [1, 1]} : vector<3x256xbf16> to vector<3x255xbf16>
    %cst_9 = arith.constant 0.000000e+00 : bf16
    %48 = vector.broadcast %cst_9 : bf16 to vector<3x1xbf16>
    %49 = tpu.concatenate %47, %48 in 1 : vector<3x255xbf16>, vector<3x1xbf16> -> vector<3x256xbf16>
    %50 = vector.broadcast %26 : vector<1x256xbf16> to vector<3x256xbf16>
    %51 = arith.mulf %49, %50 : vector<3x256xbf16>
    %52 = vector.extract_strided_slice %28 {offsets = [0, 15], sizes = [3, 241], strides = [1, 1]} : vector<3x256xbf16> to vector<3x241xbf16>
    %cst_10 = arith.constant 0.000000e+00 : bf16
    %53 = vector.broadcast %cst_10 : bf16 to vector<3x15xbf16>
    %54 = tpu.concatenate %52, %53 in 1 : vector<3x241xbf16>, vector<3x15xbf16> -> vector<3x256xbf16>
    %55 = vector.broadcast %21 : vector<1x256xbf16> to vector<3x256xbf16>
    %56 = arith.mulf %54, %55 : vector<3x256xbf16>
    %57 = vector.extract_strided_slice %28 {offsets = [0, 16], sizes = [3, 240], strides = [1, 1]} : vector<3x256xbf16> to vector<3x240xbf16>
    %cst_11 = arith.constant 0.000000e+00 : bf16
    %58 = vector.broadcast %cst_11 : bf16 to vector<3x16xbf16>
    %59 = tpu.concatenate %57, %58 in 1 : vector<3x240xbf16>, vector<3x16xbf16> -> vector<3x256xbf16>
    %60 = vector.extract_strided_slice %28 {offsets = [0, 17], sizes = [3, 239], strides = [1, 1]} : vector<3x256xbf16> to vector<3x239xbf16>
    %cst_12 = arith.constant 0.000000e+00 : bf16
    %61 = vector.broadcast %cst_12 : bf16 to vector<3x17xbf16>
    %62 = tpu.concatenate %60, %61 in 1 : vector<3x239xbf16>, vector<3x17xbf16> -> vector<3x256xbf16>
    %63 = vector.broadcast %26 : vector<1x256xbf16> to vector<3x256xbf16>
    %64 = arith.mulf %62, %63 : vector<3x256xbf16>
    %65 = tpu.concatenate %33, %36, %41, %46, %28, %51, %56, %59, %64 in 0 : vector<3x256xbf16>, vector<3x256xbf16>, vector<3x256xbf16>, vector<3x256xbf16>, vector<3x256xbf16>, vector<3x256xbf16>, vector<3x256xbf16>, vector<3x256xbf16>, vector<3x256xbf16> -> vector<27x256xbf16>
    %c0_13 = arith.constant 0 : index
    %c0_14 = arith.constant 0 : index
    %66 = vector.load %arg3[%c0_13, %c0_14] : memref<128x27xbf16, #tpu.memory_space<vmem>>, vector<128x27xbf16>
    %cst_15 = arith.constant dense<0.000000e+00> : vector<128x256xf32>
    %67 = tpu.matmul %66, %65, %cst_15 {dimension_numbers = #tpu.dot_dimension_numbers<[1], [0], [0], [1], [0, 0, 1, 1], [], []>} : vector<128x27xbf16>, vector<27x256xbf16>, vector<128x256xf32> -> vector<128x256xf32>
    %cst_16 = arith.constant 0.000000e+00 : f32
    %68 = vector.broadcast %cst_16 : f32 to vector<128x256xf32>
    %69 = arith.maximumf %67, %68 : vector<128x256xf32>
    %70 = arith.truncf %69 : vector<128x256xf32> to vector<128x256xbf16>
    %c0_17 = arith.constant 0 : index
    %c0_18 = arith.constant 0 : index
    %71 = vector.load %arg5[%c0_17, %c0_18] : memref<8x128xbf16, #tpu.memory_space<vmem>>, vector<8x128xbf16>
    %cst_19 = arith.constant dense<0.000000e+00> : vector<8x256xf32>
    %72 = tpu.matmul %71, %70, %cst_19 {dimension_numbers = #tpu.dot_dimension_numbers<[1], [0], [0], [1], [0, 0, 1, 1], [], []>} : vector<8x128xbf16>, vector<128x256xbf16>, vector<8x256xf32> -> vector<8x256xf32>
    %73 = vector.extract_strided_slice %72 {offsets = [0, 0], sizes = [1, 256], strides = [1, 1]} : vector<8x256xf32> to vector<1x256xf32>
    %74 = arith.negf %73 : vector<1x256xf32>
    %75 = math.exp %74 : vector<1x256xf32>
    %cst_20 = arith.constant 1.000000e+00 : f32
    %76 = vector.broadcast %cst_20 : f32 to vector<1x256xf32>
    %77 = arith.addf %76, %75 : vector<1x256xf32>
    %78 = arith.divf %76, %77 : vector<1x256xf32>
    %cst_21 = arith.constant 0.000000e+00 : f32
    %79 = vector.broadcast %cst_21 : f32 to vector<128x256xf32>
    %cst_22 = arith.constant 0.000000e+00 : bf16
    %80 = vector.broadcast %cst_22 : bf16 to vector<128x17xbf16>
    %81 = vector.extract_strided_slice %70 {offsets = [0, 0], sizes = [128, 239], strides = [1, 1]} : vector<128x256xbf16> to vector<128x239xbf16>
    %82 = tpu.concatenate %80, %81 in 1 : vector<128x17xbf16>, vector<128x239xbf16> -> vector<128x256xbf16>
    %83 = vector.broadcast %21 : vector<1x256xbf16> to vector<128x256xbf16>
    %84 = arith.mulf %82, %83 : vector<128x256xbf16>
    %cst_23 = arith.constant 0.000000e+00 : bf16
    %85 = vector.broadcast %cst_23 : bf16 to vector<128x16xbf16>
    %86 = vector.extract_strided_slice %70 {offsets = [0, 0], sizes = [128, 240], strides = [1, 1]} : vector<128x256xbf16> to vector<128x240xbf16>
    %87 = tpu.concatenate %85, %86 in 1 : vector<128x16xbf16>, vector<128x240xbf16> -> vector<128x256xbf16>
    %88 = tpu.concatenate %84, %87 in 0 : vector<128x256xbf16>, vector<128x256xbf16> -> vector<256x256xbf16>
    %c0_24 = arith.constant 0 : index
    %c0_25 = arith.constant 0 : index
    %89 = vector.load %arg4[%c0_24, %c0_25] : memref<128x1152xbf16, #tpu.memory_space<vmem>>, vector<128x256xbf16>
    %cst_26 = arith.constant dense<0.000000e+00> : vector<128x256xf32>
    %90 = tpu.matmul %89, %88, %cst_26 {dimension_numbers = #tpu.dot_dimension_numbers<[1], [0], [0], [1], [0, 0, 1, 1], [], []>} : vector<128x256xbf16>, vector<256x256xbf16>, vector<128x256xf32> -> vector<128x256xf32>
    %91 = arith.addf %79, %90 : vector<128x256xf32>
    %cst_27 = arith.constant 0.000000e+00 : bf16
    %92 = vector.broadcast %cst_27 : bf16 to vector<128x15xbf16>
    %93 = vector.extract_strided_slice %70 {offsets = [0, 0], sizes = [128, 241], strides = [1, 1]} : vector<128x256xbf16> to vector<128x241xbf16>
    %94 = tpu.concatenate %92, %93 in 1 : vector<128x15xbf16>, vector<128x241xbf16> -> vector<128x256xbf16>
    %95 = vector.broadcast %26 : vector<1x256xbf16> to vector<128x256xbf16>
    %96 = arith.mulf %94, %95 : vector<128x256xbf16>
    %cst_28 = arith.constant 0.000000e+00 : bf16
    %97 = vector.broadcast %cst_28 : bf16 to vector<128x1xbf16>
    %98 = vector.extract_strided_slice %70 {offsets = [0, 0], sizes = [128, 255], strides = [1, 1]} : vector<128x256xbf16> to vector<128x255xbf16>
    %99 = tpu.concatenate %97, %98 in 1 : vector<128x1xbf16>, vector<128x255xbf16> -> vector<128x256xbf16>
    %100 = vector.broadcast %21 : vector<1x256xbf16> to vector<128x256xbf16>
    %101 = arith.mulf %99, %100 : vector<128x256xbf16>
    %102 = tpu.concatenate %96, %101 in 0 : vector<128x256xbf16>, vector<128x256xbf16> -> vector<256x256xbf16>
    %c0_29 = arith.constant 0 : index
    %c256 = arith.constant 256 : index
    %103 = vector.load %arg4[%c0_29, %c256] : memref<128x1152xbf16, #tpu.memory_space<vmem>>, vector<128x256xbf16>
    %cst_30 = arith.constant dense<0.000000e+00> : vector<128x256xf32>
    %104 = tpu.matmul %103, %102, %cst_30 {dimension_numbers = #tpu.dot_dimension_numbers<[1], [0], [0], [1], [0, 0, 1, 1], [], []>} : vector<128x256xbf16>, vector<256x256xbf16>, vector<128x256xf32> -> vector<128x256xf32>
    %105 = arith.addf %91, %104 : vector<128x256xf32>
    %106 = vector.extract_strided_slice %70 {offsets = [0, 1], sizes = [128, 255], strides = [1, 1]} : vector<128x256xbf16> to vector<128x255xbf16>
    %cst_31 = arith.constant 0.000000e+00 : bf16
    %107 = vector.broadcast %cst_31 : bf16 to vector<128x1xbf16>
    %108 = tpu.concatenate %106, %107 in 1 : vector<128x255xbf16>, vector<128x1xbf16> -> vector<128x256xbf16>
    %109 = vector.broadcast %26 : vector<1x256xbf16> to vector<128x256xbf16>
    %110 = arith.mulf %108, %109 : vector<128x256xbf16>
    %111 = tpu.concatenate %70, %110 in 0 : vector<128x256xbf16>, vector<128x256xbf16> -> vector<256x256xbf16>
    %c0_32 = arith.constant 0 : index
    %c512 = arith.constant 512 : index
    %112 = vector.load %arg4[%c0_32, %c512] : memref<128x1152xbf16, #tpu.memory_space<vmem>>, vector<128x256xbf16>
    %cst_33 = arith.constant dense<0.000000e+00> : vector<128x256xf32>
    %113 = tpu.matmul %112, %111, %cst_33 {dimension_numbers = #tpu.dot_dimension_numbers<[1], [0], [0], [1], [0, 0, 1, 1], [], []>} : vector<128x256xbf16>, vector<256x256xbf16>, vector<128x256xf32> -> vector<128x256xf32>
    %114 = arith.addf %105, %113 : vector<128x256xf32>
    %115 = vector.extract_strided_slice %70 {offsets = [0, 15], sizes = [128, 241], strides = [1, 1]} : vector<128x256xbf16> to vector<128x241xbf16>
    %cst_34 = arith.constant 0.000000e+00 : bf16
    %116 = vector.broadcast %cst_34 : bf16 to vector<128x15xbf16>
    %117 = tpu.concatenate %115, %116 in 1 : vector<128x241xbf16>, vector<128x15xbf16> -> vector<128x256xbf16>
    %118 = vector.broadcast %21 : vector<1x256xbf16> to vector<128x256xbf16>
    %119 = arith.mulf %117, %118 : vector<128x256xbf16>
    %120 = vector.extract_strided_slice %70 {offsets = [0, 16], sizes = [128, 240], strides = [1, 1]} : vector<128x256xbf16> to vector<128x240xbf16>
    %cst_35 = arith.constant 0.000000e+00 : bf16
    %121 = vector.broadcast %cst_35 : bf16 to vector<128x16xbf16>
    %122 = tpu.concatenate %120, %121 in 1 : vector<128x240xbf16>, vector<128x16xbf16> -> vector<128x256xbf16>
    %123 = tpu.concatenate %119, %122 in 0 : vector<128x256xbf16>, vector<128x256xbf16> -> vector<256x256xbf16>
    %c0_36 = arith.constant 0 : index
    %c768 = arith.constant 768 : index
    %124 = vector.load %arg4[%c0_36, %c768] : memref<128x1152xbf16, #tpu.memory_space<vmem>>, vector<128x256xbf16>
    %cst_37 = arith.constant dense<0.000000e+00> : vector<128x256xf32>
    %125 = tpu.matmul %124, %123, %cst_37 {dimension_numbers = #tpu.dot_dimension_numbers<[1], [0], [0], [1], [0, 0, 1, 1], [], []>} : vector<128x256xbf16>, vector<256x256xbf16>, vector<128x256xf32> -> vector<128x256xf32>
    %126 = arith.addf %114, %125 : vector<128x256xf32>
    %c0_38 = arith.constant 0 : index
    %c1024 = arith.constant 1024 : index
    %127 = vector.load %arg4[%c0_38, %c1024] : memref<128x1152xbf16, #tpu.memory_space<vmem>>, vector<128x128xbf16>
    %128 = vector.extract_strided_slice %70 {offsets = [0, 17], sizes = [128, 239], strides = [1, 1]} : vector<128x256xbf16> to vector<128x239xbf16>
    %cst_39 = arith.constant 0.000000e+00 : bf16
    %129 = vector.broadcast %cst_39 : bf16 to vector<128x17xbf16>
    %130 = tpu.concatenate %128, %129 in 1 : vector<128x239xbf16>, vector<128x17xbf16> -> vector<128x256xbf16>
    %131 = vector.broadcast %26 : vector<1x256xbf16> to vector<128x256xbf16>
    %132 = arith.mulf %130, %131 : vector<128x256xbf16>
    %cst_40 = arith.constant dense<0.000000e+00> : vector<128x256xf32>
    %133 = tpu.matmul %127, %132, %cst_40 {dimension_numbers = #tpu.dot_dimension_numbers<[1], [0], [0], [1], [0, 0, 1, 1], [], []>} : vector<128x128xbf16>, vector<128x256xbf16>, vector<128x256xf32> -> vector<128x256xf32>
    %134 = arith.addf %126, %133 : vector<128x256xf32>
    %cst_41 = arith.constant 0.000000e+00 : f32
    %135 = vector.broadcast %cst_41 : f32 to vector<128x256xf32>
    %136 = arith.maximumf %134, %135 : vector<128x256xf32>
    %137 = arith.truncf %136 : vector<128x256xf32> to vector<128x256xbf16>
    %c0_42 = arith.constant 0 : index
    %c0_43 = arith.constant 0 : index
    %138 = vector.load %arg6[%c0_42, %c0_43] : memref<8x128xbf16, #tpu.memory_space<vmem>>, vector<8x128xbf16>
    %cst_44 = arith.constant dense<0.000000e+00> : vector<8x256xf32>
    %139 = tpu.matmul %138, %137, %cst_44 {dimension_numbers = #tpu.dot_dimension_numbers<[1], [0], [0], [1], [0, 0, 1, 1], [], []>} : vector<8x128xbf16>, vector<128x256xbf16>, vector<8x256xf32> -> vector<8x256xf32>
    %140 = vector.extract_strided_slice %139 {offsets = [0, 0], sizes = [1, 256], strides = [1, 1]} : vector<8x256xf32> to vector<1x256xf32>
    %141 = arith.negf %140 : vector<1x256xf32>
    %142 = math.exp %141 : vector<1x256xf32>
    %cst_45 = arith.constant 1.000000e+00 : f32
    %143 = vector.broadcast %cst_45 : f32 to vector<1x256xf32>
    %144 = arith.addf %143, %142 : vector<1x256xf32>
    %145 = arith.divf %143, %144 : vector<1x256xf32>
    %cst_46 = arith.constant 1.000000e+00 : f32
    %146 = vector.broadcast %cst_46 : f32 to vector<1x256xf32>
    %147 = arith.mulf %146, %145 : vector<1x256xf32>
    %cst_47 = arith.constant 2.000000e-01 : f32
    %148 = vector.broadcast %cst_47 : f32 to vector<1x256xf32>
    %149 = arith.addf %147, %148 : vector<1x256xf32>
    %150 = arith.cmpf oge, %78, %149 : vector<1x256xf32>
    %cst_48 = arith.constant 1.000000e+00 : f32
    %cst_49 = arith.constant 0.000000e+00 : f32
    %151 = vector.broadcast %cst_48 : f32 to vector<1x256xf32>
    %152 = vector.broadcast %cst_49 : f32 to vector<1x256xf32>
    %153 = arith.select %150, %151, %152 : vector<1x256xi1>, vector<1x256xf32>
    %c0_50 = arith.constant 0 : index
    %c0_51 = arith.constant 0 : index
    %c0_52 = arith.constant 0 : index
    %154 = vector.load %arg7[%c0_50, %c0_51, %c0_52] : memref<1x1x256xf32, #tpu.memory_space<vmem>>, vector<1x1x256xf32>
    %155 = vector.shape_cast %154 : vector<1x1x256xf32> to vector<1x256xf32>
    %156 = vector.shape_cast %149 : vector<1x256xf32> to vector<1x1x256xf32>
    tpu.vector_store %arg7[%c0_50, %c0_51, %c0_52], %156 {strides = array<i32>} : memref<1x1x256xf32, #tpu.memory_space<vmem>>, vector<1x1x256xf32>,
    %c0_53 = arith.constant 0 : index
    %c0_54 = arith.constant 0 : index
    %c0_55 = arith.constant 0 : index
    %157 = vector.load %arg8[%c0_53, %c0_54, %c0_55] : memref<1x1x256xf32, #tpu.memory_space<vmem>>, vector<1x1x256xf32>
    %158 = vector.shape_cast %157 : vector<1x1x256xf32> to vector<1x256xf32>
    %159 = vector.shape_cast %78 : vector<1x256xf32> to vector<1x1x256xf32>
    tpu.vector_store %arg8[%c0_53, %c0_54, %c0_55], %159 {strides = array<i32>} : memref<1x1x256xf32, #tpu.memory_space<vmem>>, vector<1x1x256xf32>,
    %c0_56 = arith.constant 0 : index
    %c0_57 = arith.constant 0 : index
    %c0_58 = arith.constant 0 : index
    %160 = vector.load %arg9[%c0_56, %c0_57, %c0_58] : memref<1x1x256xf32, #tpu.memory_space<vmem>>, vector<1x1x256xf32>
    %161 = vector.shape_cast %160 : vector<1x1x256xf32> to vector<1x256xf32>
    %162 = vector.shape_cast %153 : vector<1x256xf32> to vector<1x1x256xf32>
    tpu.vector_store %arg9[%c0_56, %c0_57, %c0_58], %162 {strides = array<i32>} : memref<1x1x256xf32, #tpu.memory_space<vmem>>, vector<1x1x256xf32>,
    %c0_59 = arith.constant 0 : index
    %c0_60 = arith.constant 0 : index
    %c0_61 = arith.constant 0 : index
    %163 = vector.load %arg2[%c0_59, %c0_60, %c0_61] : memref<1x1x256xf32, #tpu.memory_space<vmem>>, vector<1x1x256xf32>
    %164 = vector.shape_cast %163 : vector<1x1x256xf32> to vector<1x256xf32>
    %cst_62 = arith.constant 0.000000e+00 : f32
    %165 = vector.broadcast %cst_62 : f32 to vector<1x128xf32>
    %166 = arith.subf %153, %164 : vector<1x256xf32>
    %167 = math.absf %166 : vector<1x256xf32>
    %168 = vector.shape_cast %167 : vector<1x256xf32> to vector<1x1x256xf32>
    %cst_63 = arith.constant dense<0.000000e+00> : vector<1xf32>
    %169 = vector.multi_reduction <add>, %168, %cst_63 [1, 2] : vector<1x1x256xf32> to vector<1xf32>
    %170 = vector.shape_cast %169 : vector<1xf32> to vector<1x1x1xf32>
    %171 = vector.extract %170[0, 0, 0] : f32 from vector<1x1x1xf32>
    %172 = vector.broadcast %171 : f32 to vector<1x128xf32>
    %173 = arith.addf %165, %172 : vector<1x128xf32>
    %c0_64 = arith.constant 0 : index
    %c0_65 = arith.constant 0 : index
    %c0_66 = arith.constant 0 : index
    %174 = vector.load %arg10[%c0_64, %c0_65, %c0_66] : memref<1x1x128xf32, #tpu.memory_space<vmem>>, vector<1x1x128xf32>
    %175 = vector.shape_cast %174 : vector<1x1x128xf32> to vector<1x128xf32>
    %176 = vector.shape_cast %173 : vector<1x128xf32> to vector<1x1x128xf32>
    tpu.vector_store %arg10[%c0_64, %c0_65, %c0_66], %176 {strides = array<i32>} : memref<1x1x128xf32, #tpu.memory_space<vmem>>, vector<1x1x128xf32>,
    %cst_67 = arith.constant 0.000000e+00 : f32
    %177 = vector.broadcast %cst_67 : f32 to vector<1x128xf32>
    %178 = arith.subf %78, %164 : vector<1x256xf32>
    %179 = arith.mulf %178, %178 : vector<1x256xf32>
    %180 = vector.shape_cast %179 : vector<1x256xf32> to vector<1x1x256xf32>
    %cst_68 = arith.constant dense<0.000000e+00> : vector<1xf32>
    %181 = vector.multi_reduction <add>, %180, %cst_68 [1, 2] : vector<1x1x256xf32> to vector<1xf32>
    %182 = vector.shape_cast %181 : vector<1xf32> to vector<1x1x1xf32>
    %183 = vector.extract %182[0, 0, 0] : f32 from vector<1x1x1xf32>
    %184 = vector.broadcast %183 : f32 to vector<1x128xf32>
    %185 = arith.addf %177, %184 : vector<1x128xf32>
    %c0_69 = arith.constant 0 : index
    %c0_70 = arith.constant 0 : index
    %c0_71 = arith.constant 0 : index
    %186 = vector.load %arg11[%c0_69, %c0_70, %c0_71] : memref<1x1x128xf32, #tpu.memory_space<vmem>>, vector<1x1x128xf32>
    %187 = vector.shape_cast %186 : vector<1x1x128xf32> to vector<1x128xf32>
    %188 = vector.shape_cast %185 : vector<1x128xf32> to vector<1x1x128xf32>
    tpu.vector_store %arg11[%c0_69, %c0_70, %c0_71], %188 {strides = array<i32>} : memref<1x1x128xf32, #tpu.memory_space<vmem>>, vector<1x1x128xf32>,
    return
  }
  func.func @transform_0(%arg0: i32) -> (i32, i32, i32) {
    %c0_i32 = arith.constant 0 : i32
    %c0_i32_0 = arith.constant 0 : i32
    %c0_i32_1 = arith.constant 0 : i32
    return %arg0, %c0_i32, %c0_i32_0 : i32, i32, i32
  }
  func.func @transform_1(%arg0: i32) -> (i32, i32, i32) {
    %c0_i32 = arith.constant 0 : i32
    %c0_i32_0 = arith.constant 0 : i32
    %c0_i32_1 = arith.constant 0 : i32
    return %arg0, %c0_i32, %c0_i32_0 : i32, i32, i32
  }
  func.func @transform_2(%arg0: i32) -> (i32, i32) {
    %c0_i32 = arith.constant 0 : i32
    %c0_i32_0 = arith.constant 0 : i32
    %c0_i32_1 = arith.constant 0 : i32
    return %c0_i32, %c0_i32_0 : i32, i32
  }
  func.func @transform_3(%arg0: i32) -> (i32, i32) {
    %c0_i32 = arith.constant 0 : i32
    %c0_i32_0 = arith.constant 0 : i32
    %c0_i32_1 = arith.constant 0 : i32
    return %c0_i32, %c0_i32_0 : i32, i32
  }
  func.func @transform_4(%arg0: i32) -> (i32, i32) {
    %c0_i32 = arith.constant 0 : i32
    %c0_i32_0 = arith.constant 0 : i32
    %c0_i32_1 = arith.constant 0 : i32
    return %c0_i32, %c0_i32_0 : i32, i32
  }
  func.func @transform_5(%arg0: i32) -> (i32, i32) {
    %c0_i32 = arith.constant 0 : i32
    %c0_i32_0 = arith.constant 0 : i32
    %c0_i32_1 = arith.constant 0 : i32
    return %c0_i32, %c0_i32_0 : i32, i32
  }
  func.func @transform_6(%arg0: i32) -> (i32, i32, i32) {
    %c0_i32 = arith.constant 0 : i32
    %c0_i32_0 = arith.constant 0 : i32
    %c0_i32_1 = arith.constant 0 : i32
    return %arg0, %c0_i32, %c0_i32_0 : i32, i32, i32
  }
  func.func @transform_7(%arg0: i32) -> (i32, i32, i32) {
    %c0_i32 = arith.constant 0 : i32
    %c0_i32_0 = arith.constant 0 : i32
    %c0_i32_1 = arith.constant 0 : i32
    return %arg0, %c0_i32, %c0_i32_0 : i32, i32, i32
  }
  func.func @transform_8(%arg0: i32) -> (i32, i32, i32) {
    %c0_i32 = arith.constant 0 : i32
    %c0_i32_0 = arith.constant 0 : i32
    %c0_i32_1 = arith.constant 0 : i32
    return %arg0, %c0_i32, %c0_i32_0 : i32, i32, i32
  }
  func.func @transform_9(%arg0: i32) -> (i32, i32, i32) {
    %c0_i32 = arith.constant 0 : i32
    %c0_i32_0 = arith.constant 0 : i32
    %c0_i32_1 = arith.constant 0 : i32
    return %arg0, %c0_i32, %c0_i32_0 : i32, i32, i32
  }
  func.func @transform_10(%arg0: i32) -> (i32, i32, i32) {
    %c0_i32 = arith.constant 0 : i32
    %c0_i32_0 = arith.constant 0 : i32
    %c0_i32_1 = arith.constant 0 : i32
    return %arg0, %c0_i32, %c0_i32_0 : i32, i32, i32
  }
}

</mosaic_0001>

<llo_original>
// kernel: tpu_custom_call.1
$region0: #{tpu_custom_call.1}
  #allocation0 [shape = 'u32[]', space=smem, size = 0x4, offset = 0x4, fixed_abs, tag = 'smem constant byte address 0x4 - core index']
  #allocation1 [shape = 'u32[72,128]{1,0:T(1,128)}', space=vmem, size = 0x9000, scoped, tag = 'internal scratch']
  %s0 = inlined_call_operand.vmem [shape: bf16[2,3,256], index: 0, kind: input, shape index: {}]
  %s1 = inlined_call_operand.vmem [shape: f32[2,1,256], index: 1, kind: input, shape index: {}]
  %s2 = inlined_call_operand.vmem [shape: bf16[128,27], index: 2, kind: input, shape index: {}]
  %s3 = inlined_call_operand.hbm [shape: bf16[128,1152], index: 3, kind: input, shape index: {}]
  %s4 = inlined_call_operand.vmem [shape: bf16[8,128], index: 4, kind: input, shape index: {}]
  %s5 = inlined_call_operand.vmem [shape: bf16[8,128], index: 5, kind: input, shape index: {}]
  %s6 = inlined_call_operand.hbm [shape: f32[2,1,256], index: 6, kind: output, shape index: {0}]
  %s7 = inlined_call_operand.hbm [shape: f32[2,1,256], index: 7, kind: output, shape index: {1}]
  %s8 = inlined_call_operand.hbm [shape: f32[2,1,256], index: 8, kind: output, shape index: {2}]
  %s9 = inlined_call_operand.hbm [shape: f32[2,1,128], index: 9, kind: output, shape index: {3}]
  %s10 = inlined_call_operand.hbm [shape: f32[2,1,128], index: 10, kind: output, shape index: {4}]
  %11 = xla_tuple %s6, %s7, %s8, %s9, %s10
  %s12 = sld [smem:[#allocation0]]
  $region93: #{tpu_custom_call.1} parent=0
    _
  %s14 = ssub.s32 1, %s12
  %s15 = scalar_select 0, %s14, %s12
  $region1: #{tpu_custom_call.1} parent=0
    #allocation2 [shape = 'u8[294912]{0}', space=vmem, size = 0x48000, scoped, tag = 'input window, operand 3, single buffered']
    #allocation3 [shape = 's32[2]{0}', space=sflag, size = 0x8, scoped, tag = 'scoped memory for tpu_custom_call.1']
    #allocation4 [shape = 's32[2]{0}', space=sflag, size = 0x8, scoped, tag = 'scoped memory for tpu_custom_call.1']
    #allocation5 [shape = 'u8[2048]{0}', space=vmem, size = 0x800, scoped, tag = 'output window, operand 0']
    #allocation6 [shape = 'u8[2048]{0}', space=vmem, size = 0x800, scoped, tag = 'output window, operand 1']
    #allocation7 [shape = 's32[2]{0}', space=sflag, size = 0x8, scoped, tag = 'scoped memory for tpu_custom_call.1']
    #allocation8 [shape = 'u8[2048]{0}', space=vmem, size = 0x800, scoped, tag = 'output window, operand 2']
    #allocation9 [shape = 'u8[1024]{0}', space=vmem, size = 0x400, scoped, tag = 'output window, operand 3']
    #allocation10 [shape = 's32[2]{0}', space=sflag, size = 0x8, scoped, tag = 'scoped memory for tpu_custom_call.1']
    #allocation11 [shape = 'u8[1024]{0}', space=vmem, size = 0x400, scoped, tag = 'output window, operand 4']
    %16 = vsyncpa [#allocation3], 0
    %17 = vsyncpa [#allocation4], 0
    %s18 = scalar_lea.sflag [#allocation4], 1
    %19 = vsyncpa %s18, 0
    %20 = vsyncpa [#allocation7], 0
    %s21 = scalar_lea.sflag [#allocation7], 1
    %22 = vsyncpa %s21, 0
    %23 = vsyncpa [#allocation10], 0
    %s24 = scalar_lea.sflag [#allocation10], 1
    %25 = vsyncpa %s24, 0
    loop: start=0, step=1, limit=4
    $region2: #{tpu_custom_call.1} parent=1 // loop_pre_header
      _
    $region3: #{tpu_custom_call.1} parent=1 // loop_header
      %s27 = sphi 0, %s31
      %p28 = scmp.ge.s32.totalorder %s27, 4
      %s37 = sphi 0, %s39
      %s40 = sphi 0, %s37
      %s41 = sphi 0, %s40
      %s57 = sphi 0, %s41
      %s63 = sphi 0, %s65
      %s66 = sphi 0, %s63
      %s67 = sphi 0, %s66
      %s83 = sphi 0, %s67
      %s87 = sphi 0, %s87
      %s89 = sphi 0, %s87
      %s90 = sphi 0, %s89
      %s104 = sphi 0, %s90
      %s108 = sphi 0, %s108
      %s110 = sphi 0, %s108
      %s111 = sphi 0, %s110
      %s125 = sphi 0, %s111
      %s129 = sphi 0, %s129
      %s131 = sphi 0, %s129
      %s132 = sphi 0, %s131
      %s146 = sphi 0, %s132
      %s150 = sphi 0, %s150
      %s152 = sphi 0, %s150
      %s153 = sphi 0, %s152
      %s167 = sphi 0, %s153
      %s173 = sphi 0, %s175
      %s176 = sphi 0, %s173
      %s177 = sphi 0, %s176
      %s193 = sphi 0, %s177
      %s199 = sphi 0, %s201
      %s202 = sphi 0, %s199
      %s203 = sphi 0, %s202
      %s219 = sphi 0, %s203
      %s225 = sphi 0, %s227
      %s228 = sphi 0, %s225
      %s229 = sphi 0, %s228
      %s245 = sphi 0, %s229
      %s251 = sphi 0, %s253
      %s254 = sphi 0, %s251
      %s255 = sphi 0, %s254
      %s271 = sphi 0, %s255
      %s277 = sphi 0, %s279
      %s280 = sphi 0, %s277
      %s281 = sphi 0, %s280
      %s297 = sphi 0, %s281
    $region4: #{tpu_custom_call.1} parent=1 // loop_header_branch
      %30 = sbr.rel (%p28) target = $region8
    $region5: #{tpu_custom_call.1} parent=1 // loop_body
      %s32 = ssub.s32 %s27, 1
      %s33 = ssub.s32 %s27, 2
      %s34 = sadd.s32 %s27, 1
      %s35 = ssub.s32 %s27, %s34
      %p36 = scmp.eq.s32.totalorder %s35, 0
      %s38 = sadd.s32 %s37, 1
      %s39 = scalar_select %p36, %s37, %s38
      %p42 = pneg %p36
      %p43 = scmp.eq.s32.totalorder %s27, 1
      %p44 = por %p42, %p43
      %p45 = scmp.ne.s32.totalorder %s37, %s40
      %p46 = scmp.eq.s32.totalorder %s27, 0
      %p47 = por %p45, %p46
      %p48 = scmp.ne.s32.totalorder %s37, %s40
      %p49 = scmp.eq.s32.totalorder %s32, 1
      %p50 = por %p48, %p49
      %p51 = scmp.ne.s32.totalorder %s40, %s41
      %p52 = scmp.eq.s32.totalorder %s32, 0
      %p53 = por %p51, %p52
      %p54 = scmp.ne.s32.totalorder %s40, %s41
      %p55 = scmp.eq.s32.totalorder %s33, 1
      %p56 = por %p54, %p55
      %p58 = scmp.ne.s32.totalorder %s41, %s57
      %p59 = scmp.eq.s32.totalorder %s33, 0
      %p60 = por %p58, %p59
      %s61 = ssub.s32 %s27, %s34
      %p62 = scmp.eq.s32.totalorder %s61, 0
      %s64 = sadd.s32 %s63, 1
      %s65 = scalar_select %p62, %s63, %s64
      %p68 = pneg %p62
      %p69 = scmp.eq.s32.totalorder %s27, 1
      %p70 = por %p68, %p69
      %p71 = scmp.ne.s32.totalorder %s63, %s66
      %p72 = scmp.eq.s32.totalorder %s27, 0
      %p73 = por %p71, %p72
      %p74 = scmp.ne.s32.totalorder %s63, %s66
      %p75 = scmp.eq.s32.totalorder %s32, 1
      %p76 = por %p74, %p75
      %p77 = scmp.ne.s32.totalorder %s66, %s67
      %p78 = scmp.eq.s32.totalorder %s32, 0
      %p79 = por %p77, %p78
      %p80 = scmp.ne.s32.totalorder %s66, %s67
      %p81 = scmp.eq.s32.totalorder %s33, 1
      %p82 = por %p80, %p81
      %p84 = scmp.ne.s32.totalorder %s67, %s83
      %p85 = scmp.eq.s32.totalorder %s33, 0
      %p86 = por %p84, %p85
      %s88 = sadd.s32 %s87, 1
      %p91 = scmp.eq.s32.totalorder %s27, 1
      %p92 = scmp.ne.s32.totalorder %s87, %s89
      %p93 = scmp.eq.s32.totalorder %s27, 0
      %p94 = por %p92, %p93
      %p95 = scmp.ne.s32.totalorder %s87, %s89
      %p96 = scmp.eq.s32.totalorder %s32, 1
      %p97 = por %p95, %p96
      %p98 = scmp.ne.s32.totalorder %s89, %s90
      %p99 = scmp.eq.s32.totalorder %s32, 0
      %p100 = por %p98, %p99
      %p101 = scmp.ne.s32.totalorder %s89, %s90
      %p102 = scmp.eq.s32.totalorder %s33, 1
      %p103 = por %p101, %p102
      %p105 = scmp.ne.s32.totalorder %s90, %s104
      %p106 = scmp.eq.s32.totalorder %s33, 0
      %p107 = por %p105, %p106
      %s109 = sadd.s32 %s108, 1
      %p112 = scmp.eq.s32.totalorder %s27, 1
      %p113 = scmp.ne.s32.totalorder %s108, %s110
      %p114 = scmp.eq.s32.totalorder %s27, 0
      %p115 = por %p113, %p114
      %p116 = scmp.ne.s32.totalorder %s108, %s110
      %p117 = scmp.eq.s32.totalorder %s32, 1
      %p118 = por %p116, %p117
      %p119 = scmp.ne.s32.totalorder %s110, %s111
      %p120 = scmp.eq.s32.totalorder %s32, 0
      %p121 = por %p119, %p120
      %p122 = scmp.ne.s32.totalorder %s110, %s111
      %p123 = scmp.eq.s32.totalorder %s33, 1
      %p124 = por %p122, %p123
      %p126 = scmp.ne.s32.totalorder %s111, %s125
      %p127 = scmp.eq.s32.totalorder %s33, 0
      %p128 = por %p126, %p127
      %s130 = sadd.s32 %s129, 1
      %p133 = scmp.eq.s32.totalorder %s27, 1
      %p134 = scmp.ne.s32.totalorder %s129, %s131
      %p135 = scmp.eq.s32.totalorder %s27, 0
      %p136 = por %p134, %p135
      %p137 = scmp.ne.s32.totalorder %s129, %s131
      %p138 = scmp.eq.s32.totalorder %s32, 1
      %p139 = por %p137, %p138
      %p140 = scmp.ne.s32.totalorder %s131, %s132
      %p141 = scmp.eq.s32.totalorder %s32, 0
      %p142 = por %p140, %p141
      %p143 = scmp.ne.s32.totalorder %s131, %s132
      %p144 = scmp.eq.s32.totalorder %s33, 1
      %p145 = por %p143, %p144
      %p147 = scmp.ne.s32.totalorder %s132, %s146
      %p148 = scmp.eq.s32.totalorder %s33, 0
      %p149 = por %p147, %p148
      %s151 = sadd.s32 %s150, 1
      %p154 = scmp.eq.s32.totalorder %s27, 1
      %p155 = scmp.ne.s32.totalorder %s150, %s152
      %p156 = scmp.eq.s32.totalorder %s27, 0
      %p157 = por %p155, %p156
      %p158 = scmp.ne.s32.totalorder %s150, %s152
      %p159 = scmp.eq.s32.totalorder %s32, 1
      %p160 = por %p158, %p159
      %p161 = scmp.ne.s32.totalorder %s152, %s153
      %p162 = scmp.eq.s32.totalorder %s32, 0
      %p163 = por %p161, %p162
      %p164 = scmp.ne.s32.totalorder %s152, %s153
      %p165 = scmp.eq.s32.totalorder %s33, 1
      %p166 = por %p164, %p165
      %p168 = scmp.ne.s32.totalorder %s153, %s167
      %p169 = scmp.eq.s32.totalorder %s33, 0
      %p170 = por %p168, %p169
      %s171 = ssub.s32 %s27, %s34
      %p172 = scmp.eq.s32.totalorder %s171, 0
      %s174 = sadd.s32 %s173, 1
      %s175 = scalar_select %p172, %s173, %s174
      %p178 = pneg %p172
      %p179 = scmp.eq.s32.totalorder %s27, 1
      %p180 = por %p178, %p179
      %p181 = scmp.ne.s32.totalorder %s173, %s176
      %p182 = scmp.eq.s32.totalorder %s27, 0
      %p183 = por %p181, %p182
      %p184 = scmp.ne.s32.totalorder %s173, %s176
      %p185 = scmp.eq.s32.totalorder %s32, 1
      %p186 = por %p184, %p185
      %p187 = scmp.ne.s32.totalorder %s176, %s177
      %p188 = scmp.eq.s32.totalorder %s32, 0
      %p189 = por %p187, %p188
      %p190 = scmp.ne.s32.totalorder %s176, %s177
      %p191 = scmp.eq.s32.totalorder %s33, 1
      %p192 = por %p190, %p191
      %p194 = scmp.ne.s32.totalorder %s177, %s193
      %p195 = scmp.eq.s32.totalorder %s33, 0
      %p196 = por %p194, %p195
      %s197 = ssub.s32 %s27, %s34
      %p198 = scmp.eq.s32.totalorder %s197, 0
      %s200 = sadd.s32 %s199, 1
      %s201 = scalar_select %p198, %s199, %s200
      %p204 = pneg %p198
      %p205 = scmp.eq.s32.totalorder %s27, 1
      %p206 = por %p204, %p205
      %p207 = scmp.ne.s32.totalorder %s199, %s202
      %p208 = scmp.eq.s32.totalorder %s27, 0
      %p209 = por %p207, %p208
      %p210 = scmp.ne.s32.totalorder %s199, %s202
      %p211 = scmp.eq.s32.totalorder %s32, 1
      %p212 = por %p210, %p211
      %p213 = scmp.ne.s32.totalorder %s202, %s203
      %p214 = scmp.eq.s32.totalorder %s32, 0
      %p215 = por %p213, %p214
      %p216 = scmp.ne.s32.totalorder %s202, %s203
      %p217 = scmp.eq.s32.totalorder %s33, 1
      %p218 = por %p216, %p217
      %p220 = scmp.ne.s32.totalorder %s203, %s219
      %p221 = scmp.eq.s32.totalorder %s33, 0
      %p222 = por %p220, %p221
      %s223 = ssub.s32 %s27, %s34
      %p224 = scmp.eq.s32.totalorder %s223, 0
      %s226 = sadd.s32 %s225, 1
      %s227 = scalar_select %p224, %s225, %s226
      %p230 = pneg %p224
      %p231 = scmp.eq.s32.totalorder %s27, 1
      %p232 = por %p230, %p231
      %p233 = scmp.ne.s32.totalorder %s225, %s228
      %p234 = scmp.eq.s32.totalorder %s27, 0
      %p235 = por %p233, %p234
      %p236 = scmp.ne.s32.totalorder %s225, %s228
      %p237 = scmp.eq.s32.totalorder %s32, 1
      %p238 = por %p236, %p237
      %p239 = scmp.ne.s32.totalorder %s228, %s229
      %p240 = scmp.eq.s32.totalorder %s32, 0
      %p241 = por %p239, %p240
      %p242 = scmp.ne.s32.totalorder %s228, %s229
      %p243 = scmp.eq.s32.totalorder %s33, 1
      %p244 = por %p242, %p243
      %p246 = scmp.ne.s32.totalorder %s229, %s245
      %p247 = scmp.eq.s32.totalorder %s33, 0
      %p248 = por %p246, %p247
      %s249 = ssub.s32 %s27, %s34
      %p250 = scmp.eq.s32.totalorder %s249, 0
      %s252 = sadd.s32 %s251, 1
      %s253 = scalar_select %p250, %s251, %s252
      %p256 = pneg %p250
      %p257 = scmp.eq.s32.totalorder %s27, 1
      %p258 = por %p256, %p257
      %p259 = scmp.ne.s32.totalorder %s251, %s254
      %p260 = scmp.eq.s32.totalorder %s27, 0
      %p261 = por %p259, %p260
      %p262 = scmp.ne.s32.totalorder %s251, %s254
      %p263 = scmp.eq.s32.totalorder %s32, 1
      %p264 = por %p262, %p263
      %p265 = scmp.ne.s32.totalorder %s254, %s255
      %p266 = scmp.eq.s32.totalorder %s32, 0
      %p267 = por %p265, %p266
      %p268 = scmp.ne.s32.totalorder %s254, %s255
      %p269 = scmp.eq.s32.totalorder %s33, 1
      %p270 = por %p268, %p269
      %p272 = scmp.ne.s32.totalorder %s255, %s271
      %p273 = scmp.eq.s32.totalorder %s33, 0
      %p274 = por %p272, %p273
      %s275 = ssub.s32 %s27, %s34
      %p276 = scmp.eq.s32.totalorder %s275, 0
      %s278 = sadd.s32 %s277, 1
      %s279 = scalar_select %p276, %s277, %s278
      %p282 = pneg %p276
      %p283 = scmp.eq.s32.totalorder %s27, 1
      %p284 = por %p282, %p283
      %p285 = scmp.ne.s32.totalorder %s277, %s280
      %p286 = scmp.eq.s32.totalorder %s27, 0
      %p287 = por %p285, %p286
      %p288 = scmp.ne.s32.totalorder %s277, %s280
      %p289 = scmp.eq.s32.totalorder %s32, 1
      %p290 = por %p288, %p289
      %p291 = scmp.ne.s32.totalorder %s280, %s281
      %p292 = scmp.eq.s32.totalorder %s32, 0
      %p293 = por %p291, %p292
      %p294 = scmp.ne.s32.totalorder %s280, %s281
      %p295 = scmp.eq.s32.totalorder %s33, 1
      %p296 = por %p294, %p295
      %p298 = scmp.ne.s32.totalorder %s281, %s297
      %p299 = scmp.eq.s32.totalorder %s33, 0
      %p300 = por %p298, %p299
      %p301 = scmp.le.s32.totalorder 1, %s27
      %p302 = scmp.lt.s32.totalorder %s27, 3
      %p303 = pnand %p301, %p302
      %p304 = pneg %p303
      // Predicated region
      $region9: #{tpu_custom_call.1} parent=5 // pred_check
        _
      $region10: #{tpu_custom_call.1} parent=5 // pred_check_branch
        %306 = sbr.rel (%p303) target = $region12
      $region11: #{tpu_custom_call.1} parent=5 // pred_region
        %s307 = ssub.s32 %s27, 1
        // Predicated region
        $region13: #{tpu_custom_call.1} parent=11 // pred_check
          %p308 = pneg %p100
        $region14: #{tpu_custom_call.1} parent=11 // pred_check_branch
          %310 = sbr.rel (%p308) target = $region16
        $region15: #{tpu_custom_call.1} parent=11 // pred_region
          _
        $region16: #{tpu_custom_call.1} parent=11 // pred_fallthru
          _
        // Predicated region
        $region17: #{tpu_custom_call.1} parent=11 // pred_check
          %p311 = pneg %p121
        $region18: #{tpu_custom_call.1} parent=11 // pred_check_branch
          %313 = sbr.rel (%p311) target = $region20
        $region19: #{tpu_custom_call.1} parent=11 // pred_region
          %315 = vsyncadd [#allocation3], 0
          %s316 = sshll.u32 %s3, 4
          %s317 = int_to_ptr.hbm [resolvable:$true] %s316
          %s318 = sshll.u32 [#allocation2], 4
          %s319 = int_to_ptr.vmem [resolvable:$true] %s318
          %324 = dma.hbm_to_vmem [thread:$0]  %s317, 9216, %s319, [#allocation3], 576, 576, 36
        $region20: #{tpu_custom_call.1} parent=11 // pred_fallthru
          _
        // Predicated region
        $region21: #{tpu_custom_call.1} parent=11 // pred_check
          %p325 = pneg %p142
        $region22: #{tpu_custom_call.1} parent=11 // pred_check_branch
          %327 = sbr.rel (%p325) target = $region24
        $region23: #{tpu_custom_call.1} parent=11 // pred_region
          _
        $region24: #{tpu_custom_call.1} parent=11 // pred_fallthru
          _
        // Predicated region
        $region25: #{tpu_custom_call.1} parent=11 // pred_check
          %p328 = pneg %p163
        $region26: #{tpu_custom_call.1} parent=11 // pred_check_branch
          %330 = sbr.rel (%p328) target = $region28
        $region27: #{tpu_custom_call.1} parent=11 // pred_region
          _
        $region28: #{tpu_custom_call.1} parent=11 // pred_fallthru
          _
      $region12: #{tpu_custom_call.1} parent=5 // pred_fallthru
        _
      %p331 = scmp.lt.s32.totalorder %s27, 2
      // Predicated region
      $region29: #{tpu_custom_call.1} parent=5 // pred_check
        %p332 = pneg %p331
      $region30: #{tpu_custom_call.1} parent=5 // pred_check_branch
        %334 = sbr.rel (%p332) target = $region32
      $region31: #{tpu_custom_call.1} parent=5 // pred_region
        // Predicated region
        $region33: #{tpu_custom_call.1} parent=31 // pred_check
          %p335 = pneg %p47
        $region34: #{tpu_custom_call.1} parent=31 // pred_check_branch
          %337 = sbr.rel (%p335) target = $region36
        $region35: #{tpu_custom_call.1} parent=31 // pred_region
          %p338 = scmp.lt.s32.totalorder %s27, 1
          %s339 = scalar_select %p338, %s27, 1
          %s340 = smul.addr %s339, 2
          %s341 = smul.addr %s340, 2
          %s342 = scalar_lea.vmem %s0, %s341
        $region36: #{tpu_custom_call.1} parent=31 // pred_fallthru
          _
        // Predicated region
        $region37: #{tpu_custom_call.1} parent=31 // pred_check
          %p343 = pneg %p73
        $region38: #{tpu_custom_call.1} parent=31 // pred_check_branch
          %345 = sbr.rel (%p343) target = $region40
        $region39: #{tpu_custom_call.1} parent=31 // pred_region
          %p346 = scmp.lt.s32.totalorder %s27, 1
          %s347 = scalar_select %p346, %s27, 1
          %s348 = smul.addr %s347, 2
          %s349 = scalar_lea.vmem %s1, %s348
        $region40: #{tpu_custom_call.1} parent=31 // pred_fallthru
          _
      $region32: #{tpu_custom_call.1} parent=5 // pred_fallthru
        _
      %p350 = scmp.le.s32.totalorder 1, %s27
      %p351 = scmp.lt.s32.totalorder %s27, 3
      %p352 = pnand %p350, %p351
      %p353 = pneg %p352
      // Predicated region
      $region41: #{tpu_custom_call.1} parent=5 // pred_check
        _
      $region42: #{tpu_custom_call.1} parent=5 // pred_check_branch
        %355 = sbr.rel (%p352) target = $region44
      $region43: #{tpu_custom_call.1} parent=5 // pred_region
        %s356 = ssub.s32 %s27, 1
        // Predicated region
        $region45: #{tpu_custom_call.1} parent=43 // pred_check
          %p357 = pneg %p121
        $region46: #{tpu_custom_call.1} parent=43 // pred_check_branch
          %359 = sbr.rel (%p357) target = $region48
        $region47: #{tpu_custom_call.1} parent=43 // pred_region
          %361 = dma.done [#allocation3], 9216
        $region48: #{tpu_custom_call.1} parent=43 // pred_fallthru
          _
        %p362 = scmp.lt.s32.totalorder %s32, 1
        %s363 = scalar_select %p362, %s32, 1
        %s364 = smul.addr %s363, 2
        %s365 = smul.addr %s364, 2
        %s366 = scalar_lea.vmem %s0, %s365
        %p367 = pneg %p53
        %p368 = pneg %p50
        %p369 = scmp.lt.s32.totalorder %s32, 1
        %s370 = scalar_select %p369, %s32, 1
        %s371 = smul.addr %s370, 2
        %s372 = scalar_lea.vmem %s1, %s371
        %p373 = pneg %p79
        %p374 = pneg %p76
        %p375 = pneg %p100
        %p376 = pneg %p97
        %p377 = pneg %p121
        %p378 = pneg %p118
        %p379 = pneg %p142
        %p380 = pneg %p139
        %p381 = pneg %p163
        %p382 = pneg %p160
        %p383 = pneg %p189
        %p384 = pneg %p186
        %s385 = sand.u32 %s176, 1
        %s386 = scalar_lea.sflag [#allocation4], %s385
        %s387 = sand.u32 %s176, 1
        %s388 = smul.addr %s387, 2
        %s389 = scalar_lea.vmem [#allocation5], %s388
        %p390 = pneg %p215
        %p391 = pneg %p212
        %s392 = sand.u32 %s32, 1
        %s393 = scalar_lea.sflag [#allocation7], %s392
        %s394 = sand.u32 %s202, 1
        %s395 = smul.addr %s394, 2
        %s396 = scalar_lea.vmem [#allocation6], %s395
        %p397 = pneg %p241
        %p398 = pneg %p238
        %s399 = sand.u32 %s32, 1
        %s400 = scalar_lea.sflag [#allocation7], %s399
        %s401 = sand.u32 %s228, 1
        %s402 = smul.addr %s401, 2
        %s403 = scalar_lea.vmem [#allocation8], %s402
        %p404 = pneg %p267
        %p405 = pneg %p264
        %s406 = sand.u32 %s32, 1
        %s407 = scalar_lea.sflag [#allocation10], %s406
        %s408 = sand.u32 %s254, 1
        %s409 = scalar_lea.vmem [#allocation9], %s408
        %p410 = pneg %p293
        %p411 = pneg %p290
        %s412 = sand.u32 %s32, 1
        %s413 = scalar_lea.sflag [#allocation10], %s412
        %s414 = sand.u32 %s280, 1
        %s415 = scalar_lea.vmem [#allocation11], %s414
        %p416 = scmp.lt.s32.totalorder %s32, 1
        %s417 = scalar_select %p416, %s32, 1
        %s418 = smul.addr %s417, 2
        %s419 = smul.addr %s418, 2
        %s420 = scalar_lea.vmem %s0, %s419
        %p421 = scmp.lt.s32.totalorder %s32, 1
        %s422 = scalar_select %p421, %s32, 1
        %s423 = smul.addr %s422, 2
        %s424 = scalar_lea.vmem %s1, %s423
        %v426 = vlaneseq
        %v427 = vand.u32 %v426, 127
        %v428 = vadd.s32 %v427, 128
        %vm429 = vcmp.lt.s32.totalorder %v427, 0
        %v430 = vsub.s32 0, %v427
        %v431 = vsel %vm429, %v430, %v427
        %v432 = vshrl.u32 %v431, 4
        %v433 = vand.u32 %v431, 15
        %v434 = vsub.s32 0, %v433
        %v435 = vsel %vm429, %v434, %v433
        %vm436 = vcmp.lt.s32.totalorder %v428, 0
        %v437 = vsub.s32 0, %v428
        %v438 = vsel %vm436, %v437, %v428
        %v439 = vshrl.u32 %v438, 4
        %v440 = vand.u32 %v438, 15
        %v441 = vsub.s32 0, %v440
        %v442 = vsel %vm436, %v441, %v440
        %vm443 = vcmp.ne.s32.totalorder %v435, 0
        %vm444 = vcmp.ne.s32.totalorder %v442, 0
        %vm445 = vcmp.lt.s32.totalorder %v435, 0
        %vm446 = vcmp.lt.s32.totalorder %v442, 0
        %vm447 = vmand %vm445, %vm443
        %vm448 = vmand %vm446, %vm444
        %v449 = vadd.s32 %v435, 16
        %v450 = vadd.s32 %v442, 16
        %v451 = vsel %vm447, %v449, %v435
        %v452 = vsel %vm448, %v450, %v442
        %vm453 = vcmp.ge.s32.totalorder %v451, 1
        %vm454 = vcmp.ge.s32.totalorder %v452, 1
        %v455 = vsel %vm453, 1, 0
        %v456 = vsel %vm454, 1, 0
        %v457 = vcvt.s32.f32 %v455
        %v458 = vcvt.s32.f32 %v456
        %v459 = vpack.c.bf16 %v458, %v457
        %vm460 = vcmp.le.s32.totalorder %v451, 14
        %vm461 = vcmp.le.s32.totalorder %v452, 14
        %v462 = vsel %vm460, 1, 0
        %v463 = vsel %vm461, 1, 0
        %v464 = vcvt.s32.f32 %v462
        %v465 = vcvt.s32.f32 %v463
        %v466 = vpack.c.bf16 %v465, %v464
        %v467 = vld [vmem:[%s420] sm:$0xf]
        %469 = vst [vmem:[#allocation1] ss:$4 sm:$0xff] %v467
        %v470 = vld.sshfl [vmem:[#allocation1] sm:$0xff pattern:$0x73625140]
        %v472 = vld.sshfl [vmem:[#allocation1 + $0x8] sm:$0xff pattern:$0x73625140]
        %474 = vrot.lane.b32.xlu0 %v470, 17
        %v475 = vpop.permute.xlu0 %474
        %476 = vrot.lane.b32.xlu0 %v472, 17
        %v477 = vpop.permute.xlu0 %476
        %vm478 = vcmask 138240
        %v479 = vsel %vm478, %v475, %v477
        %vm481 = vcmask 138240
        %v484 = vsel %vm481, 0, %v475
        %v486 = vunpack.c.l.bf16 %v484
        %v487 = vunpack.c.l.bf16 %v479
        %v488 = vunpack.c.l.bf16 %v459
        %v489 = vunpack.c.h.bf16 %v459
        %v490 = vmul.f32 %v486, %v488
        %v491 = vmul.f32 %v487, %v489
        %v492 = vpack.c.bf16 %v491, %v490
        %493 = vst [vmem:[#allocation1] ss:$4 sm:$0xff] %v467
        %v494 = vld.sshfl [vmem:[#allocation1] sm:$0xff pattern:$0x73625140]
        %v496 = vld.sshfl [vmem:[#allocation1 + $0x8] sm:$0xff pattern:$0x73625140]
        %498 = vrot.lane.b32.xlu0 %v494, 16
        %v499 = vpop.permute.xlu0 %498
        %500 = vrot.lane.b32.xlu0 %v496, 16
        %v501 = vpop.permute.xlu0 %500
        %vm502 = vcmask 130048
        %v503 = vsel %vm502, %v499, %v501
        %vm504 = vcmask 130048
        %v506 = vsel %vm504, 0, %v499
        %507 = vst [vmem:[#allocation1] ss:$4 sm:$0xff] %v467
        %v508 = vld.sshfl [vmem:[#allocation1] sm:$0xff pattern:$0x73625140]
        %v510 = vld.sshfl [vmem:[#allocation1 + $0x8] sm:$0xff pattern:$0x73625140]
        %512 = vrot.lane.b32.xlu0 %v508, 15
        %v513 = vpop.permute.xlu0 %512
        %514 = vrot.lane.b32.xlu0 %v510, 15
        %v515 = vpop.permute.xlu0 %514
        %vm516 = vcmask 121856
        %v517 = vsel %vm516, %v513, %v515
        %vm519 = vcmask 121856
        %v521 = vsel %vm519, 0, %v513
        %v523 = vunpack.c.l.bf16 %v521
        %v524 = vunpack.c.l.bf16 %v517
        %v525 = vunpack.c.l.bf16 %v466
        %v526 = vunpack.c.h.bf16 %v466
        %v527 = vmul.f32 %v523, %v525
        %v528 = vmul.f32 %v524, %v526
        %v529 = vpack.c.bf16 %v528, %v527
        %530 = vst [vmem:[#allocation1] ss:$4 sm:$0xff] %v467
        %v531 = vld.sshfl [vmem:[#allocation1] sm:$0xff pattern:$0x73625140]
        %v533 = vld.sshfl [vmem:[#allocation1 + $0x8] sm:$0xff pattern:$0x73625140]
        %535 = vrot.lane.b32.xlu0 %v531, 1
        %v536 = vpop.permute.xlu0 %535
        %537 = vrot.lane.b32.xlu0 %v533, 1
        %v538 = vpop.permute.xlu0 %537
        %vm539 = vcmask 7168
        %v540 = vsel %vm539, %v536, %v538
        %vm542 = vcmask 7168
        %v544 = vsel %vm542, 0, %v536
        %v546 = vunpack.c.l.bf16 %v544
        %v547 = vunpack.c.l.bf16 %v540
        %v548 = vmul.f32 %v546, %v488
        %v549 = vmul.f32 %v547, %v489
        %v550 = vpack.c.bf16 %v549, %v548
        %551 = vst [vmem:[#allocation1] ss:$4 sm:$0xff] %v467
        %v552 = vld.sshfl [vmem:[#allocation1] sm:$0xff pattern:$0x73625140]
        %v554 = vld.sshfl [vmem:[#allocation1 + $0x8] sm:$0xff pattern:$0x73625140]
        %556 = vrot.lane.b32.xlu0 %v552, 127
        %v557 = vpop.permute.xlu0 %556
        %558 = vrot.lane.b32.xlu0 %v554, 127
        %v559 = vpop.permute.xlu0 %558
        %vm560 = vcmask 1039360
        %v561 = vsel %vm560, %v557, %v559
        %vm563 = vcmask 1039360
        %v565 = vsel %vm563, %v559, 0
        %v567 = vunpack.c.l.bf16 %v561
        %v568 = vunpack.c.l.bf16 %v565
        %v569 = vmul.f32 %v567, %v525
        %v570 = vmul.f32 %v568, %v526
        %v571 = vpack.c.bf16 %v570, %v569
        %572 = vst [vmem:[#allocation1] ss:$4 sm:$0xff] %v467
        %v573 = vld.sshfl [vmem:[#allocation1] sm:$0xff pattern:$0x73625140]
        %v575 = vld.sshfl [vmem:[#allocation1 + $0x8] sm:$0xff pattern:$0x73625140]
        %577 = vrot.lane.b32.xlu0 %v573, 113
        %v578 = vpop.permute.xlu0 %577
        %579 = vrot.lane.b32.xlu0 %v575, 113
        %v580 = vpop.permute.xlu0 %579
        %vm581 = vcmask 924672
        %v582 = vsel %vm581, %v578, %v580
        %vm584 = vcmask 924672
        %v586 = vsel %vm584, %v580, 0
        %v588 = vunpack.c.l.bf16 %v582
        %v589 = vunpack.c.l.bf16 %v586
        %v590 = vmul.f32 %v588, %v488
        %v591 = vmul.f32 %v589, %v489
        %v592 = vpack.c.bf16 %v591, %v590
        %593 = vst [vmem:[#allocation1] ss:$4 sm:$0xff] %v467
        %v594 = vld.sshfl [vmem:[#allocation1] sm:$0xff pattern:$0x73625140]
        %v596 = vld.sshfl [vmem:[#allocation1 + $0x8] sm:$0xff pattern:$0x73625140]
        %598 = vrot.lane.b32.xlu0 %v594, 112
        %v599 = vpop.permute.xlu0 %598
        %600 = vrot.lane.b32.xlu0 %v596, 112
        %v601 = vpop.permute.xlu0 %600
        %vm602 = vcmask 916480
        %v603 = vsel %vm602, %v599, %v601
        %vm604 = vcmask 916480
        %v606 = vsel %vm604, %v601, 0
        %607 = vst [vmem:[#allocation1] ss:$4 sm:$0xff] %v467
        %v608 = vld.sshfl [vmem:[#allocation1] sm:$0xff pattern:$0x73625140]
        %v610 = vld.sshfl [vmem:[#allocation1 + $0x8] sm:$0xff pattern:$0x73625140]
        %612 = vrot.lane.b32.xlu0 %v608, 111
        %v613 = vpop.permute.xlu0 %612
        %614 = vrot.lane.b32.xlu0 %v610, 111
        %v615 = vpop.permute.xlu0 %614
        %vm616 = vcmask 908288
        %v617 = vsel %vm616, %v613, %v615
        %vm619 = vcmask 908288
        %v621 = vsel %vm619, %v615, 0
        %v623 = vunpack.c.l.bf16 %v617
        %v624 = vunpack.c.l.bf16 %v621
        %v625 = vmul.f32 %v623, %v525
        %v626 = vmul.f32 %v624, %v526
        %v627 = vpack.c.bf16 %v626, %v625
        %v629 = vunpack.c.l.b16 %v492
        %v630 = vunpack.c.h.b16 %v492
        %v631 = vpack.c.b16 %v629, %v629
        %v632 = vpack.c.b16 %v630, %v630
        %v635 = vshrl.u32 %v506, 16
        %v637 = vrot.slane %v635, 6
        %v638 = vshll.u32 %v506, 16
        %v640 = vrot.slane %v638, 7
        %v641 = vor.u32 %v637, %v640
        %v643 = vshrl.u32 %v503, 16
        %v645 = vrot.slane %v643, 6
        %v646 = vshll.u32 %v503, 16
        %v648 = vrot.slane %v646, 7
        %v649 = vor.u32 %v645, %v648
        %v653 = vunpack.c.l.b16 %v529
        %v654 = vunpack.c.h.b16 %v529
        %v655 = vpack.c.b16 %v653, %v653
        %v656 = vpack.c.b16 %v654, %v654
        %v657 = vrot.slane %v655, 5
        %v658 = vrot.slane %v656, 5
        %v660 = vunpack.c.l.b16 %v550
        %v661 = vunpack.c.h.b16 %v550
        %v662 = vpack.c.b16 %v660, %v660
        %v663 = vpack.c.b16 %v661, %v661
        %v665 = vshrl.u32 %v662, 16
        %v667 = vrot.slane %v665, 3
        %v668 = vshll.u32 %v662, 16
        %v670 = vrot.slane %v668, 4
        %v671 = vor.u32 %v667, %v670
        %v673 = vshrl.u32 %v663, 16
        %v675 = vrot.slane %v673, 3
        %v676 = vshll.u32 %v663, 16
        %v678 = vrot.slane %v676, 4
        %v679 = vor.u32 %v675, %v678
        %s682 = scalar_lea.vmem [#allocation1], 3
        %683 = vst [vmem:[%s682] ss:$4 sm:$0xff] %v467
        %v684 = vld.sshfl [vmem:[#allocation1] sm:$0xff pattern:$0x73625140]
        %v685 = vld.sshfl [vmem:[#allocation1 + $0x8] sm:$0xff pattern:$0x73625140]
        %v687 = vunpack.c.l.b16 %v571
        %v688 = vunpack.c.h.b16 %v571
        %v689 = vpack.c.b16 %v687, %v687
        %v690 = vpack.c.b16 %v688, %v688
        %v692 = vshll.u32 %v689, 16
        %v694 = vrot.slane %v692, 1
        %v696 = vshll.u32 %v690, 16
        %v698 = vrot.slane %v696, 1
        %v699 = vshrl.u32 %v689, 16
        %v701 = vor.u32 %v699, %v694
        %v702 = vshrl.u32 %v690, 16
        %v704 = vor.u32 %v702, %v698
        %v708 = vunpack.c.l.b16 %v592
        %v709 = vunpack.c.h.b16 %v592
        %v710 = vpack.c.b16 %v708, %v708
        %v711 = vpack.c.b16 %v709, %v709
        %v712 = vrot.slane %v710, 7
        %v713 = vrot.slane %v711, 7
        %v715 = vshrl.u32 %v603, 16
        %v717 = vrot.slane %v715, 5
        %v718 = vshll.u32 %v603, 16
        %v720 = vrot.slane %v718, 6
        %v721 = vor.u32 %v717, %v720
        %v722 = vshrl.u32 %v606, 16
        %v724 = vrot.slane %v722, 5
        %v725 = vshll.u32 %v606, 16
        %v727 = vrot.slane %v725, 6
        %v728 = vor.u32 %v724, %v727
        %v732 = vunpack.c.l.b16 %v627
        %v733 = vunpack.c.h.b16 %v627
        %v734 = vpack.c.b16 %v732, %v732
        %v735 = vpack.c.b16 %v733, %v733
        %vm736 = vcmask 1041408
        %vm737 = vsmask.f32 1280
        %vm738 = vmand %vm736, %vm737
        %v739 = vsel %vm738, %v631, %v641
        %v740 = vsel %vm738, %v632, %v649
        %vm741 = vcmask 1042432
        %v744 = vsel %vm741, %v739, %v657
        %v748 = vsel %vm741, %v740, %v658
        %vm750 = vcmask 1044480
        %vm751 = vsmask.f32 4352
        %vm752 = vmand %vm750, %vm751
        %v753 = vsel %vm752, %v744, %v671
        %v754 = vsel %vm752, %v748, %v679
        %vm755 = vcmask 1045504
        %v757 = vsel %vm755, %v753, %v684
        %v760 = vsel %vm755, %v754, %v685
        %vm762 = vcmask 1047552
        %vm763 = vsmask.f32 7424
        %vm764 = vmand %vm762, %vm763
        %v765 = vsel %vm764, %v757, %v694
        %v766 = vsel %vm764, %v760, %v698
        %vm767 = vcmask 1040384
        %v770 = vsel %vm767, %v701, %v712
        %v774 = vsel %vm767, %v704, %v713
        %vm776 = vcmask 1042432
        %vm777 = vsmask.f32 2304
        %vm778 = vmand %vm776, %vm777
        %v779 = vsel %vm778, %v770, %v721
        %v780 = vsel %vm778, %v774, %v728
        %vm781 = vcmask 1043456
        %v784 = vsel %vm781, %v779, %v734
        %v787 = vsel %vm781, %v780, %v735
        %v788 = vld [vmem:[%s2] sm:$0xf]
        %v789 = vld [vmem:[%s2 + $0x4] sm:$0xf]
        %v790 = vld [vmem:[%s2 + $0x8] sm:$0xf]
        %v791 = vld [vmem:[%s2 + $0xc] sm:$0xf]
        %v792 = vld [vmem:[%s2 + $0x10] sm:$0xf]
        %v793 = vld [vmem:[%s2 + $0x14] sm:$0xf]
        %v794 = vld [vmem:[%s2 + $0x18] sm:$0xf]
        %v795 = vld [vmem:[%s2 + $0x1c] sm:$0xf]
        %v796 = vld [vmem:[%s2 + $0x20] sm:$0xf]
        %v797 = vld [vmem:[%s2 + $0x24] sm:$0xf]
        %v798 = vld [vmem:[%s2 + $0x28] sm:$0xf]
        %v799 = vld [vmem:[%s2 + $0x2c] sm:$0xf]
        %v800 = vld [vmem:[%s2 + $0x30] sm:$0xf]
        %v801 = vld [vmem:[%s2 + $0x34] sm:$0xf]
        %v802 = vld [vmem:[%s2 + $0x38] sm:$0xf]
        %v803 = vld [vmem:[%s2 + $0x3c] sm:$0xf]
        %v820 = vunpack.c.l.b16 %v788
        %v821 = vunpack.c.l.b16 %v789
        %v822 = vunpack.c.l.b16 %v790
        %v823 = vunpack.c.l.b16 %v791
        %v824 = vunpack.c.l.b16 %v792
        %v825 = vunpack.c.l.b16 %v793
        %v826 = vunpack.c.l.b16 %v794
        %v827 = vunpack.c.l.b16 %v795
        %v828 = vunpack.c.l.b16 %v796
        %v829 = vunpack.c.l.b16 %v797
        %v830 = vunpack.c.l.b16 %v798
        %v831 = vunpack.c.l.b16 %v799
        %v832 = vunpack.c.l.b16 %v800
        %v833 = vunpack.c.l.b16 %v801
        %v834 = vunpack.c.l.b16 %v802
        %v835 = vunpack.c.l.b16 %v803
        %v836 = vpack.c.b16 %v821, %v820
        %v837 = vpack.c.b16 %v823, %v822
        %v838 = vpack.c.b16 %v825, %v824
        %v839 = vpack.c.b16 %v827, %v826
        %v840 = vpack.c.b16 %v829, %v828
        %v841 = vpack.c.b16 %v831, %v830
        %v842 = vpack.c.b16 %v833, %v832
        %v843 = vpack.c.b16 %v835, %v834
        %vm844 = vcmask 220160
        %v846 = vsel %vm844, %v836, 0
        %v849 = vsel %vm844, %v837, 0
        %v852 = vsel %vm844, %v838, 0
        %v855 = vsel %vm844, %v839, 0
        %v858 = vsel %vm844, %v840, 0
        %v861 = vsel %vm844, %v841, 0
        %v864 = vsel %vm844, %v842, 0
        %v867 = vsel %vm844, %v843, 0
        %vm869 = vcmask 1044480
        %v870 = vsel %vm869, 4294967295, 65535
        %v871 = vsel %vm755, %v870, 0
        %v872 = vand.u32 %v784, %v871
        %v874 = vand.u32 %v787, %v871
        %876 = vmatpush.bf16.msra.mxu0 0
        %877 = vmatpush.bf16.msra.mxu0 0
        %878 = vmatpush.bf16.msra.mxu0 0
        %879 = vmatpush.bf16.msra.mxu0 0
        %880 = vmatpush.bf16.msra.mxu0 0
        %881 = vmatpush.bf16.msra.mxu0 0
        %882 = vmatpush.bf16.msra.mxu0 %v872
        %883 = vmatpush.bf16.msra.mxu0 %v765
        %884 = vmatmul.bf16.gmra.mxu0 %v846
        %v885 = vpop.f32.mrf.mxu0
        %v886 = vadd.f32 0.0, %v885
        %v887 = vpop.f32.mrf.mxu0
        %v888 = vadd.f32 0.0, %v887
        %889 = vmatmul.bf16.gmra.mxu0 %v849
        %v890 = vpop.f32.mrf.mxu0
        %v891 = vadd.f32 0.0, %v890
        %v892 = vpop.f32.mrf.mxu0
        %v893 = vadd.f32 0.0, %v892
        %894 = vmatmul.bf16.gmra.mxu0 %v852
        %v895 = vpop.f32.mrf.mxu0
        %v896 = vadd.f32 0.0, %v895
        %v897 = vpop.f32.mrf.mxu0
        %v898 = vadd.f32 0.0, %v897
        %899 = vmatmul.bf16.gmra.mxu0 %v855
        %v900 = vpop.f32.mrf.mxu0
        %v901 = vadd.f32 0.0, %v900
        %v902 = vpop.f32.mrf.mxu0
        %v903 = vadd.f32 0.0, %v902
        %904 = vmatmul.bf16.gmra.mxu0 %v858
        %v905 = vpop.f32.mrf.mxu0
        %v906 = vadd.f32 0.0, %v905
        %v907 = vpop.f32.mrf.mxu0
        %v908 = vadd.f32 0.0, %v907
        %909 = vmatmul.bf16.gmra.mxu0 %v861
        %v910 = vpop.f32.mrf.mxu0
        %v911 = vadd.f32 0.0, %v910
        %v912 = vpop.f32.mrf.mxu0
        %v913 = vadd.f32 0.0, %v912
        %914 = vmatmul.bf16.gmra.mxu0 %v864
        %v915 = vpop.f32.mrf.mxu0
        %v916 = vadd.f32 0.0, %v915
        %v917 = vpop.f32.mrf.mxu0
        %v918 = vadd.f32 0.0, %v917
        %919 = vmatmul.bf16.gmra.mxu0 %v867
        %v920 = vpop.f32.mrf.mxu0
        %v921 = vadd.f32 0.0, %v920
        %v922 = vpop.f32.mrf.mxu0
        %v923 = vadd.f32 0.0, %v922
        %924 = vdwg.mxu0
        %925 = vmatpush.bf16.msra.mxu0 0
        %926 = vmatpush.bf16.msra.mxu0 0
        %927 = vmatpush.bf16.msra.mxu0 0
        %928 = vmatpush.bf16.msra.mxu0 0
        %929 = vmatpush.bf16.msra.mxu0 0
        %930 = vmatpush.bf16.msra.mxu0 0
        %931 = vmatpush.bf16.msra.mxu0 %v874
        %932 = vmatpush.bf16.msra.mxu0 %v766
        %933 = vmatmul.bf16.gmra.mxu0 %v846
        %v934 = vpop.f32.mrf.mxu0
        %v935 = vadd.f32 0.0, %v934
        %v936 = vpop.f32.mrf.mxu0
        %v937 = vadd.f32 0.0, %v936
        %938 = vmatmul.bf16.gmra.mxu0 %v849
        %v939 = vpop.f32.mrf.mxu0
        %v940 = vadd.f32 0.0, %v939
        %v941 = vpop.f32.mrf.mxu0
        %v942 = vadd.f32 0.0, %v941
        %943 = vmatmul.bf16.gmra.mxu0 %v852
        %v944 = vpop.f32.mrf.mxu0
        %v945 = vadd.f32 0.0, %v944
        %v946 = vpop.f32.mrf.mxu0
        %v947 = vadd.f32 0.0, %v946
        %948 = vmatmul.bf16.gmra.mxu0 %v855
        %v949 = vpop.f32.mrf.mxu0
        %v950 = vadd.f32 0.0, %v949
        %v951 = vpop.f32.mrf.mxu0
        %v952 = vadd.f32 0.0, %v951
        %953 = vmatmul.bf16.gmra.mxu0 %v858
        %v954 = vpop.f32.mrf.mxu0
        %v955 = vadd.f32 0.0, %v954
        %v956 = vpop.f32.mrf.mxu0
        %v957 = vadd.f32 0.0, %v956
        %958 = vmatmul.bf16.gmra.mxu0 %v861
        %v959 = vpop.f32.mrf.mxu0
        %v960 = vadd.f32 0.0, %v959
        %v961 = vpop.f32.mrf.mxu0
        %v962 = vadd.f32 0.0, %v961
        %963 = vmatmul.bf16.gmra.mxu0 %v864
        %v964 = vpop.f32.mrf.mxu0
        %v965 = vadd.f32 0.0, %v964
        %v966 = vpop.f32.mrf.mxu0
        %v967 = vadd.f32 0.0, %v966
        %968 = vmatmul.bf16.gmra.mxu0 %v867
        %v969 = vpop.f32.mrf.mxu0
        %v970 = vadd.f32 0.0, %v969
        %v971 = vpop.f32.mrf.mxu0
        %v972 = vadd.f32 0.0, %v971
        %973 = vdwg.mxu0
        %v974 = vmax.f32 %v886, 0.0
        %v975 = vmax.f32 %v935, 0.0
        %v976 = vmax.f32 %v888, 0.0
        %v977 = vmax.f32 %v937, 0.0
        %v978 = vmax.f32 %v891, 0.0
        %v979 = vmax.f32 %v940, 0.0
        %v980 = vmax.f32 %v893, 0.0
        %v981 = vmax.f32 %v942, 0.0
        %v982 = vmax.f32 %v896, 0.0
        %v983 = vmax.f32 %v945, 0.0
        %v984 = vmax.f32 %v898, 0.0
        %v985 = vmax.f32 %v947, 0.0
        %v986 = vmax.f32 %v901, 0.0
        %v987 = vmax.f32 %v950, 0.0
        %v988 = vmax.f32 %v903, 0.0
        %v989 = vmax.f32 %v952, 0.0
        %v990 = vmax.f32 %v906, 0.0
        %v991 = vmax.f32 %v955, 0.0
        %v992 = vmax.f32 %v908, 0.0
        %v993 = vmax.f32 %v957, 0.0
        %v994 = vmax.f32 %v911, 0.0
        %v995 = vmax.f32 %v960, 0.0
        %v996 = vmax.f32 %v913, 0.0
        %v997 = vmax.f32 %v962, 0.0
        %v998 = vmax.f32 %v916, 0.0
        %v999 = vmax.f32 %v965, 0.0
        %v1000 = vmax.f32 %v918, 0.0
        %v1001 = vmax.f32 %v967, 0.0
        %v1002 = vmax.f32 %v921, 0.0
        %v1003 = vmax.f32 %v970, 0.0
        %v1004 = vmax.f32 %v923, 0.0
        %v1005 = vmax.f32 %v972, 0.0
        %v1006 = vpack.c.bf16 %v975, %v974
        %v1007 = vpack.c.bf16 %v977, %v976
        %v1008 = vpack.c.bf16 %v979, %v978
        %v1009 = vpack.c.bf16 %v981, %v980
        %v1010 = vpack.c.bf16 %v983, %v982
        %v1011 = vpack.c.bf16 %v985, %v984
        %v1012 = vpack.c.bf16 %v987, %v986
        %v1013 = vpack.c.bf16 %v989, %v988
        %v1014 = vpack.c.bf16 %v991, %v990
        %v1015 = vpack.c.bf16 %v993, %v992
        %v1016 = vpack.c.bf16 %v995, %v994
        %v1017 = vpack.c.bf16 %v997, %v996
        %v1018 = vpack.c.bf16 %v999, %v998
        %v1019 = vpack.c.bf16 %v1001, %v1000
        %v1020 = vpack.c.bf16 %v1003, %v1002
        %v1021 = vpack.c.bf16 %v1005, %v1004
        %v1022 = vld [vmem:[%s4] sm:$0xf]
        %v1039 = vunpack.c.l.b16 %v1006
        %v1040 = vunpack.c.h.b16 %v1006
        %v1041 = vunpack.c.l.b16 %v1007
        %v1042 = vunpack.c.h.b16 %v1007
        %v1043 = vunpack.c.l.b16 %v1008
        %v1044 = vunpack.c.h.b16 %v1008
        %v1045 = vunpack.c.l.b16 %v1009
        %v1046 = vunpack.c.h.b16 %v1009
        %v1047 = vunpack.c.l.b16 %v1010
        %v1048 = vunpack.c.h.b16 %v1010
        %v1049 = vunpack.c.l.b16 %v1011
        %v1050 = vunpack.c.h.b16 %v1011
        %v1051 = vunpack.c.l.b16 %v1012
        %v1052 = vunpack.c.h.b16 %v1012
        %v1053 = vunpack.c.l.b16 %v1013
        %v1054 = vunpack.c.h.b16 %v1013
        %v1055 = vunpack.c.l.b16 %v1014
        %v1056 = vunpack.c.h.b16 %v1014
        %v1057 = vunpack.c.l.b16 %v1015
        %v1058 = vunpack.c.h.b16 %v1015
        %v1059 = vunpack.c.l.b16 %v1016
        %v1060 = vunpack.c.h.b16 %v1016
        %v1061 = vunpack.c.l.b16 %v1017
        %v1062 = vunpack.c.h.b16 %v1017
        %v1063 = vunpack.c.l.b16 %v1018
        %v1064 = vunpack.c.h.b16 %v1018
        %v1065 = vunpack.c.l.b16 %v1019
        %v1066 = vunpack.c.h.b16 %v1019
        %v1067 = vunpack.c.l.b16 %v1020
        %v1068 = vunpack.c.h.b16 %v1020
        %v1069 = vunpack.c.l.b16 %v1021
        %v1070 = vunpack.c.h.b16 %v1021
        %v1071 = vpack.c.b16 %v1041, %v1039
        %v1072 = vpack.c.b16 %v1042, %v1040
        %v1073 = vpack.c.b16 %v1045, %v1043
        %v1074 = vpack.c.b16 %v1046, %v1044
        %v1075 = vpack.c.b16 %v1049, %v1047
        %v1076 = vpack.c.b16 %v1050, %v1048
        %v1077 = vpack.c.b16 %v1053, %v1051
        %v1078 = vpack.c.b16 %v1054, %v1052
        %v1079 = vpack.c.b16 %v1057, %v1055
        %v1080 = vpack.c.b16 %v1058, %v1056
        %v1081 = vpack.c.b16 %v1061, %v1059
        %v1082 = vpack.c.b16 %v1062, %v1060
        %v1083 = vpack.c.b16 %v1065, %v1063
        %v1084 = vpack.c.b16 %v1066, %v1064
        %v1085 = vpack.c.b16 %v1069, %v1067
        %v1086 = vpack.c.b16 %v1070, %v1068
        %1103 = vmatpush.bf16.msra.mxu0 %v1085
        %1104 = vmatpush.bf16.msra.mxu0 %v1083
        %1105 = vmatpush.bf16.msra.mxu0 %v1081
        %1106 = vmatpush.bf16.msra.mxu0 %v1079
        %1107 = vmatpush.bf16.msra.mxu0 %v1077
        %1108 = vmatpush.bf16.msra.mxu0 %v1075
        %1109 = vmatpush.bf16.msra.mxu0 %v1073
        %1110 = vmatpush.bf16.msra.mxu0 %v1071
        %1111 = vmatmul.bf16.gmra.mxu0 %v1022
        %v1112 = vpop.f32.mrf.mxu0
        %v1113 = vadd.f32 0.0, %v1112
        %v1114 = vpop.f32.mrf.mxu0
        %1115 = vdwg.mxu0
        %1116 = vmatpush.bf16.msra.mxu0 %v1086
        %1117 = vmatpush.bf16.msra.mxu0 %v1084
        %1118 = vmatpush.bf16.msra.mxu0 %v1082
        %1119 = vmatpush.bf16.msra.mxu0 %v1080
        %1120 = vmatpush.bf16.msra.mxu0 %v1078
        %1121 = vmatpush.bf16.msra.mxu0 %v1076
        %1122 = vmatpush.bf16.msra.mxu0 %v1074
        %1123 = vmatpush.bf16.msra.mxu0 %v1072
        %1124 = vmatmul.bf16.gmra.mxu0 %v1022
        %v1125 = vpop.f32.mrf.mxu0
        %v1126 = vadd.f32 0.0, %v1125
        %v1127 = vpop.f32.mrf.mxu0
        %1128 = vdwg.mxu0
        %v1129 = vxor.u32 %v1113, 2147483648
        %v1130 = vxor.u32 %v1126, 2147483648
        %v1131 = vmul.f32 %v1129, 1.442695
        %v1132 = vpow.pop %v1131
        %v1133 = vmul.f32 %v1130, 1.442695
        %v1134 = vpow.pop %v1133
        %v1135 = vadd.f32 %v1132, 1.0
        %v1136 = vadd.f32 %v1134, 1.0
        %v1137 = vrcp.pop %v1135
        %v1138 = vmul.f32 %v1135, %v1137
        %v1139 = vsub.f32 1.0, %v1138
        %v1140 = vmul.f32 %v1137, %v1139
        %v1141 = vadd.f32 %v1137, %v1140
        %vm1142 = vweird.f32 %v1135
        %vm1143 = vweird.f32 %v1137
        %vm1144 = vmor %vm1142, %vm1143
        %v1145 = vsel %vm1144, %v1137, %v1141
        %v1146 = vand.u32 2147483647, %v1135
        %vm1147 = vcmp.eq.f32.partialorder %v1146, 8.507059e+37
        %v1148 = vand.u32 %v1135, 2147483648
        %v1149 = vor.u32 1.1754944e-38, %v1148
        %v1150 = vsel %vm1147, %v1149, %v1145
        %v1151 = vmul.f32 1.0, %v1150
        %v1152 = vrcp.pop %v1136
        %v1153 = vmul.f32 %v1136, %v1152
        %v1154 = vsub.f32 1.0, %v1153
        %v1155 = vmul.f32 %v1152, %v1154
        %v1156 = vadd.f32 %v1152, %v1155
        %vm1157 = vweird.f32 %v1136
        %vm1158 = vweird.f32 %v1152
        %vm1159 = vmor %vm1157, %vm1158
        %v1160 = vsel %vm1159, %v1152, %v1156
        %v1161 = vand.u32 2147483647, %v1136
        %vm1162 = vcmp.eq.f32.partialorder %v1161, 8.507059e+37
        %v1163 = vand.u32 %v1136, 2147483648
        %v1164 = vor.u32 1.1754944e-38, %v1163
        %v1165 = vsel %vm1162, %v1164, %v1160
        %v1166 = vmul.f32 1.0, %v1165
        %1167 = vrot.lane.b32.xlu0 %v1071, 17
        %v1168 = vpop.permute.xlu0 %1167
        %1169 = vrot.lane.b32.xlu0 %v1072, 17
        %v1170 = vpop.permute.xlu0 %1169
        %1171 = vrot.lane.b32.xlu0 %v1073, 17
        %v1172 = vpop.permute.xlu0 %1171
        %1173 = vrot.lane.b32.xlu0 %v1074, 17
        %v1174 = vpop.permute.xlu0 %1173
        %1175 = vrot.lane.b32.xlu0 %v1075, 17
        %v1176 = vpop.permute.xlu0 %1175
        %1177 = vrot.lane.b32.xlu0 %v1076, 17
        %v1178 = vpop.permute.xlu0 %1177
        %1179 = vrot.lane.b32.xlu0 %v1077, 17
        %v1180 = vpop.permute.xlu0 %1179
        %1181 = vrot.lane.b32.xlu0 %v1078, 17
        %v1182 = vpop.permute.xlu0 %1181
        %1183 = vrot.lane.b32.xlu0 %v1079, 17
        %v1184 = vpop.permute.xlu0 %1183
        %1185 = vrot.lane.b32.xlu0 %v1080, 17
        %v1186 = vpop.permute.xlu0 %1185
        %1187 = vrot.lane.b32.xlu0 %v1081, 17
        %v1188 = vpop.permute.xlu0 %1187
        %1189 = vrot.lane.b32.xlu0 %v1082, 17
        %v1190 = vpop.permute.xlu0 %1189
        %1191 = vrot.lane.b32.xlu0 %v1083, 17
        %v1192 = vpop.permute.xlu0 %1191
        %1193 = vrot.lane.b32.xlu0 %v1084, 17
        %v1194 = vpop.permute.xlu0 %1193
        %1195 = vrot.lane.b32.xlu0 %v1085, 17
        %v1196 = vpop.permute.xlu0 %1195
        %1197 = vrot.lane.b32.xlu0 %v1086, 17
        %v1198 = vpop.permute.xlu0 %1197
        %v1199 = vsel %vm478, %v1168, %v1170
        %v1200 = vsel %vm478, %v1172, %v1174
        %v1201 = vsel %vm478, %v1176, %v1178
        %v1202 = vsel %vm478, %v1180, %v1182
        %v1203 = vsel %vm478, %v1184, %v1186
        %v1204 = vsel %vm478, %v1188, %v1190
        %v1205 = vsel %vm478, %v1192, %v1194
        %v1206 = vsel %vm478, %v1196, %v1198
        %v1216 = vsel %vm481, 0, %v1168
        %v1219 = vsel %vm481, 0, %v1172
        %v1222 = vsel %vm481, 0, %v1176
        %v1225 = vsel %vm481, 0, %v1180
        %v1228 = vsel %vm481, 0, %v1184
        %v1231 = vsel %vm481, 0, %v1188
        %v1234 = vsel %vm481, 0, %v1192
        %v1237 = vsel %vm481, 0, %v1196
        %v1239 = vunpack.c.l.bf16 %v1216
        %v1240 = vunpack.c.l.bf16 %v1199
        %v1241 = vunpack.c.h.bf16 %v1216
        %v1242 = vunpack.c.h.bf16 %v1199
        %v1243 = vunpack.c.l.bf16 %v1219
        %v1244 = vunpack.c.l.bf16 %v1200
        %v1245 = vunpack.c.h.bf16 %v1219
        %v1246 = vunpack.c.h.bf16 %v1200
        %v1247 = vunpack.c.l.bf16 %v1222
        %v1248 = vunpack.c.l.bf16 %v1201
        %v1249 = vunpack.c.h.bf16 %v1222
        %v1250 = vunpack.c.h.bf16 %v1201
        %v1251 = vunpack.c.l.bf16 %v1225
        %v1252 = vunpack.c.l.bf16 %v1202
        %v1253 = vunpack.c.h.bf16 %v1225
        %v1254 = vunpack.c.h.bf16 %v1202
        %v1255 = vunpack.c.l.bf16 %v1228
        %v1256 = vunpack.c.l.bf16 %v1203
        %v1257 = vunpack.c.h.bf16 %v1228
        %v1258 = vunpack.c.h.bf16 %v1203
        %v1259 = vunpack.c.l.bf16 %v1231
        %v1260 = vunpack.c.l.bf16 %v1204
        %v1261 = vunpack.c.h.bf16 %v1231
        %v1262 = vunpack.c.h.bf16 %v1204
        %v1263 = vunpack.c.l.bf16 %v1234
        %v1264 = vunpack.c.l.bf16 %v1205
        %v1265 = vunpack.c.h.bf16 %v1234
        %v1266 = vunpack.c.h.bf16 %v1205
        %v1267 = vunpack.c.l.bf16 %v1237
        %v1268 = vunpack.c.l.bf16 %v1206
        %v1269 = vunpack.c.h.bf16 %v1237
        %v1270 = vunpack.c.h.bf16 %v1206
        %v1271 = vmul.f32 %v1239, %v488
        %v1272 = vmul.f32 %v1240, %v489
        %v1273 = vmul.f32 %v1241, %v488
        %v1274 = vmul.f32 %v1242, %v489
        %v1275 = vmul.f32 %v1243, %v488
        %v1276 = vmul.f32 %v1244, %v489
        %v1277 = vmul.f32 %v1245, %v488
        %v1278 = vmul.f32 %v1246, %v489
        %v1279 = vmul.f32 %v1247, %v488
        %v1280 = vmul.f32 %v1248, %v489
        %v1281 = vmul.f32 %v1249, %v488
        %v1282 = vmul.f32 %v1250, %v489
        %v1283 = vmul.f32 %v1251, %v488
        %v1284 = vmul.f32 %v1252, %v489
        %v1285 = vmul.f32 %v1253, %v488
        %v1286 = vmul.f32 %v1254, %v489
        %v1287 = vmul.f32 %v1255, %v488
        %v1288 = vmul.f32 %v1256, %v489
        %v1289 = vmul.f32 %v1257, %v488
        %v1290 = vmul.f32 %v1258, %v489
        %v1291 = vmul.f32 %v1259, %v488
        %v1292 = vmul.f32 %v1260, %v489
        %v1293 = vmul.f32 %v1261, %v488
        %v1294 = vmul.f32 %v1262, %v489
        %v1295 = vmul.f32 %v1263, %v488
        %v1296 = vmul.f32 %v1264, %v489
        %v1297 = vmul.f32 %v1265, %v488
        %v1298 = vmul.f32 %v1266, %v489
        %v1299 = vmul.f32 %v1267, %v488
        %v1300 = vmul.f32 %v1268, %v489
        %v1301 = vmul.f32 %v1269, %v488
        %v1302 = vmul.f32 %v1270, %v489
        %v1303 = vpack.c.bf16 %v1272, %v1271
        %v1304 = vpack.c.bf16 %v1274, %v1273
        %v1305 = vpack.c.bf16 %v1276, %v1275
        %v1306 = vpack.c.bf16 %v1278, %v1277
        %v1307 = vpack.c.bf16 %v1280, %v1279
        %v1308 = vpack.c.bf16 %v1282, %v1281
        %v1309 = vpack.c.bf16 %v1284, %v1283
        %v1310 = vpack.c.bf16 %v1286, %v1285
        %v1311 = vpack.c.bf16 %v1288, %v1287
        %v1312 = vpack.c.bf16 %v1290, %v1289
        %v1313 = vpack.c.bf16 %v1292, %v1291
        %v1314 = vpack.c.bf16 %v1294, %v1293
        %v1315 = vpack.c.bf16 %v1296, %v1295
        %v1316 = vpack.c.bf16 %v1298, %v1297
        %v1317 = vpack.c.bf16 %v1300, %v1299
        %v1318 = vpack.c.bf16 %v1302, %v1301
        %1319 = vrot.lane.b32.xlu0 %v1071, 16
        %v1320 = vpop.permute.xlu0 %1319
        %1321 = vrot.lane.b32.xlu0 %v1072, 16
        %v1322 = vpop.permute.xlu0 %1321
        %1323 = vrot.lane.b32.xlu0 %v1073, 16
        %v1324 = vpop.permute.xlu0 %1323
        %1325 = vrot.lane.b32.xlu0 %v1074, 16
        %v1326 = vpop.permute.xlu0 %1325
        %1327 = vrot.lane.b32.xlu0 %v1075, 16
        %v1328 = vpop.permute.xlu0 %1327
        %1329 = vrot.lane.b32.xlu0 %v1076, 16
        %v1330 = vpop.permute.xlu0 %1329
        %1331 = vrot.lane.b32.xlu0 %v1077, 16
        %v1332 = vpop.permute.xlu0 %1331
        %1333 = vrot.lane.b32.xlu0 %v1078, 16
        %v1334 = vpop.permute.xlu0 %1333
        %1335 = vrot.lane.b32.xlu0 %v1079, 16
        %v1336 = vpop.permute.xlu0 %1335
        %1337 = vrot.lane.b32.xlu0 %v1080, 16
        %v1338 = vpop.permute.xlu0 %1337
        %1339 = vrot.lane.b32.xlu0 %v1081, 16
        %v1340 = vpop.permute.xlu0 %1339
        %1341 = vrot.lane.b32.xlu0 %v1082, 16
        %v1342 = vpop.permute.xlu0 %1341
        %1343 = vrot.lane.b32.xlu0 %v1083, 16
        %v1344 = vpop.permute.xlu0 %1343
        %1345 = vrot.lane.b32.xlu0 %v1084, 16
        %v1346 = vpop.permute.xlu0 %1345
        %1347 = vrot.lane.b32.xlu0 %v1085, 16
        %v1348 = vpop.permute.xlu0 %1347
        %1349 = vrot.lane.b32.xlu0 %v1086, 16
        %v1350 = vpop.permute.xlu0 %1349
        %v1351 = vsel %vm502, %v1320, %v1322
        %v1352 = vsel %vm502, %v1324, %v1326
        %v1353 = vsel %vm502, %v1328, %v1330
        %v1354 = vsel %vm502, %v1332, %v1334
        %v1355 = vsel %vm502, %v1336, %v1338
        %v1356 = vsel %vm502, %v1340, %v1342
        %v1357 = vsel %vm502, %v1344, %v1346
        %v1358 = vsel %vm502, %v1348, %v1350
        %v1368 = vsel %vm504, 0, %v1320
        %v1371 = vsel %vm504, 0, %v1324
        %v1374 = vsel %vm504, 0, %v1328
        %v1377 = vsel %vm504, 0, %v1332
        %v1380 = vsel %vm504, 0, %v1336
        %v1383 = vsel %vm504, 0, %v1340
        %v1386 = vsel %vm504, 0, %v1344
        %v1389 = vsel %vm504, 0, %v1348
        %v1407 = vunpack.c.l.b16 %v1303
        %v1408 = vunpack.c.h.b16 %v1303
        %v1409 = vunpack.c.l.b16 %v1304
        %v1410 = vunpack.c.h.b16 %v1304
        %v1411 = vunpack.c.l.b16 %v1305
        %v1412 = vunpack.c.h.b16 %v1305
        %v1413 = vunpack.c.l.b16 %v1306
        %v1414 = vunpack.c.h.b16 %v1306
        %v1415 = vunpack.c.l.b16 %v1307
        %v1416 = vunpack.c.h.b16 %v1307
        %v1417 = vunpack.c.l.b16 %v1308
        %v1418 = vunpack.c.h.b16 %v1308
        %v1419 = vunpack.c.l.b16 %v1309
        %v1420 = vunpack.c.h.b16 %v1309
        %v1421 = vunpack.c.l.b16 %v1310
        %v1422 = vunpack.c.h.b16 %v1310
        %v1423 = vunpack.c.l.b16 %v1311
        %v1424 = vunpack.c.h.b16 %v1311
        %v1425 = vunpack.c.l.b16 %v1312
        %v1426 = vunpack.c.h.b16 %v1312
        %v1427 = vunpack.c.l.b16 %v1313
        %v1428 = vunpack.c.h.b16 %v1313
        %v1429 = vunpack.c.l.b16 %v1314
        %v1430 = vunpack.c.h.b16 %v1314
        %v1431 = vunpack.c.l.b16 %v1315
        %v1432 = vunpack.c.h.b16 %v1315
        %v1433 = vunpack.c.l.b16 %v1316
        %v1434 = vunpack.c.h.b16 %v1316
        %v1435 = vunpack.c.l.b16 %v1317
        %v1436 = vunpack.c.h.b16 %v1317
        %v1437 = vunpack.c.l.b16 %v1318
        %v1438 = vunpack.c.h.b16 %v1318
        %v1439 = vpack.c.b16 %v1409, %v1407
        %v1440 = vpack.c.b16 %v1410, %v1408
        %v1441 = vpack.c.b16 %v1413, %v1411
        %v1442 = vpack.c.b16 %v1414, %v1412
        %v1443 = vpack.c.b16 %v1417, %v1415
        %v1444 = vpack.c.b16 %v1418, %v1416
        %v1445 = vpack.c.b16 %v1421, %v1419
        %v1446 = vpack.c.b16 %v1422, %v1420
        %v1447 = vpack.c.b16 %v1425, %v1423
        %v1448 = vpack.c.b16 %v1426, %v1424
        %v1449 = vpack.c.b16 %v1429, %v1427
        %v1450 = vpack.c.b16 %v1430, %v1428
        %v1451 = vpack.c.b16 %v1433, %v1431
        %v1452 = vpack.c.b16 %v1434, %v1432
        %v1453 = vpack.c.b16 %v1437, %v1435
        %v1454 = vpack.c.b16 %v1438, %v1436
        %v1471 = vld [vmem:[#allocation2] sm:$0xff]
        %v1472 = vld [vmem:[#allocation2 + $0x24] sm:$0xff]
        %v1473 = vld [vmem:[#allocation2 + $0x48] sm:$0xff]
        %v1474 = vld [vmem:[#allocation2 + $0x6c] sm:$0xff]
        %v1475 = vld [vmem:[#allocation2 + $0x90] sm:$0xff]
        %v1476 = vld [vmem:[#allocation2 + $0xb4] sm:$0xff]
        %v1477 = vld [vmem:[#allocation2 + $0xd8] sm:$0xff]
        %v1478 = vld [vmem:[#allocation2 + $0xfc] sm:$0xff]
        %v1479 = vld [vmem:[#allocation2 + $0x120] sm:$0xff]
        %v1480 = vld [vmem:[#allocation2 + $0x144] sm:$0xff]
        %v1481 = vld [vmem:[#allocation2 + $0x168] sm:$0xff]
        %v1482 = vld [vmem:[#allocation2 + $0x18c] sm:$0xff]
        %v1483 = vld [vmem:[#allocation2 + $0x1b0] sm:$0xff]
        %v1484 = vld [vmem:[#allocation2 + $0x1d4] sm:$0xff]
        %v1485 = vld [vmem:[#allocation2 + $0x1f8] sm:$0xff]
        %v1486 = vld [vmem:[#allocation2 + $0x21c] sm:$0xff]
        %1487 = vrot.lane.b32.xlu0 %v1071, 15
        %v1488 = vpop.permute.xlu0 %1487
        %1489 = vrot.lane.b32.xlu0 %v1072, 15
        %v1490 = vpop.permute.xlu0 %1489
        %1491 = vrot.lane.b32.xlu0 %v1073, 15
        %v1492 = vpop.permute.xlu0 %1491
        %1493 = vrot.lane.b32.xlu0 %v1074, 15
        %v1494 = vpop.permute.xlu0 %1493
        %1495 = vrot.lane.b32.xlu0 %v1075, 15
        %v1496 = vpop.permute.xlu0 %1495
        %1497 = vrot.lane.b32.xlu0 %v1076, 15
        %v1498 = vpop.permute.xlu0 %1497
        %1499 = vrot.lane.b32.xlu0 %v1077, 15
        %v1500 = vpop.permute.xlu0 %1499
        %1501 = vrot.lane.b32.xlu0 %v1078, 15
        %v1502 = vpop.permute.xlu0 %1501
        %1503 = vrot.lane.b32.xlu0 %v1079, 15
        %v1504 = vpop.permute.xlu0 %1503
        %1505 = vrot.lane.b32.xlu0 %v1080, 15
        %v1506 = vpop.permute.xlu0 %1505
        %1507 = vrot.lane.b32.xlu0 %v1081, 15
        %v1508 = vpop.permute.xlu0 %1507
        %1509 = vrot.lane.b32.xlu0 %v1082, 15
        %v1510 = vpop.permute.xlu0 %1509
        %1511 = vrot.lane.b32.xlu0 %v1083, 15
        %v1512 = vpop.permute.xlu0 %1511
        %1513 = vrot.lane.b32.xlu0 %v1084, 15
        %v1514 = vpop.permute.xlu0 %1513
        %1515 = vrot.lane.b32.xlu0 %v1085, 15
        %v1516 = vpop.permute.xlu0 %1515
        %1517 = vrot.lane.b32.xlu0 %v1086, 15
        %v1518 = vpop.permute.xlu0 %1517
        %v1519 = vsel %vm516, %v1488, %v1490
        %v1520 = vsel %vm516, %v1492, %v1494
        %v1521 = vsel %vm516, %v1496, %v1498
        %v1522 = vsel %vm516, %v1500, %v1502
        %v1523 = vsel %vm516, %v1504, %v1506
        %v1524 = vsel %vm516, %v1508, %v1510
        %v1525 = vsel %vm516, %v1512, %v1514
        %v1526 = vsel %vm516, %v1516, %v1518
        %v1536 = vsel %vm519, 0, %v1488
        %v1539 = vsel %vm519, 0, %v1492
        %v1542 = vsel %vm519, 0, %v1496
        %v1545 = vsel %vm519, 0, %v1500
        %v1548 = vsel %vm519, 0, %v1504
        %v1551 = vsel %vm519, 0, %v1508
        %v1554 = vsel %vm519, 0, %v1512
        %v1557 = vsel %vm519, 0, %v1516
        %v1559 = vunpack.c.l.bf16 %v1536
        %v1560 = vunpack.c.l.bf16 %v1519
        %v1561 = vunpack.c.h.bf16 %v1536
        %v1562 = vunpack.c.h.bf16 %v1519
        %v1563 = vunpack.c.l.bf16 %v1539
        %v1564 = vunpack.c.l.bf16 %v1520
        %v1565 = vunpack.c.h.bf16 %v1539
        %v1566 = vunpack.c.h.bf16 %v1520
        %v1567 = vunpack.c.l.bf16 %v1542
        %v1568 = vunpack.c.l.bf16 %v1521
        %v1569 = vunpack.c.h.bf16 %v1542
        %v1570 = vunpack.c.h.bf16 %v1521
        %v1571 = vunpack.c.l.bf16 %v1545
        %v1572 = vunpack.c.l.bf16 %v1522
        %v1573 = vunpack.c.h.bf16 %v1545
        %v1574 = vunpack.c.h.bf16 %v1522
        %v1575 = vunpack.c.l.bf16 %v1548
        %v1576 = vunpack.c.l.bf16 %v1523
        %v1577 = vunpack.c.h.bf16 %v1548
        %v1578 = vunpack.c.h.bf16 %v1523
        %v1579 = vunpack.c.l.bf16 %v1551
        %v1580 = vunpack.c.l.bf16 %v1524
        %v1581 = vunpack.c.h.bf16 %v1551
        %v1582 = vunpack.c.h.bf16 %v1524
        %v1583 = vunpack.c.l.bf16 %v1554
        %v1584 = vunpack.c.l.bf16 %v1525
        %v1585 = vunpack.c.h.bf16 %v1554
        %v1586 = vunpack.c.h.bf16 %v1525
        %v1587 = vunpack.c.l.bf16 %v1557
        %v1588 = vunpack.c.l.bf16 %v1526
        %v1589 = vunpack.c.h.bf16 %v1557
        %v1590 = vunpack.c.h.bf16 %v1526
        %v1591 = vmul.f32 %v1559, %v525
        %v1592 = vmul.f32 %v1560, %v526
        %v1593 = vmul.f32 %v1561, %v525
        %v1594 = vmul.f32 %v1562, %v526
        %v1595 = vmul.f32 %v1563, %v525
        %v1596 = vmul.f32 %v1564, %v526
        %v1597 = vmul.f32 %v1565, %v525
        %v1598 = vmul.f32 %v1566, %v526
        %v1599 = vmul.f32 %v1567, %v525
        %v1600 = vmul.f32 %v1568, %v526
        %v1601 = vmul.f32 %v1569, %v525
        %v1602 = vmul.f32 %v1570, %v526
        %v1603 = vmul.f32 %v1571, %v525
        %v1604 = vmul.f32 %v1572, %v526
        %v1605 = vmul.f32 %v1573, %v525
        %v1606 = vmul.f32 %v1574, %v526
        %v1607 = vmul.f32 %v1575, %v525
        %v1608 = vmul.f32 %v1576, %v526
        %v1609 = vmul.f32 %v1577, %v525
        %v1610 = vmul.f32 %v1578, %v526
        %v1611 = vmul.f32 %v1579, %v525
        %v1612 = vmul.f32 %v1580, %v526
        %v1613 = vmul.f32 %v1581, %v525
        %v1614 = vmul.f32 %v1582, %v526
        %v1615 = vmul.f32 %v1583, %v525
        %v1616 = vmul.f32 %v1584, %v526
        %v1617 = vmul.f32 %v1585, %v525
        %v1618 = vmul.f32 %v1586, %v526
        %v1619 = vmul.f32 %v1587, %v525
        %v1620 = vmul.f32 %v1588, %v526
        %v1621 = vmul.f32 %v1589, %v525
        %v1622 = vmul.f32 %v1590, %v526
        %v1623 = vpack.c.bf16 %v1592, %v1591
        %v1624 = vpack.c.bf16 %v1594, %v1593
        %v1625 = vpack.c.bf16 %v1596, %v1595
        %v1626 = vpack.c.bf16 %v1598, %v1597
        %v1627 = vpack.c.bf16 %v1600, %v1599
        %v1628 = vpack.c.bf16 %v1602, %v1601
        %v1629 = vpack.c.bf16 %v1604, %v1603
        %v1630 = vpack.c.bf16 %v1606, %v1605
        %v1631 = vpack.c.bf16 %v1608, %v1607
        %v1632 = vpack.c.bf16 %v1610, %v1609
        %v1633 = vpack.c.bf16 %v1612, %v1611
        %v1634 = vpack.c.bf16 %v1614, %v1613
        %v1635 = vpack.c.bf16 %v1616, %v1615
        %v1636 = vpack.c.bf16 %v1618, %v1617
        %v1637 = vpack.c.bf16 %v1620, %v1619
        %v1638 = vpack.c.bf16 %v1622, %v1621
        %1639 = vrot.lane.b32.xlu0 %v1071, 1
        %v1640 = vpop.permute.xlu0 %1639
        %1641 = vrot.lane.b32.xlu0 %v1072, 1
        %v1642 = vpop.permute.xlu0 %1641
        %1643 = vrot.lane.b32.xlu0 %v1073, 1
        %v1644 = vpop.permute.xlu0 %1643
        %1645 = vrot.lane.b32.xlu0 %v1074, 1
        %v1646 = vpop.permute.xlu0 %1645
        %1647 = vrot.lane.b32.xlu0 %v1075, 1
        %v1648 = vpop.permute.xlu0 %1647
        %1649 = vrot.lane.b32.xlu0 %v1076, 1
        %v1650 = vpop.permute.xlu0 %1649
        %1651 = vrot.lane.b32.xlu0 %v1077, 1
        %v1652 = vpop.permute.xlu0 %1651
        %1653 = vrot.lane.b32.xlu0 %v1078, 1
        %v1654 = vpop.permute.xlu0 %1653
        %1655 = vrot.lane.b32.xlu0 %v1079, 1
        %v1656 = vpop.permute.xlu0 %1655
        %1657 = vrot.lane.b32.xlu0 %v1080, 1
        %v1658 = vpop.permute.xlu0 %1657
        %1659 = vrot.lane.b32.xlu0 %v1081, 1
        %v1660 = vpop.permute.xlu0 %1659
        %1661 = vrot.lane.b32.xlu0 %v1082, 1
        %v1662 = vpop.permute.xlu0 %1661
        %1663 = vrot.lane.b32.xlu0 %v1083, 1
        %v1664 = vpop.permute.xlu0 %1663
        %1665 = vrot.lane.b32.xlu0 %v1084, 1
        %v1666 = vpop.permute.xlu0 %1665
        %1667 = vrot.lane.b32.xlu0 %v1085, 1
        %v1668 = vpop.permute.xlu0 %1667
        %1669 = vrot.lane.b32.xlu0 %v1086, 1
        %v1670 = vpop.permute.xlu0 %1669
        %v1671 = vsel %vm539, %v1640, %v1642
        %v1672 = vsel %vm539, %v1644, %v1646
        %v1673 = vsel %vm539, %v1648, %v1650
        %v1674 = vsel %vm539, %v1652, %v1654
        %v1675 = vsel %vm539, %v1656, %v1658
        %v1676 = vsel %vm539, %v1660, %v1662
        %v1677 = vsel %vm539, %v1664, %v1666
        %v1678 = vsel %vm539, %v1668, %v1670
        %v1688 = vsel %vm542, 0, %v1640
        %v1691 = vsel %vm542, 0, %v1644
        %v1694 = vsel %vm542, 0, %v1648
        %v1697 = vsel %vm542, 0, %v1652
        %v1700 = vsel %vm542, 0, %v1656
        %v1703 = vsel %vm542, 0, %v1660
        %v1706 = vsel %vm542, 0, %v1664
        %v1709 = vsel %vm542, 0, %v1668
        %v1711 = vunpack.c.l.bf16 %v1688
        %v1712 = vunpack.c.l.bf16 %v1671
        %v1713 = vunpack.c.h.bf16 %v1688
        %v1714 = vunpack.c.h.bf16 %v1671
        %v1715 = vunpack.c.l.bf16 %v1691
        %v1716 = vunpack.c.l.bf16 %v1672
        %v1717 = vunpack.c.h.bf16 %v1691
        %v1718 = vunpack.c.h.bf16 %v1672
        %v1719 = vunpack.c.l.bf16 %v1694
        %v1720 = vunpack.c.l.bf16 %v1673
        %v1721 = vunpack.c.h.bf16 %v1694
        %v1722 = vunpack.c.h.bf16 %v1673
        %v1723 = vunpack.c.l.bf16 %v1697
        %v1724 = vunpack.c.l.bf16 %v1674
        %v1725 = vunpack.c.h.bf16 %v1697
        %v1726 = vunpack.c.h.bf16 %v1674
        %v1727 = vunpack.c.l.bf16 %v1700
        %v1728 = vunpack.c.l.bf16 %v1675
        %v1729 = vunpack.c.h.bf16 %v1700
        %v1730 = vunpack.c.h.bf16 %v1675
        %v1731 = vunpack.c.l.bf16 %v1703
        %v1732 = vunpack.c.l.bf16 %v1676
        %v1733 = vunpack.c.h.bf16 %v1703
        %v1734 = vunpack.c.h.bf16 %v1676
        %v1735 = vunpack.c.l.bf16 %v1706
        %v1736 = vunpack.c.l.bf16 %v1677
        %v1737 = vunpack.c.h.bf16 %v1706
        %v1738 = vunpack.c.h.bf16 %v1677
        %v1739 = vunpack.c.l.bf16 %v1709
        %v1740 = vunpack.c.l.bf16 %v1678
        %v1741 = vunpack.c.h.bf16 %v1709
        %v1742 = vunpack.c.h.bf16 %v1678
        %v1743 = vmul.f32 %v1711, %v488
        %v1744 = vmul.f32 %v1712, %v489
        %v1745 = vmul.f32 %v1713, %v488
        %v1746 = vmul.f32 %v1714, %v489
        %v1747 = vmul.f32 %v1715, %v488
        %v1748 = vmul.f32 %v1716, %v489
        %v1749 = vmul.f32 %v1717, %v488
        %v1750 = vmul.f32 %v1718, %v489
        %v1751 = vmul.f32 %v1719, %v488
        %v1752 = vmul.f32 %v1720, %v489
        %v1753 = vmul.f32 %v1721, %v488
        %v1754 = vmul.f32 %v1722, %v489
        %v1755 = vmul.f32 %v1723, %v488
        %v1756 = vmul.f32 %v1724, %v489
        %v1757 = vmul.f32 %v1725, %v488
        %v1758 = vmul.f32 %v1726, %v489
        %v1759 = vmul.f32 %v1727, %v488
        %v1760 = vmul.f32 %v1728, %v489
        %v1761 = vmul.f32 %v1729, %v488
        %v1762 = vmul.f32 %v1730, %v489
        %v1763 = vmul.f32 %v1731, %v488
        %v1764 = vmul.f32 %v1732, %v489
        %v1765 = vmul.f32 %v1733, %v488
        %v1766 = vmul.f32 %v1734, %v489
        %v1767 = vmul.f32 %v1735, %v488
        %v1768 = vmul.f32 %v1736, %v489
        %v1769 = vmul.f32 %v1737, %v488
        %v1770 = vmul.f32 %v1738, %v489
        %v1771 = vmul.f32 %v1739, %v488
        %v1772 = vmul.f32 %v1740, %v489
        %v1773 = vmul.f32 %v1741, %v488
        %v1774 = vmul.f32 %v1742, %v489
        %v1775 = vpack.c.bf16 %v1744, %v1743
        %v1776 = vpack.c.bf16 %v1746, %v1745
        %v1777 = vpack.c.bf16 %v1748, %v1747
        %v1778 = vpack.c.bf16 %v1750, %v1749
        %v1779 = vpack.c.bf16 %v1752, %v1751
        %v1780 = vpack.c.bf16 %v1754, %v1753
        %v1781 = vpack.c.bf16 %v1756, %v1755
        %v1782 = vpack.c.bf16 %v1758, %v1757
        %v1783 = vpack.c.bf16 %v1760, %v1759
        %v1784 = vpack.c.bf16 %v1762, %v1761
        %v1785 = vpack.c.bf16 %v1764, %v1763
        %v1786 = vpack.c.bf16 %v1766, %v1765
        %v1787 = vpack.c.bf16 %v1768, %v1767
        %v1788 = vpack.c.bf16 %v1770, %v1769
        %v1789 = vpack.c.bf16 %v1772, %v1771
        %v1790 = vpack.c.bf16 %v1774, %v1773
        %v1807 = vunpack.c.l.b16 %v1623
        %v1808 = vunpack.c.h.b16 %v1623
        %v1809 = vunpack.c.l.b16 %v1624
        %v1810 = vunpack.c.h.b16 %v1624
        %v1811 = vunpack.c.l.b16 %v1625
        %v1812 = vunpack.c.h.b16 %v1625
        %v1813 = vunpack.c.l.b16 %v1626
        %v1814 = vunpack.c.h.b16 %v1626
        %v1815 = vunpack.c.l.b16 %v1627
        %v1816 = vunpack.c.h.b16 %v1627
        %v1817 = vunpack.c.l.b16 %v1628
        %v1818 = vunpack.c.h.b16 %v1628
        %v1819 = vunpack.c.l.b16 %v1629
        %v1820 = vunpack.c.h.b16 %v1629
        %v1821 = vunpack.c.l.b16 %v1630
        %v1822 = vunpack.c.h.b16 %v1630
        %v1823 = vunpack.c.l.b16 %v1631
        %v1824 = vunpack.c.h.b16 %v1631
        %v1825 = vunpack.c.l.b16 %v1632
        %v1826 = vunpack.c.h.b16 %v1632
        %v1827 = vunpack.c.l.b16 %v1633
        %v1828 = vunpack.c.h.b16 %v1633
        %v1829 = vunpack.c.l.b16 %v1634
        %v1830 = vunpack.c.h.b16 %v1634
        %v1831 = vunpack.c.l.b16 %v1635
        %v1832 = vunpack.c.h.b16 %v1635
        %v1833 = vunpack.c.l.b16 %v1636
        %v1834 = vunpack.c.h.b16 %v1636
        %v1835 = vunpack.c.l.b16 %v1637
        %v1836 = vunpack.c.h.b16 %v1637
        %v1837 = vunpack.c.l.b16 %v1638
        %v1838 = vunpack.c.h.b16 %v1638
        %v1839 = vpack.c.b16 %v1809, %v1807
        %v1840 = vpack.c.b16 %v1810, %v1808
        %v1841 = vpack.c.b16 %v1813, %v1811
        %v1842 = vpack.c.b16 %v1814, %v1812
        %v1843 = vpack.c.b16 %v1817, %v1815
        %v1844 = vpack.c.b16 %v1818, %v1816
        %v1845 = vpack.c.b16 %v1821, %v1819
        %v1846 = vpack.c.b16 %v1822, %v1820
        %v1847 = vpack.c.b16 %v1825, %v1823
        %v1848 = vpack.c.b16 %v1826, %v1824
        %v1849 = vpack.c.b16 %v1829, %v1827
        %v1850 = vpack.c.b16 %v1830, %v1828
        %v1851 = vpack.c.b16 %v1833, %v1831
        %v1852 = vpack.c.b16 %v1834, %v1832
        %v1853 = vpack.c.b16 %v1837, %v1835
        %v1854 = vpack.c.b16 %v1838, %v1836
        %v1887 = vunpack.c.l.b16 %v1775
        %v1888 = vunpack.c.h.b16 %v1775
        %v1889 = vunpack.c.l.b16 %v1776
        %v1890 = vunpack.c.h.b16 %v1776
        %v1891 = vunpack.c.l.b16 %v1777
        %v1892 = vunpack.c.h.b16 %v1777
        %v1893 = vunpack.c.l.b16 %v1778
        %v1894 = vunpack.c.h.b16 %v1778
        %v1895 = vunpack.c.l.b16 %v1779
        %v1896 = vunpack.c.h.b16 %v1779
        %v1897 = vunpack.c.l.b16 %v1780
        %v1898 = vunpack.c.h.b16 %v1780
        %v1899 = vunpack.c.l.b16 %v1781
        %v1900 = vunpack.c.h.b16 %v1781
        %v1901 = vunpack.c.l.b16 %v1782
        %v1902 = vunpack.c.h.b16 %v1782
        %v1903 = vunpack.c.l.b16 %v1783
        %v1904 = vunpack.c.h.b16 %v1783
        %v1905 = vunpack.c.l.b16 %v1784
        %v1906 = vunpack.c.h.b16 %v1784
        %v1907 = vunpack.c.l.b16 %v1785
        %v1908 = vunpack.c.h.b16 %v1785
        %v1909 = vunpack.c.l.b16 %v1786
        %v1910 = vunpack.c.h.b16 %v1786
        %v1911 = vunpack.c.l.b16 %v1787
        %v1912 = vunpack.c.h.b16 %v1787
        %v1913 = vunpack.c.l.b16 %v1788
        %v1914 = vunpack.c.h.b16 %v1788
        %v1915 = vunpack.c.l.b16 %v1789
        %v1916 = vunpack.c.h.b16 %v1789
        %v1917 = vunpack.c.l.b16 %v1790
        %v1918 = vunpack.c.h.b16 %v1790
        %v1919 = vpack.c.b16 %v1889, %v1887
        %v1920 = vpack.c.b16 %v1890, %v1888
        %v1921 = vpack.c.b16 %v1893, %v1891
        %v1922 = vpack.c.b16 %v1894, %v1892
        %v1923 = vpack.c.b16 %v1897, %v1895
        %v1924 = vpack.c.b16 %v1898, %v1896
        %v1925 = vpack.c.b16 %v1901, %v1899
        %v1926 = vpack.c.b16 %v1902, %v1900
        %v1927 = vpack.c.b16 %v1905, %v1903
        %v1928 = vpack.c.b16 %v1906, %v1904
        %v1929 = vpack.c.b16 %v1909, %v1907
        %v1930 = vpack.c.b16 %v1910, %v1908
        %v1931 = vpack.c.b16 %v1913, %v1911
        %v1932 = vpack.c.b16 %v1914, %v1912
        %v1933 = vpack.c.b16 %v1917, %v1915
        %v1934 = vpack.c.b16 %v1918, %v1916
        %v1951 = vld [vmem:[#allocation2 + $0x8] sm:$0xff]
        %v1952 = vld [vmem:[#allocation2 + $0x2c] sm:$0xff]
        %v1953 = vld [vmem:[#allocation2 + $0x50] sm:$0xff]
        %v1954 = vld [vmem:[#allocation2 + $0x74] sm:$0xff]
        %v1955 = vld [vmem:[#allocation2 + $0x98] sm:$0xff]
        %v1956 = vld [vmem:[#allocation2 + $0xbc] sm:$0xff]
        %v1957 = vld [vmem:[#allocation2 + $0xe0] sm:$0xff]
        %v1958 = vld [vmem:[#allocation2 + $0x104] sm:$0xff]
        %v1959 = vld [vmem:[#allocation2 + $0x128] sm:$0xff]
        %v1960 = vld [vmem:[#allocation2 + $0x14c] sm:$0xff]
        %v1961 = vld [vmem:[#allocation2 + $0x170] sm:$0xff]
        %v1962 = vld [vmem:[#allocation2 + $0x194] sm:$0xff]
        %v1963 = vld [vmem:[#allocation2 + $0x1b8] sm:$0xff]
        %v1964 = vld [vmem:[#allocation2 + $0x1dc] sm:$0xff]
        %v1965 = vld [vmem:[#allocation2 + $0x200] sm:$0xff]
        %v1966 = vld [vmem:[#allocation2 + $0x224] sm:$0xff]
        %v1983 = vunpack.c.l.b16 %v1951
        %v1984 = vunpack.c.h.b16 %v1951
        %v1985 = vunpack.c.l.b16 %v1952
        %v1986 = vunpack.c.h.b16 %v1952
        %v1987 = vunpack.c.l.b16 %v1953
        %v1988 = vunpack.c.h.b16 %v1953
        %v1989 = vunpack.c.l.b16 %v1954
        %v1990 = vunpack.c.h.b16 %v1954
        %v1991 = vunpack.c.l.b16 %v1955
        %v1992 = vunpack.c.h.b16 %v1955
        %v1993 = vunpack.c.l.b16 %v1956
        %v1994 = vunpack.c.h.b16 %v1956
        %v1995 = vunpack.c.l.b16 %v1957
        %v1996 = vunpack.c.h.b16 %v1957
        %v1997 = vunpack.c.l.b16 %v1958
        %v1998 = vunpack.c.h.b16 %v1958
        %v1999 = vunpack.c.l.b16 %v1959
        %v2000 = vunpack.c.h.b16 %v1959
        %v2001 = vunpack.c.l.b16 %v1960
        %v2002 = vunpack.c.h.b16 %v1960
        %v2003 = vunpack.c.l.b16 %v1961
        %v2004 = vunpack.c.h.b16 %v1961
        %v2005 = vunpack.c.l.b16 %v1962
        %v2006 = vunpack.c.h.b16 %v1962
        %v2007 = vunpack.c.l.b16 %v1963
        %v2008 = vunpack.c.h.b16 %v1963
        %v2009 = vunpack.c.l.b16 %v1964
        %v2010 = vunpack.c.h.b16 %v1964
        %v2011 = vunpack.c.l.b16 %v1965
        %v2012 = vunpack.c.h.b16 %v1965
        %v2013 = vunpack.c.l.b16 %v1966
        %v2014 = vunpack.c.h.b16 %v1966
        %v2015 = vpack.c.b16 %v1985, %v1983
        %v2016 = vpack.c.b16 %v1986, %v1984
        %v2017 = vpack.c.b16 %v1989, %v1987
        %v2018 = vpack.c.b16 %v1990, %v1988
        %v2019 = vpack.c.b16 %v1993, %v1991
        %v2020 = vpack.c.b16 %v1994, %v1992
        %v2021 = vpack.c.b16 %v1997, %v1995
        %v2022 = vpack.c.b16 %v1998, %v1996
        %v2023 = vpack.c.b16 %v2001, %v1999
        %v2024 = vpack.c.b16 %v2002, %v2000
        %v2025 = vpack.c.b16 %v2005, %v2003
        %v2026 = vpack.c.b16 %v2006, %v2004
        %v2027 = vpack.c.b16 %v2009, %v2007
        %v2028 = vpack.c.b16 %v2010, %v2008
        %v2029 = vpack.c.b16 %v2013, %v2011
        %v2030 = vpack.c.b16 %v2014, %v2012
        %2047 = vmatpush.bf16.msra.mxu0 %v1853
        %2048 = vmatpush.bf16.msra.mxu0 %v1851
        %2049 = vmatpush.bf16.msra.mxu0 %v1849
        %2050 = vmatpush.bf16.msra.mxu0 %v1847
        %2051 = vmatpush.bf16.msra.mxu0 %v1845
        %2052 = vmatpush.bf16.msra.mxu0 %v1843
        %2053 = vmatpush.bf16.msra.mxu0 %v1841
        %2054 = vmatpush.bf16.msra.mxu0 %v1839
        %2055 = vmatmul.bf16.gmra.mxu0 %v2015
        %v2056 = vpop.f32.mrf.mxu0
        %v2057 = vadd.f32 0.0, %v2056
        %v2058 = vpop.f32.mrf.mxu0
        %v2059 = vadd.f32 0.0, %v2058
        %2060 = vmatmul.bf16.gmra.mxu0 %v2017
        %v2061 = vpop.f32.mrf.mxu0
        %v2062 = vadd.f32 0.0, %v2061
        %v2063 = vpop.f32.mrf.mxu0
        %v2064 = vadd.f32 0.0, %v2063
        %2065 = vmatmul.bf16.gmra.mxu0 %v2019
        %v2066 = vpop.f32.mrf.mxu0
        %v2067 = vadd.f32 0.0, %v2066
        %v2068 = vpop.f32.mrf.mxu0
        %v2069 = vadd.f32 0.0, %v2068
        %2070 = vmatmul.bf16.gmra.mxu0 %v2021
        %v2071 = vpop.f32.mrf.mxu0
        %v2072 = vadd.f32 0.0, %v2071
        %v2073 = vpop.f32.mrf.mxu0
        %v2074 = vadd.f32 0.0, %v2073
        %2075 = vmatmul.bf16.gmra.mxu0 %v2023
        %v2076 = vpop.f32.mrf.mxu0
        %v2077 = vadd.f32 0.0, %v2076
        %v2078 = vpop.f32.mrf.mxu0
        %v2079 = vadd.f32 0.0, %v2078
        %2080 = vmatmul.bf16.gmra.mxu0 %v2025
        %v2081 = vpop.f32.mrf.mxu0
        %v2082 = vadd.f32 0.0, %v2081
        %v2083 = vpop.f32.mrf.mxu0
        %v2084 = vadd.f32 0.0, %v2083
        %2085 = vmatmul.bf16.gmra.mxu0 %v2027
        %v2086 = vpop.f32.mrf.mxu0
        %v2087 = vadd.f32 0.0, %v2086
        %v2088 = vpop.f32.mrf.mxu0
        %v2089 = vadd.f32 0.0, %v2088
        %2090 = vmatmul.bf16.gmra.mxu0 %v2029
        %v2091 = vpop.f32.mrf.mxu0
        %v2092 = vadd.f32 0.0, %v2091
        %v2093 = vpop.f32.mrf.mxu0
        %v2094 = vadd.f32 0.0, %v2093
        %2095 = vdwg.mxu0
        %2096 = vmatpush.bf16.msra.mxu0 %v1933
        %2097 = vmatpush.bf16.msra.mxu0 %v1931
        %2098 = vmatpush.bf16.msra.mxu0 %v1929
        %2099 = vmatpush.bf16.msra.mxu0 %v1927
        %2100 = vmatpush.bf16.msra.mxu0 %v1925
        %2101 = vmatpush.bf16.msra.mxu0 %v1923
        %2102 = vmatpush.bf16.msra.mxu0 %v1921
        %2103 = vmatpush.bf16.msra.mxu0 %v1919
        %2104 = vmatmul.bf16.gmra.mxu0 %v2016
        %v2105 = vpop.f32.mrf.mxu0
        %v2106 = vadd.f32 %v2057, %v2105
        %v2107 = vpop.f32.mrf.mxu0
        %v2108 = vadd.f32 %v2059, %v2107
        %2109 = vmatmul.bf16.gmra.mxu0 %v2018
        %v2110 = vpop.f32.mrf.mxu0
        %v2111 = vadd.f32 %v2062, %v2110
        %v2112 = vpop.f32.mrf.mxu0
        %v2113 = vadd.f32 %v2064, %v2112
        %2114 = vmatmul.bf16.gmra.mxu0 %v2020
        %v2115 = vpop.f32.mrf.mxu0
        %v2116 = vadd.f32 %v2067, %v2115
        %v2117 = vpop.f32.mrf.mxu0
        %v2118 = vadd.f32 %v2069, %v2117
        %2119 = vmatmul.bf16.gmra.mxu0 %v2022
        %v2120 = vpop.f32.mrf.mxu0
        %v2121 = vadd.f32 %v2072, %v2120
        %v2122 = vpop.f32.mrf.mxu0
        %v2123 = vadd.f32 %v2074, %v2122
        %2124 = vmatmul.bf16.gmra.mxu0 %v2024
        %v2125 = vpop.f32.mrf.mxu0
        %v2126 = vadd.f32 %v2077, %v2125
        %v2127 = vpop.f32.mrf.mxu0
        %v2128 = vadd.f32 %v2079, %v2127
        %2129 = vmatmul.bf16.gmra.mxu0 %v2026
        %v2130 = vpop.f32.mrf.mxu0
        %v2131 = vadd.f32 %v2082, %v2130
        %v2132 = vpop.f32.mrf.mxu0
        %v2133 = vadd.f32 %v2084, %v2132
        %2134 = vmatmul.bf16.gmra.mxu0 %v2028
        %v2135 = vpop.f32.mrf.mxu0
        %v2136 = vadd.f32 %v2087, %v2135
        %v2137 = vpop.f32.mrf.mxu0
        %v2138 = vadd.f32 %v2089, %v2137
        %2139 = vmatmul.bf16.gmra.mxu0 %v2030
        %v2140 = vpop.f32.mrf.mxu0
        %v2141 = vadd.f32 %v2092, %v2140
        %v2142 = vpop.f32.mrf.mxu0
        %v2143 = vadd.f32 %v2094, %v2142
        %2144 = vdwg.mxu0
        %2145 = vmatpush.bf16.msra.mxu0 %v1854
        %2146 = vmatpush.bf16.msra.mxu0 %v1852
        %2147 = vmatpush.bf16.msra.mxu0 %v1850
        %2148 = vmatpush.bf16.msra.mxu0 %v1848
        %2149 = vmatpush.bf16.msra.mxu0 %v1846
        %2150 = vmatpush.bf16.msra.mxu0 %v1844
        %2151 = vmatpush.bf16.msra.mxu0 %v1842
        %2152 = vmatpush.bf16.msra.mxu0 %v1840
        %2153 = vmatmul.bf16.gmra.mxu0 %v2015
        %v2154 = vpop.f32.mrf.mxu0
        %v2155 = vadd.f32 0.0, %v2154
        %v2156 = vpop.f32.mrf.mxu0
        %v2157 = vadd.f32 0.0, %v2156
        %2158 = vmatmul.bf16.gmra.mxu0 %v2017
        %v2159 = vpop.f32.mrf.mxu0
        %v2160 = vadd.f32 0.0, %v2159
        %v2161 = vpop.f32.mrf.mxu0
        %v2162 = vadd.f32 0.0, %v2161
        %2163 = vmatmul.bf16.gmra.mxu0 %v2019
        %v2164 = vpop.f32.mrf.mxu0
        %v2165 = vadd.f32 0.0, %v2164
        %v2166 = vpop.f32.mrf.mxu0
        %v2167 = vadd.f32 0.0, %v2166
        %2168 = vmatmul.bf16.gmra.mxu0 %v2021
        %v2169 = vpop.f32.mrf.mxu0
        %v2170 = vadd.f32 0.0, %v2169
        %v2171 = vpop.f32.mrf.mxu0
        %v2172 = vadd.f32 0.0, %v2171
        %2173 = vmatmul.bf16.gmra.mxu0 %v2023
        %v2174 = vpop.f32.mrf.mxu0
        %v2175 = vadd.f32 0.0, %v2174
        %v2176 = vpop.f32.mrf.mxu0
        %v2177 = vadd.f32 0.0, %v2176
        %2178 = vmatmul.bf16.gmra.mxu0 %v2025
        %v2179 = vpop.f32.mrf.mxu0
        %v2180 = vadd.f32 0.0, %v2179
        %v2181 = vpop.f32.mrf.mxu0
        %v2182 = vadd.f32 0.0, %v2181
        %2183 = vmatmul.bf16.gmra.mxu0 %v2027
        %v2184 = vpop.f32.mrf.mxu0
        %v2185 = vadd.f32 0.0, %v2184
        %v2186 = vpop.f32.mrf.mxu0
        %v2187 = vadd.f32 0.0, %v2186
        %2188 = vmatmul.bf16.gmra.mxu0 %v2029
        %v2189 = vpop.f32.mrf.mxu0
        %v2190 = vadd.f32 0.0, %v2189
        %v2191 = vpop.f32.mrf.mxu0
        %v2192 = vadd.f32 0.0, %v2191
        %2193 = vdwg.mxu0
        %2194 = vmatpush.bf16.msra.mxu0 %v1934
        %2195 = vmatpush.bf16.msra.mxu0 %v1932
        %2196 = vmatpush.bf16.msra.mxu0 %v1930
        %2197 = vmatpush.bf16.msra.mxu0 %v1928
        %2198 = vmatpush.bf16.msra.mxu0 %v1926
        %2199 = vmatpush.bf16.msra.mxu0 %v1924
        %2200 = vmatpush.bf16.msra.mxu0 %v1922
        %2201 = vmatpush.bf16.msra.mxu0 %v1920
        %2202 = vmatmul.bf16.gmra.mxu0 %v2016
        %v2203 = vpop.f32.mrf.mxu0
        %v2204 = vadd.f32 %v2155, %v2203
        %v2205 = vpop.f32.mrf.mxu0
        %v2206 = vadd.f32 %v2157, %v2205
        %2207 = vmatmul.bf16.gmra.mxu0 %v2018
        %v2208 = vpop.f32.mrf.mxu0
        %v2209 = vadd.f32 %v2160, %v2208
        %v2210 = vpop.f32.mrf.mxu0
        %v2211 = vadd.f32 %v2162, %v2210
        %2212 = vmatmul.bf16.gmra.mxu0 %v2020
        %v2213 = vpop.f32.mrf.mxu0
        %v2214 = vadd.f32 %v2165, %v2213
        %v2215 = vpop.f32.mrf.mxu0
        %v2216 = vadd.f32 %v2167, %v2215
        %2217 = vmatmul.bf16.gmra.mxu0 %v2022
        %v2218 = vpop.f32.mrf.mxu0
        %v2219 = vadd.f32 %v2170, %v2218
        %v2220 = vpop.f32.mrf.mxu0
        %v2221 = vadd.f32 %v2172, %v2220
        %2222 = vmatmul.bf16.gmra.mxu0 %v2024
        %v2223 = vpop.f32.mrf.mxu0
        %v2224 = vadd.f32 %v2175, %v2223
        %v2225 = vpop.f32.mrf.mxu0
        %v2226 = vadd.f32 %v2177, %v2225
        %2227 = vmatmul.bf16.gmra.mxu0 %v2026
        %v2228 = vpop.f32.mrf.mxu0
        %v2229 = vadd.f32 %v2180, %v2228
        %v2230 = vpop.f32.mrf.mxu0
        %v2231 = vadd.f32 %v2182, %v2230
        %2232 = vmatmul.bf16.gmra.mxu0 %v2028
        %v2233 = vpop.f32.mrf.mxu0
        %v2234 = vadd.f32 %v2185, %v2233
        %v2235 = vpop.f32.mrf.mxu0
        %v2236 = vadd.f32 %v2187, %v2235
        %2237 = vmatmul.bf16.gmra.mxu0 %v2030
        %v2238 = vpop.f32.mrf.mxu0
        %v2239 = vadd.f32 %v2190, %v2238
        %v2240 = vpop.f32.mrf.mxu0
        %v2241 = vadd.f32 %v2192, %v2240
        %2242 = vdwg.mxu0
        %v2259 = vunpack.c.l.b16 %v1471
        %v2260 = vunpack.c.h.b16 %v1471
        %v2261 = vunpack.c.l.b16 %v1472
        %v2262 = vunpack.c.h.b16 %v1472
        %v2263 = vunpack.c.l.b16 %v1473
        %v2264 = vunpack.c.h.b16 %v1473
        %v2265 = vunpack.c.l.b16 %v1474
        %v2266 = vunpack.c.h.b16 %v1474
        %v2267 = vunpack.c.l.b16 %v1475
        %v2268 = vunpack.c.h.b16 %v1475
        %v2269 = vunpack.c.l.b16 %v1476
        %v2270 = vunpack.c.h.b16 %v1476
        %v2271 = vunpack.c.l.b16 %v1477
        %v2272 = vunpack.c.h.b16 %v1477
        %v2273 = vunpack.c.l.b16 %v1478
        %v2274 = vunpack.c.h.b16 %v1478
        %v2275 = vunpack.c.l.b16 %v1479
        %v2276 = vunpack.c.h.b16 %v1479
        %v2277 = vunpack.c.l.b16 %v1480
        %v2278 = vunpack.c.h.b16 %v1480
        %v2279 = vunpack.c.l.b16 %v1481
        %v2280 = vunpack.c.h.b16 %v1481
        %v2281 = vunpack.c.l.b16 %v1482
        %v2282 = vunpack.c.h.b16 %v1482
        %v2283 = vunpack.c.l.b16 %v1483
        %v2284 = vunpack.c.h.b16 %v1483
        %v2285 = vunpack.c.l.b16 %v1484
        %v2286 = vunpack.c.h.b16 %v1484
        %v2287 = vunpack.c.l.b16 %v1485
        %v2288 = vunpack.c.h.b16 %v1485
        %v2289 = vunpack.c.l.b16 %v1486
        %v2290 = vunpack.c.h.b16 %v1486
        %v2291 = vpack.c.b16 %v2261, %v2259
        %v2292 = vpack.c.b16 %v2262, %v2260
        %v2293 = vpack.c.b16 %v2265, %v2263
        %v2294 = vpack.c.b16 %v2266, %v2264
        %v2295 = vpack.c.b16 %v2269, %v2267
        %v2296 = vpack.c.b16 %v2270, %v2268
        %v2297 = vpack.c.b16 %v2273, %v2271
        %v2298 = vpack.c.b16 %v2274, %v2272
        %v2299 = vpack.c.b16 %v2277, %v2275
        %v2300 = vpack.c.b16 %v2278, %v2276
        %v2301 = vpack.c.b16 %v2281, %v2279
        %v2302 = vpack.c.b16 %v2282, %v2280
        %v2303 = vpack.c.b16 %v2285, %v2283
        %v2304 = vpack.c.b16 %v2286, %v2284
        %v2305 = vpack.c.b16 %v2289, %v2287
        %v2306 = vpack.c.b16 %v2290, %v2288
        %2323 = vmatpush.bf16.msra.mxu0 %v1453
        %2324 = vmatpush.bf16.msra.mxu0 %v1451
        %2325 = vmatpush.bf16.msra.mxu0 %v1449
        %2326 = vmatpush.bf16.msra.mxu0 %v1447
        %2327 = vmatpush.bf16.msra.mxu0 %v1445
        %2328 = vmatpush.bf16.msra.mxu0 %v1443
        %2329 = vmatpush.bf16.msra.mxu0 %v1441
        %2330 = vmatpush.bf16.msra.mxu0 %v1439
        %2331 = vmatmul.bf16.gmra.mxu0 %v2291
        %v2332 = vpop.f32.mrf.mxu0
        %v2333 = vadd.f32 %v2106, %v2332
        %v2334 = vpop.f32.mrf.mxu0
        %v2335 = vadd.f32 %v2108, %v2334
        %2336 = vmatmul.bf16.gmra.mxu0 %v2293
        %v2337 = vpop.f32.mrf.mxu0
        %v2338 = vadd.f32 %v2111, %v2337
        %v2339 = vpop.f32.mrf.mxu0
        %v2340 = vadd.f32 %v2113, %v2339
        %2341 = vmatmul.bf16.gmra.mxu0 %v2295
        %v2342 = vpop.f32.mrf.mxu0
        %v2343 = vadd.f32 %v2116, %v2342
        %v2344 = vpop.f32.mrf.mxu0
        %v2345 = vadd.f32 %v2118, %v2344
        %2346 = vmatmul.bf16.gmra.mxu0 %v2297
        %v2347 = vpop.f32.mrf.mxu0
        %v2348 = vadd.f32 %v2121, %v2347
        %v2349 = vpop.f32.mrf.mxu0
        %v2350 = vadd.f32 %v2123, %v2349
        %2351 = vmatmul.bf16.gmra.mxu0 %v2299
        %v2352 = vpop.f32.mrf.mxu0
        %v2353 = vadd.f32 %v2126, %v2352
        %v2354 = vpop.f32.mrf.mxu0
        %v2355 = vadd.f32 %v2128, %v2354
        %2356 = vmatmul.bf16.gmra.mxu0 %v2301
        %v2357 = vpop.f32.mrf.mxu0
        %v2358 = vadd.f32 %v2131, %v2357
        %v2359 = vpop.f32.mrf.mxu0
        %v2360 = vadd.f32 %v2133, %v2359
        %2361 = vmatmul.bf16.gmra.mxu0 %v2303
        %v2362 = vpop.f32.mrf.mxu0
        %v2363 = vadd.f32 %v2136, %v2362
        %v2364 = vpop.f32.mrf.mxu0
        %v2365 = vadd.f32 %v2138, %v2364
        %2366 = vmatmul.bf16.gmra.mxu0 %v2305
        %v2367 = vpop.f32.mrf.mxu0
        %v2368 = vadd.f32 %v2141, %v2367
        %v2369 = vpop.f32.mrf.mxu0
        %v2370 = vadd.f32 %v2143, %v2369
        %2371 = vdwg.mxu0
        %2372 = vmatpush.bf16.msra.mxu0 %v1389
        %2373 = vmatpush.bf16.msra.mxu0 %v1386
        %2374 = vmatpush.bf16.msra.mxu0 %v1383
        %2375 = vmatpush.bf16.msra.mxu0 %v1380
        %2376 = vmatpush.bf16.msra.mxu0 %v1377
        %2377 = vmatpush.bf16.msra.mxu0 %v1374
        %2378 = vmatpush.bf16.msra.mxu0 %v1371
        %2379 = vmatpush.bf16.msra.mxu0 %v1368
        %2380 = vmatmul.bf16.gmra.mxu0 %v2292
        %v2381 = vpop.f32.mrf.mxu0
        %v2382 = vadd.f32 %v2333, %v2381
        %v2383 = vpop.f32.mrf.mxu0
        %v2384 = vadd.f32 %v2335, %v2383
        %2385 = vmatmul.bf16.gmra.mxu0 %v2294
        %v2386 = vpop.f32.mrf.mxu0
        %v2387 = vadd.f32 %v2338, %v2386
        %v2388 = vpop.f32.mrf.mxu0
        %v2389 = vadd.f32 %v2340, %v2388
        %2390 = vmatmul.bf16.gmra.mxu0 %v2296
        %v2391 = vpop.f32.mrf.mxu0
        %v2392 = vadd.f32 %v2343, %v2391
        %v2393 = vpop.f32.mrf.mxu0
        %v2394 = vadd.f32 %v2345, %v2393
        %2395 = vmatmul.bf16.gmra.mxu0 %v2298
        %v2396 = vpop.f32.mrf.mxu0
        %v2397 = vadd.f32 %v2348, %v2396
        %v2398 = vpop.f32.mrf.mxu0
        %v2399 = vadd.f32 %v2350, %v2398
        %2400 = vmatmul.bf16.gmra.mxu0 %v2300
        %v2401 = vpop.f32.mrf.mxu0
        %v2402 = vadd.f32 %v2353, %v2401
        %v2403 = vpop.f32.mrf.mxu0
        %v2404 = vadd.f32 %v2355, %v2403
        %2405 = vmatmul.bf16.gmra.mxu0 %v2302
        %v2406 = vpop.f32.mrf.mxu0
        %v2407 = vadd.f32 %v2358, %v2406
        %v2408 = vpop.f32.mrf.mxu0
        %v2409 = vadd.f32 %v2360, %v2408
        %2410 = vmatmul.bf16.gmra.mxu0 %v2304
        %v2411 = vpop.f32.mrf.mxu0
        %v2412 = vadd.f32 %v2363, %v2411
        %v2413 = vpop.f32.mrf.mxu0
        %v2414 = vadd.f32 %v2365, %v2413
        %2415 = vmatmul.bf16.gmra.mxu0 %v2306
        %v2416 = vpop.f32.mrf.mxu0
        %v2417 = vadd.f32 %v2368, %v2416
        %v2418 = vpop.f32.mrf.mxu0
        %v2419 = vadd.f32 %v2370, %v2418
        %2420 = vdwg.mxu0
        %2421 = vmatpush.bf16.msra.mxu0 %v1454
        %2422 = vmatpush.bf16.msra.mxu0 %v1452
        %2423 = vmatpush.bf16.msra.mxu0 %v1450
        %2424 = vmatpush.bf16.msra.mxu0 %v1448
        %2425 = vmatpush.bf16.msra.mxu0 %v1446
        %2426 = vmatpush.bf16.msra.mxu0 %v1444
        %2427 = vmatpush.bf16.msra.mxu0 %v1442
        %2428 = vmatpush.bf16.msra.mxu0 %v1440
        %2429 = vmatmul.bf16.gmra.mxu0 %v2291
        %v2430 = vpop.f32.mrf.mxu0
        %v2431 = vadd.f32 %v2204, %v2430
        %v2432 = vpop.f32.mrf.mxu0
        %v2433 = vadd.f32 %v2206, %v2432
        %2434 = vmatmul.bf16.gmra.mxu0 %v2293
        %v2435 = vpop.f32.mrf.mxu0
        %v2436 = vadd.f32 %v2209, %v2435
        %v2437 = vpop.f32.mrf.mxu0
        %v2438 = vadd.f32 %v2211, %v2437
        %2439 = vmatmul.bf16.gmra.mxu0 %v2295
        %v2440 = vpop.f32.mrf.mxu0
        %v2441 = vadd.f32 %v2214, %v2440
        %v2442 = vpop.f32.mrf.mxu0
        %v2443 = vadd.f32 %v2216, %v2442
        %2444 = vmatmul.bf16.gmra.mxu0 %v2297
        %v2445 = vpop.f32.mrf.mxu0
        %v2446 = vadd.f32 %v2219, %v2445
        %v2447 = vpop.f32.mrf.mxu0
        %v2448 = vadd.f32 %v2221, %v2447
        %2449 = vmatmul.bf16.gmra.mxu0 %v2299
        %v2450 = vpop.f32.mrf.mxu0
        %v2451 = vadd.f32 %v2224, %v2450
        %v2452 = vpop.f32.mrf.mxu0
        %v2453 = vadd.f32 %v2226, %v2452
        %2454 = vmatmul.bf16.gmra.mxu0 %v2301
        %v2455 = vpop.f32.mrf.mxu0
        %v2456 = vadd.f32 %v2229, %v2455
        %v2457 = vpop.f32.mrf.mxu0
        %v2458 = vadd.f32 %v2231, %v2457
        %2459 = vmatmul.bf16.gmra.mxu0 %v2303
        %v2460 = vpop.f32.mrf.mxu0
        %v2461 = vadd.f32 %v2234, %v2460
        %v2462 = vpop.f32.mrf.mxu0
        %v2463 = vadd.f32 %v2236, %v2462
        %2464 = vmatmul.bf16.gmra.mxu0 %v2305
        %v2465 = vpop.f32.mrf.mxu0
        %v2466 = vadd.f32 %v2239, %v2465
        %v2467 = vpop.f32.mrf.mxu0
        %v2468 = vadd.f32 %v2241, %v2467
        %2469 = vdwg.mxu0
        %2470 = vmatpush.bf16.msra.mxu0 %v1358
        %2471 = vmatpush.bf16.msra.mxu0 %v1357
        %2472 = vmatpush.bf16.msra.mxu0 %v1356
        %2473 = vmatpush.bf16.msra.mxu0 %v1355
        %2474 = vmatpush.bf16.msra.mxu0 %v1354
        %2475 = vmatpush.bf16.msra.mxu0 %v1353
        %2476 = vmatpush.bf16.msra.mxu0 %v1352
        %2477 = vmatpush.bf16.msra.mxu0 %v1351
        %2478 = vmatmul.bf16.gmra.mxu0 %v2292
        %v2479 = vpop.f32.mrf.mxu0
        %v2480 = vadd.f32 %v2431, %v2479
        %v2481 = vpop.f32.mrf.mxu0
        %v2482 = vadd.f32 %v2433, %v2481
        %2483 = vmatmul.bf16.gmra.mxu0 %v2294
        %v2484 = vpop.f32.mrf.mxu0
        %v2485 = vadd.f32 %v2436, %v2484
        %v2486 = vpop.f32.mrf.mxu0
        %v2487 = vadd.f32 %v2438, %v2486
        %2488 = vmatmul.bf16.gmra.mxu0 %v2296
        %v2489 = vpop.f32.mrf.mxu0
        %v2490 = vadd.f32 %v2441, %v2489
        %v2491 = vpop.f32.mrf.mxu0
        %v2492 = vadd.f32 %v2443, %v2491
        %2493 = vmatmul.bf16.gmra.mxu0 %v2298
        %v2494 = vpop.f32.mrf.mxu0
        %v2495 = vadd.f32 %v2446, %v2494
        %v2496 = vpop.f32.mrf.mxu0
        %v2497 = vadd.f32 %v2448, %v2496
        %2498 = vmatmul.bf16.gmra.mxu0 %v2300
        %v2499 = vpop.f32.mrf.mxu0
        %v2500 = vadd.f32 %v2451, %v2499
        %v2501 = vpop.f32.mrf.mxu0
        %v2502 = vadd.f32 %v2453, %v2501
        %2503 = vmatmul.bf16.gmra.mxu0 %v2302
        %v2504 = vpop.f32.mrf.mxu0
        %v2505 = vadd.f32 %v2456, %v2504
        %v2506 = vpop.f32.mrf.mxu0
        %v2507 = vadd.f32 %v2458, %v2506
        %2508 = vmatmul.bf16.gmra.mxu0 %v2304
        %v2509 = vpop.f32.mrf.mxu0
        %v2510 = vadd.f32 %v2461, %v2509
        %v2511 = vpop.f32.mrf.mxu0
        %v2512 = vadd.f32 %v2463, %v2511
        %2513 = vmatmul.bf16.gmra.mxu0 %v2306
        %v2514 = vpop.f32.mrf.mxu0
        %v2515 = vadd.f32 %v2466, %v2514
        %v2516 = vpop.f32.mrf.mxu0
        %v2517 = vadd.f32 %v2468, %v2516
        %2518 = vdwg.mxu0
        %2519 = vrot.lane.b32.xlu0 %v1071, 127
        %v2520 = vpop.permute.xlu0 %2519
        %2521 = vrot.lane.b32.xlu0 %v1072, 127
        %v2522 = vpop.permute.xlu0 %2521
        %2523 = vrot.lane.b32.xlu0 %v1073, 127
        %v2524 = vpop.permute.xlu0 %2523
        %2525 = vrot.lane.b32.xlu0 %v1074, 127
        %v2526 = vpop.permute.xlu0 %2525
        %2527 = vrot.lane.b32.xlu0 %v1075, 127
        %v2528 = vpop.permute.xlu0 %2527
        %2529 = vrot.lane.b32.xlu0 %v1076, 127
        %v2530 = vpop.permute.xlu0 %2529
        %2531 = vrot.lane.b32.xlu0 %v1077, 127
        %v2532 = vpop.permute.xlu0 %2531
        %2533 = vrot.lane.b32.xlu0 %v1078, 127
        %v2534 = vpop.permute.xlu0 %2533
        %2535 = vrot.lane.b32.xlu0 %v1079, 127
        %v2536 = vpop.permute.xlu0 %2535
        %2537 = vrot.lane.b32.xlu0 %v1080, 127
        %v2538 = vpop.permute.xlu0 %2537
        %2539 = vrot.lane.b32.xlu0 %v1081, 127
        %v2540 = vpop.permute.xlu0 %2539
        %2541 = vrot.lane.b32.xlu0 %v1082, 127
        %v2542 = vpop.permute.xlu0 %2541
        %2543 = vrot.lane.b32.xlu0 %v1083, 127
        %v2544 = vpop.permute.xlu0 %2543
        %2545 = vrot.lane.b32.xlu0 %v1084, 127
        %v2546 = vpop.permute.xlu0 %2545
        %2547 = vrot.lane.b32.xlu0 %v1085, 127
        %v2548 = vpop.permute.xlu0 %2547
        %2549 = vrot.lane.b32.xlu0 %v1086, 127
        %v2550 = vpop.permute.xlu0 %2549
        %v2551 = vsel %vm560, %v2520, %v2522
        %v2552 = vsel %vm560, %v2524, %v2526
        %v2553 = vsel %vm560, %v2528, %v2530
        %v2554 = vsel %vm560, %v2532, %v2534
        %v2555 = vsel %vm560, %v2536, %v2538
        %v2556 = vsel %vm560, %v2540, %v2542
        %v2557 = vsel %vm560, %v2544, %v2546
        %v2558 = vsel %vm560, %v2548, %v2550
        %v2568 = vsel %vm563, %v2522, 0
        %v2571 = vsel %vm563, %v2526, 0
        %v2574 = vsel %vm563, %v2530, 0
        %v2577 = vsel %vm563, %v2534, 0
        %v2580 = vsel %vm563, %v2538, 0
        %v2583 = vsel %vm563, %v2542, 0
        %v2586 = vsel %vm563, %v2546, 0
        %v2589 = vsel %vm563, %v2550, 0
        %v2591 = vunpack.c.l.bf16 %v2551
        %v2592 = vunpack.c.l.bf16 %v2568
        %v2593 = vunpack.c.h.bf16 %v2551
        %v2594 = vunpack.c.h.bf16 %v2568
        %v2595 = vunpack.c.l.bf16 %v2552
        %v2596 = vunpack.c.l.bf16 %v2571
        %v2597 = vunpack.c.h.bf16 %v2552
        %v2598 = vunpack.c.h.bf16 %v2571
        %v2599 = vunpack.c.l.bf16 %v2553
        %v2600 = vunpack.c.l.bf16 %v2574
        %v2601 = vunpack.c.h.bf16 %v2553
        %v2602 = vunpack.c.h.bf16 %v2574
        %v2603 = vunpack.c.l.bf16 %v2554
        %v2604 = vunpack.c.l.bf16 %v2577
        %v2605 = vunpack.c.h.bf16 %v2554
        %v2606 = vunpack.c.h.bf16 %v2577
        %v2607 = vunpack.c.l.bf16 %v2555
        %v2608 = vunpack.c.l.bf16 %v2580
        %v2609 = vunpack.c.h.bf16 %v2555
        %v2610 = vunpack.c.h.bf16 %v2580
        %v2611 = vunpack.c.l.bf16 %v2556
        %v2612 = vunpack.c.l.bf16 %v2583
        %v2613 = vunpack.c.h.bf16 %v2556
        %v2614 = vunpack.c.h.bf16 %v2583
        %v2615 = vunpack.c.l.bf16 %v2557
        %v2616 = vunpack.c.l.bf16 %v2586
        %v2617 = vunpack.c.h.bf16 %v2557
        %v2618 = vunpack.c.h.bf16 %v2586
        %v2619 = vunpack.c.l.bf16 %v2558
        %v2620 = vunpack.c.l.bf16 %v2589
        %v2621 = vunpack.c.h.bf16 %v2558
        %v2622 = vunpack.c.h.bf16 %v2589
        %v2623 = vmul.f32 %v2591, %v525
        %v2624 = vmul.f32 %v2592, %v526
        %v2625 = vmul.f32 %v2593, %v525
        %v2626 = vmul.f32 %v2594, %v526
        %v2627 = vmul.f32 %v2595, %v525
        %v2628 = vmul.f32 %v2596, %v526
        %v2629 = vmul.f32 %v2597, %v525
        %v2630 = vmul.f32 %v2598, %v526
        %v2631 = vmul.f32 %v2599, %v525
        %v2632 = vmul.f32 %v2600, %v526
        %v2633 = vmul.f32 %v2601, %v525
        %v2634 = vmul.f32 %v2602, %v526
        %v2635 = vmul.f32 %v2603, %v525
        %v2636 = vmul.f32 %v2604, %v526
        %v2637 = vmul.f32 %v2605, %v525
        %v2638 = vmul.f32 %v2606, %v526
        %v2639 = vmul.f32 %v2607, %v525
        %v2640 = vmul.f32 %v2608, %v526
        %v2641 = vmul.f32 %v2609, %v525
        %v2642 = vmul.f32 %v2610, %v526
        %v2643 = vmul.f32 %v2611, %v525
        %v2644 = vmul.f32 %v2612, %v526
        %v2645 = vmul.f32 %v2613, %v525
        %v2646 = vmul.f32 %v2614, %v526
        %v2647 = vmul.f32 %v2615, %v525
        %v2648 = vmul.f32 %v2616, %v526
        %v2649 = vmul.f32 %v2617, %v525
        %v2650 = vmul.f32 %v2618, %v526
        %v2651 = vmul.f32 %v2619, %v525
        %v2652 = vmul.f32 %v2620, %v526
        %v2653 = vmul.f32 %v2621, %v525
        %v2654 = vmul.f32 %v2622, %v526
        %v2655 = vpack.c.bf16 %v2624, %v2623
        %v2656 = vpack.c.bf16 %v2626, %v2625
        %v2657 = vpack.c.bf16 %v2628, %v2627
        %v2658 = vpack.c.bf16 %v2630, %v2629
        %v2659 = vpack.c.bf16 %v2632, %v2631
        %v2660 = vpack.c.bf16 %v2634, %v2633
        %v2661 = vpack.c.bf16 %v2636, %v2635
        %v2662 = vpack.c.bf16 %v2638, %v2637
        %v2663 = vpack.c.bf16 %v2640, %v2639
        %v2664 = vpack.c.bf16 %v2642, %v2641
        %v2665 = vpack.c.bf16 %v2644, %v2643
        %v2666 = vpack.c.bf16 %v2646, %v2645
        %v2667 = vpack.c.bf16 %v2648, %v2647
        %v2668 = vpack.c.bf16 %v2650, %v2649
        %v2669 = vpack.c.bf16 %v2652, %v2651
        %v2670 = vpack.c.bf16 %v2654, %v2653
        %v2687 = vunpack.c.l.b16 %v2655
        %v2688 = vunpack.c.h.b16 %v2655
        %v2689 = vunpack.c.l.b16 %v2656
        %v2690 = vunpack.c.h.b16 %v2656
        %v2691 = vunpack.c.l.b16 %v2657
        %v2692 = vunpack.c.h.b16 %v2657
        %v2693 = vunpack.c.l.b16 %v2658
        %v2694 = vunpack.c.h.b16 %v2658
        %v2695 = vunpack.c.l.b16 %v2659
        %v2696 = vunpack.c.h.b16 %v2659
        %v2697 = vunpack.c.l.b16 %v2660
        %v2698 = vunpack.c.h.b16 %v2660
        %v2699 = vunpack.c.l.b16 %v2661
        %v2700 = vunpack.c.h.b16 %v2661
        %v2701 = vunpack.c.l.b16 %v2662
        %v2702 = vunpack.c.h.b16 %v2662
        %v2703 = vunpack.c.l.b16 %v2663
        %v2704 = vunpack.c.h.b16 %v2663
        %v2705 = vunpack.c.l.b16 %v2664
        %v2706 = vunpack.c.h.b16 %v2664
        %v2707 = vunpack.c.l.b16 %v2665
        %v2708 = vunpack.c.h.b16 %v2665
        %v2709 = vunpack.c.l.b16 %v2666
        %v2710 = vunpack.c.h.b16 %v2666
        %v2711 = vunpack.c.l.b16 %v2667
        %v2712 = vunpack.c.h.b16 %v2667
        %v2713 = vunpack.c.l.b16 %v2668
        %v2714 = vunpack.c.h.b16 %v2668
        %v2715 = vunpack.c.l.b16 %v2669
        %v2716 = vunpack.c.h.b16 %v2669
        %v2717 = vunpack.c.l.b16 %v2670
        %v2718 = vunpack.c.h.b16 %v2670
        %v2719 = vpack.c.b16 %v2689, %v2687
        %v2720 = vpack.c.b16 %v2690, %v2688
        %v2721 = vpack.c.b16 %v2693, %v2691
        %v2722 = vpack.c.b16 %v2694, %v2692
        %v2723 = vpack.c.b16 %v2697, %v2695
        %v2724 = vpack.c.b16 %v2698, %v2696
        %v2725 = vpack.c.b16 %v2701, %v2699
        %v2726 = vpack.c.b16 %v2702, %v2700
        %v2727 = vpack.c.b16 %v2705, %v2703
        %v2728 = vpack.c.b16 %v2706, %v2704
        %v2729 = vpack.c.b16 %v2709, %v2707
        %v2730 = vpack.c.b16 %v2710, %v2708
        %v2731 = vpack.c.b16 %v2713, %v2711
        %v2732 = vpack.c.b16 %v2714, %v2712
        %v2733 = vpack.c.b16 %v2717, %v2715
        %v2734 = vpack.c.b16 %v2718, %v2716
        %v2751 = vld [vmem:[#allocation2 + $0x10] sm:$0xff]
        %v2752 = vld [vmem:[#allocation2 + $0x34] sm:$0xff]
        %v2753 = vld [vmem:[#allocation2 + $0x58] sm:$0xff]
        %v2754 = vld [vmem:[#allocation2 + $0x7c] sm:$0xff]
        %v2755 = vld [vmem:[#allocation2 + $0xa0] sm:$0xff]
        %v2756 = vld [vmem:[#allocation2 + $0xc4] sm:$0xff]
        %v2757 = vld [vmem:[#allocation2 + $0xe8] sm:$0xff]
        %v2758 = vld [vmem:[#allocation2 + $0x10c] sm:$0xff]
        %v2759 = vld [vmem:[#allocation2 + $0x130] sm:$0xff]
        %v2760 = vld [vmem:[#allocation2 + $0x154] sm:$0xff]
        %v2761 = vld [vmem:[#allocation2 + $0x178] sm:$0xff]
        %v2762 = vld [vmem:[#allocation2 + $0x19c] sm:$0xff]
        %v2763 = vld [vmem:[#allocation2 + $0x1c0] sm:$0xff]
        %v2764 = vld [vmem:[#allocation2 + $0x1e4] sm:$0xff]
        %v2765 = vld [vmem:[#allocation2 + $0x208] sm:$0xff]
        %v2766 = vld [vmem:[#allocation2 + $0x22c] sm:$0xff]
        %v2783 = vunpack.c.l.b16 %v2751
        %v2784 = vunpack.c.h.b16 %v2751
        %v2785 = vunpack.c.l.b16 %v2752
        %v2786 = vunpack.c.h.b16 %v2752
        %v2787 = vunpack.c.l.b16 %v2753
        %v2788 = vunpack.c.h.b16 %v2753
        %v2789 = vunpack.c.l.b16 %v2754
        %v2790 = vunpack.c.h.b16 %v2754
        %v2791 = vunpack.c.l.b16 %v2755
        %v2792 = vunpack.c.h.b16 %v2755
        %v2793 = vunpack.c.l.b16 %v2756
        %v2794 = vunpack.c.h.b16 %v2756
        %v2795 = vunpack.c.l.b16 %v2757
        %v2796 = vunpack.c.h.b16 %v2757
        %v2797 = vunpack.c.l.b16 %v2758
        %v2798 = vunpack.c.h.b16 %v2758
        %v2799 = vunpack.c.l.b16 %v2759
        %v2800 = vunpack.c.h.b16 %v2759
        %v2801 = vunpack.c.l.b16 %v2760
        %v2802 = vunpack.c.h.b16 %v2760
        %v2803 = vunpack.c.l.b16 %v2761
        %v2804 = vunpack.c.h.b16 %v2761
        %v2805 = vunpack.c.l.b16 %v2762
        %v2806 = vunpack.c.h.b16 %v2762
        %v2807 = vunpack.c.l.b16 %v2763
        %v2808 = vunpack.c.h.b16 %v2763
        %v2809 = vunpack.c.l.b16 %v2764
        %v2810 = vunpack.c.h.b16 %v2764
        %v2811 = vunpack.c.l.b16 %v2765
        %v2812 = vunpack.c.h.b16 %v2765
        %v2813 = vunpack.c.l.b16 %v2766
        %v2814 = vunpack.c.h.b16 %v2766
        %v2815 = vpack.c.b16 %v2785, %v2783
        %v2816 = vpack.c.b16 %v2786, %v2784
        %v2817 = vpack.c.b16 %v2789, %v2787
        %v2818 = vpack.c.b16 %v2790, %v2788
        %v2819 = vpack.c.b16 %v2793, %v2791
        %v2820 = vpack.c.b16 %v2794, %v2792
        %v2821 = vpack.c.b16 %v2797, %v2795
        %v2822 = vpack.c.b16 %v2798, %v2796
        %v2823 = vpack.c.b16 %v2801, %v2799
        %v2824 = vpack.c.b16 %v2802, %v2800
        %v2825 = vpack.c.b16 %v2805, %v2803
        %v2826 = vpack.c.b16 %v2806, %v2804
        %v2827 = vpack.c.b16 %v2809, %v2807
        %v2828 = vpack.c.b16 %v2810, %v2808
        %v2829 = vpack.c.b16 %v2813, %v2811
        %v2830 = vpack.c.b16 %v2814, %v2812
        %2847 = vmatpush.bf16.msra.mxu0 %v1085
        %2848 = vmatpush.bf16.msra.mxu0 %v1083
        %2849 = vmatpush.bf16.msra.mxu0 %v1081
        %2850 = vmatpush.bf16.msra.mxu0 %v1079
        %2851 = vmatpush.bf16.msra.mxu0 %v1077
        %2852 = vmatpush.bf16.msra.mxu0 %v1075
        %2853 = vmatpush.bf16.msra.mxu0 %v1073
        %2854 = vmatpush.bf16.msra.mxu0 %v1071
        %2855 = vmatmul.bf16.gmra.mxu0 %v2815
        %v2856 = vpop.f32.mrf.mxu0
        %v2857 = vadd.f32 0.0, %v2856
        %v2858 = vpop.f32.mrf.mxu0
        %v2859 = vadd.f32 0.0, %v2858
        %2860 = vmatmul.bf16.gmra.mxu0 %v2817
        %v2861 = vpop.f32.mrf.mxu0
        %v2862 = vadd.f32 0.0, %v2861
        %v2863 = vpop.f32.mrf.mxu0
        %v2864 = vadd.f32 0.0, %v2863
        %2865 = vmatmul.bf16.gmra.mxu0 %v2819
        %v2866 = vpop.f32.mrf.mxu0
        %v2867 = vadd.f32 0.0, %v2866
        %v2868 = vpop.f32.mrf.mxu0
        %v2869 = vadd.f32 0.0, %v2868
        %2870 = vmatmul.bf16.gmra.mxu0 %v2821
        %v2871 = vpop.f32.mrf.mxu0
        %v2872 = vadd.f32 0.0, %v2871
        %v2873 = vpop.f32.mrf.mxu0
        %v2874 = vadd.f32 0.0, %v2873
        %2875 = vmatmul.bf16.gmra.mxu0 %v2823
        %v2876 = vpop.f32.mrf.mxu0
        %v2877 = vadd.f32 0.0, %v2876
        %v2878 = vpop.f32.mrf.mxu0
        %v2879 = vadd.f32 0.0, %v2878
        %2880 = vmatmul.bf16.gmra.mxu0 %v2825
        %v2881 = vpop.f32.mrf.mxu0
        %v2882 = vadd.f32 0.0, %v2881
        %v2883 = vpop.f32.mrf.mxu0
        %v2884 = vadd.f32 0.0, %v2883
        %2885 = vmatmul.bf16.gmra.mxu0 %v2827
        %v2886 = vpop.f32.mrf.mxu0
        %v2887 = vadd.f32 0.0, %v2886
        %v2888 = vpop.f32.mrf.mxu0
        %v2889 = vadd.f32 0.0, %v2888
        %2890 = vmatmul.bf16.gmra.mxu0 %v2829
        %v2891 = vpop.f32.mrf.mxu0
        %v2892 = vadd.f32 0.0, %v2891
        %v2893 = vpop.f32.mrf.mxu0
        %v2894 = vadd.f32 0.0, %v2893
        %2895 = vdwg.mxu0
        %2896 = vmatpush.bf16.msra.mxu0 %v2733
        %2897 = vmatpush.bf16.msra.mxu0 %v2731
        %2898 = vmatpush.bf16.msra.mxu0 %v2729
        %2899 = vmatpush.bf16.msra.mxu0 %v2727
        %2900 = vmatpush.bf16.msra.mxu0 %v2725
        %2901 = vmatpush.bf16.msra.mxu0 %v2723
        %2902 = vmatpush.bf16.msra.mxu0 %v2721
        %2903 = vmatpush.bf16.msra.mxu0 %v2719
        %2904 = vmatmul.bf16.gmra.mxu0 %v2816
        %v2905 = vpop.f32.mrf.mxu0
        %v2906 = vadd.f32 %v2857, %v2905
        %v2907 = vpop.f32.mrf.mxu0
        %v2908 = vadd.f32 %v2859, %v2907
        %2909 = vmatmul.bf16.gmra.mxu0 %v2818
        %v2910 = vpop.f32.mrf.mxu0
        %v2911 = vadd.f32 %v2862, %v2910
        %v2912 = vpop.f32.mrf.mxu0
        %v2913 = vadd.f32 %v2864, %v2912
        %2914 = vmatmul.bf16.gmra.mxu0 %v2820
        %v2915 = vpop.f32.mrf.mxu0
        %v2916 = vadd.f32 %v2867, %v2915
        %v2917 = vpop.f32.mrf.mxu0
        %v2918 = vadd.f32 %v2869, %v2917
        %2919 = vmatmul.bf16.gmra.mxu0 %v2822
        %v2920 = vpop.f32.mrf.mxu0
        %v2921 = vadd.f32 %v2872, %v2920
        %v2922 = vpop.f32.mrf.mxu0
        %v2923 = vadd.f32 %v2874, %v2922
        %2924 = vmatmul.bf16.gmra.mxu0 %v2824
        %v2925 = vpop.f32.mrf.mxu0
        %v2926 = vadd.f32 %v2877, %v2925
        %v2927 = vpop.f32.mrf.mxu0
        %v2928 = vadd.f32 %v2879, %v2927
        %2929 = vmatmul.bf16.gmra.mxu0 %v2826
        %v2930 = vpop.f32.mrf.mxu0
        %v2931 = vadd.f32 %v2882, %v2930
        %v2932 = vpop.f32.mrf.mxu0
        %v2933 = vadd.f32 %v2884, %v2932
        %2934 = vmatmul.bf16.gmra.mxu0 %v2828
        %v2935 = vpop.f32.mrf.mxu0
        %v2936 = vadd.f32 %v2887, %v2935
        %v2937 = vpop.f32.mrf.mxu0
        %v2938 = vadd.f32 %v2889, %v2937
        %2939 = vmatmul.bf16.gmra.mxu0 %v2830
        %v2940 = vpop.f32.mrf.mxu0
        %v2941 = vadd.f32 %v2892, %v2940
        %v2942 = vpop.f32.mrf.mxu0
        %v2943 = vadd.f32 %v2894, %v2942
        %2944 = vdwg.mxu0
        %2945 = vmatpush.bf16.msra.mxu0 %v1086
        %2946 = vmatpush.bf16.msra.mxu0 %v1084
        %2947 = vmatpush.bf16.msra.mxu0 %v1082
        %2948 = vmatpush.bf16.msra.mxu0 %v1080
        %2949 = vmatpush.bf16.msra.mxu0 %v1078
        %2950 = vmatpush.bf16.msra.mxu0 %v1076
        %2951 = vmatpush.bf16.msra.mxu0 %v1074
        %2952 = vmatpush.bf16.msra.mxu0 %v1072
        %2953 = vmatmul.bf16.gmra.mxu0 %v2815
        %v2954 = vpop.f32.mrf.mxu0
        %v2955 = vadd.f32 0.0, %v2954
        %v2956 = vpop.f32.mrf.mxu0
        %v2957 = vadd.f32 0.0, %v2956
        %2958 = vmatmul.bf16.gmra.mxu0 %v2817
        %v2959 = vpop.f32.mrf.mxu0
        %v2960 = vadd.f32 0.0, %v2959
        %v2961 = vpop.f32.mrf.mxu0
        %v2962 = vadd.f32 0.0, %v2961
        %2963 = vmatmul.bf16.gmra.mxu0 %v2819
        %v2964 = vpop.f32.mrf.mxu0
        %v2965 = vadd.f32 0.0, %v2964
        %v2966 = vpop.f32.mrf.mxu0
        %v2967 = vadd.f32 0.0, %v2966
        %2968 = vmatmul.bf16.gmra.mxu0 %v2821
        %v2969 = vpop.f32.mrf.mxu0
        %v2970 = vadd.f32 0.0, %v2969
        %v2971 = vpop.f32.mrf.mxu0
        %v2972 = vadd.f32 0.0, %v2971
        %2973 = vmatmul.bf16.gmra.mxu0 %v2823
        %v2974 = vpop.f32.mrf.mxu0
        %v2975 = vadd.f32 0.0, %v2974
        %v2976 = vpop.f32.mrf.mxu0
        %v2977 = vadd.f32 0.0, %v2976
        %2978 = vmatmul.bf16.gmra.mxu0 %v2825
        %v2979 = vpop.f32.mrf.mxu0
        %v2980 = vadd.f32 0.0, %v2979
        %v2981 = vpop.f32.mrf.mxu0
        %v2982 = vadd.f32 0.0, %v2981
        %2983 = vmatmul.bf16.gmra.mxu0 %v2827
        %v2984 = vpop.f32.mrf.mxu0
        %v2985 = vadd.f32 0.0, %v2984
        %v2986 = vpop.f32.mrf.mxu0
        %v2987 = vadd.f32 0.0, %v2986
        %2988 = vmatmul.bf16.gmra.mxu0 %v2829
        %v2989 = vpop.f32.mrf.mxu0
        %v2990 = vadd.f32 0.0, %v2989
        %v2991 = vpop.f32.mrf.mxu0
        %v2992 = vadd.f32 0.0, %v2991
        %2993 = vdwg.mxu0
        %2994 = vmatpush.bf16.msra.mxu0 %v2734
        %2995 = vmatpush.bf16.msra.mxu0 %v2732
        %2996 = vmatpush.bf16.msra.mxu0 %v2730
        %2997 = vmatpush.bf16.msra.mxu0 %v2728
        %2998 = vmatpush.bf16.msra.mxu0 %v2726
        %2999 = vmatpush.bf16.msra.mxu0 %v2724
        %3000 = vmatpush.bf16.msra.mxu0 %v2722
        %3001 = vmatpush.bf16.msra.mxu0 %v2720
        %3002 = vmatmul.bf16.gmra.mxu0 %v2816
        %v3003 = vpop.f32.mrf.mxu0
        %v3004 = vadd.f32 %v2955, %v3003
        %v3005 = vpop.f32.mrf.mxu0
        %v3006 = vadd.f32 %v2957, %v3005
        %3007 = vmatmul.bf16.gmra.mxu0 %v2818
        %v3008 = vpop.f32.mrf.mxu0
        %v3009 = vadd.f32 %v2960, %v3008
        %v3010 = vpop.f32.mrf.mxu0
        %v3011 = vadd.f32 %v2962, %v3010
        %3012 = vmatmul.bf16.gmra.mxu0 %v2820
        %v3013 = vpop.f32.mrf.mxu0
        %v3014 = vadd.f32 %v2965, %v3013
        %v3015 = vpop.f32.mrf.mxu0
        %v3016 = vadd.f32 %v2967, %v3015
        %3017 = vmatmul.bf16.gmra.mxu0 %v2822
        %v3018 = vpop.f32.mrf.mxu0
        %v3019 = vadd.f32 %v2970, %v3018
        %v3020 = vpop.f32.mrf.mxu0
        %v3021 = vadd.f32 %v2972, %v3020
        %3022 = vmatmul.bf16.gmra.mxu0 %v2824
        %v3023 = vpop.f32.mrf.mxu0
        %v3024 = vadd.f32 %v2975, %v3023
        %v3025 = vpop.f32.mrf.mxu0
        %v3026 = vadd.f32 %v2977, %v3025
        %3027 = vmatmul.bf16.gmra.mxu0 %v2826
        %v3028 = vpop.f32.mrf.mxu0
        %v3029 = vadd.f32 %v2980, %v3028
        %v3030 = vpop.f32.mrf.mxu0
        %v3031 = vadd.f32 %v2982, %v3030
        %3032 = vmatmul.bf16.gmra.mxu0 %v2828
        %v3033 = vpop.f32.mrf.mxu0
        %v3034 = vadd.f32 %v2985, %v3033
        %v3035 = vpop.f32.mrf.mxu0
        %v3036 = vadd.f32 %v2987, %v3035
        %3037 = vmatmul.bf16.gmra.mxu0 %v2830
        %v3038 = vpop.f32.mrf.mxu0
        %v3039 = vadd.f32 %v2990, %v3038
        %v3040 = vpop.f32.mrf.mxu0
        %v3041 = vadd.f32 %v2992, %v3040
        %3042 = vdwg.mxu0
        %v3043 = vadd.f32 %v2382, %v2906
        %v3044 = vadd.f32 %v2480, %v3004
        %v3045 = vadd.f32 %v2384, %v2908
        %v3046 = vadd.f32 %v2482, %v3006
        %v3047 = vadd.f32 %v2387, %v2911
        %v3048 = vadd.f32 %v2485, %v3009
        %v3049 = vadd.f32 %v2389, %v2913
        %v3050 = vadd.f32 %v2487, %v3011
        %v3051 = vadd.f32 %v2392, %v2916
        %v3052 = vadd.f32 %v2490, %v3014
        %v3053 = vadd.f32 %v2394, %v2918
        %v3054 = vadd.f32 %v2492, %v3016
        %v3055 = vadd.f32 %v2397, %v2921
        %v3056 = vadd.f32 %v2495, %v3019
        %v3057 = vadd.f32 %v2399, %v2923
        %v3058 = vadd.f32 %v2497, %v3021
        %v3059 = vadd.f32 %v2402, %v2926
        %v3060 = vadd.f32 %v2500, %v3024
        %v3061 = vadd.f32 %v2404, %v2928
        %v3062 = vadd.f32 %v2502, %v3026
        %v3063 = vadd.f32 %v2407, %v2931
        %v3064 = vadd.f32 %v2505, %v3029
        %v3065 = vadd.f32 %v2409, %v2933
        %v3066 = vadd.f32 %v2507, %v3031
        %v3067 = vadd.f32 %v2412, %v2936
        %v3068 = vadd.f32 %v2510, %v3034
        %v3069 = vadd.f32 %v2414, %v2938
        %v3070 = vadd.f32 %v2512, %v3036
        %v3071 = vadd.f32 %v2417, %v2941
        %v3072 = vadd.f32 %v2515, %v3039
        %v3073 = vadd.f32 %v2419, %v2943
        %v3074 = vadd.f32 %v2517, %v3041
        %3075 = vrot.lane.b32.xlu0 %v1071, 113
        %v3076 = vpop.permute.xlu0 %3075
        %3077 = vrot.lane.b32.xlu0 %v1072, 113
        %v3078 = vpop.permute.xlu0 %3077
        %3079 = vrot.lane.b32.xlu0 %v1073, 113
        %v3080 = vpop.permute.xlu0 %3079
        %3081 = vrot.lane.b32.xlu0 %v1074, 113
        %v3082 = vpop.permute.xlu0 %3081
        %3083 = vrot.lane.b32.xlu0 %v1075, 113
        %v3084 = vpop.permute.xlu0 %3083
        %3085 = vrot.lane.b32.xlu0 %v1076, 113
        %v3086 = vpop.permute.xlu0 %3085
        %3087 = vrot.lane.b32.xlu0 %v1077, 113
        %v3088 = vpop.permute.xlu0 %3087
        %3089 = vrot.lane.b32.xlu0 %v1078, 113
        %v3090 = vpop.permute.xlu0 %3089
        %3091 = vrot.lane.b32.xlu0 %v1079, 113
        %v3092 = vpop.permute.xlu0 %3091
        %3093 = vrot.lane.b32.xlu0 %v1080, 113
        %v3094 = vpop.permute.xlu0 %3093
        %3095 = vrot.lane.b32.xlu0 %v1081, 113
        %v3096 = vpop.permute.xlu0 %3095
        %3097 = vrot.lane.b32.xlu0 %v1082, 113
        %v3098 = vpop.permute.xlu0 %3097
        %3099 = vrot.lane.b32.xlu0 %v1083, 113
        %v3100 = vpop.permute.xlu0 %3099
        %3101 = vrot.lane.b32.xlu0 %v1084, 113
        %v3102 = vpop.permute.xlu0 %3101
        %3103 = vrot.lane.b32.xlu0 %v1085, 113
        %v3104 = vpop.permute.xlu0 %3103
        %3105 = vrot.lane.b32.xlu0 %v1086, 113
        %v3106 = vpop.permute.xlu0 %3105
        %v3107 = vsel %vm581, %v3076, %v3078
        %v3108 = vsel %vm581, %v3080, %v3082
        %v3109 = vsel %vm581, %v3084, %v3086
        %v3110 = vsel %vm581, %v3088, %v3090
        %v3111 = vsel %vm581, %v3092, %v3094
        %v3112 = vsel %vm581, %v3096, %v3098
        %v3113 = vsel %vm581, %v3100, %v3102
        %v3114 = vsel %vm581, %v3104, %v3106
        %v3124 = vsel %vm584, %v3078, 0
        %v3127 = vsel %vm584, %v3082, 0
        %v3130 = vsel %vm584, %v3086, 0
        %v3133 = vsel %vm584, %v3090, 0
        %v3136 = vsel %vm584, %v3094, 0
        %v3139 = vsel %vm584, %v3098, 0
        %v3142 = vsel %vm584, %v3102, 0
        %v3145 = vsel %vm584, %v3106, 0
        %v3147 = vunpack.c.l.bf16 %v3107
        %v3148 = vunpack.c.l.bf16 %v3124
        %v3149 = vunpack.c.h.bf16 %v3107
        %v3150 = vunpack.c.h.bf16 %v3124
        %v3151 = vunpack.c.l.bf16 %v3108
        %v3152 = vunpack.c.l.bf16 %v3127
        %v3153 = vunpack.c.h.bf16 %v3108
        %v3154 = vunpack.c.h.bf16 %v3127
        %v3155 = vunpack.c.l.bf16 %v3109
        %v3156 = vunpack.c.l.bf16 %v3130
        %v3157 = vunpack.c.h.bf16 %v3109
        %v3158 = vunpack.c.h.bf16 %v3130
        %v3159 = vunpack.c.l.bf16 %v3110
        %v3160 = vunpack.c.l.bf16 %v3133
        %v3161 = vunpack.c.h.bf16 %v3110
        %v3162 = vunpack.c.h.bf16 %v3133
        %v3163 = vunpack.c.l.bf16 %v3111
        %v3164 = vunpack.c.l.bf16 %v3136
        %v3165 = vunpack.c.h.bf16 %v3111
        %v3166 = vunpack.c.h.bf16 %v3136
        %v3167 = vunpack.c.l.bf16 %v3112
        %v3168 = vunpack.c.l.bf16 %v3139
        %v3169 = vunpack.c.h.bf16 %v3112
        %v3170 = vunpack.c.h.bf16 %v3139
        %v3171 = vunpack.c.l.bf16 %v3113
        %v3172 = vunpack.c.l.bf16 %v3142
        %v3173 = vunpack.c.h.bf16 %v3113
        %v3174 = vunpack.c.h.bf16 %v3142
        %v3175 = vunpack.c.l.bf16 %v3114
        %v3176 = vunpack.c.l.bf16 %v3145
        %v3177 = vunpack.c.h.bf16 %v3114
        %v3178 = vunpack.c.h.bf16 %v3145
        %v3179 = vmul.f32 %v3147, %v488
        %v3180 = vmul.f32 %v3148, %v489
        %v3181 = vmul.f32 %v3149, %v488
        %v3182 = vmul.f32 %v3150, %v489
        %v3183 = vmul.f32 %v3151, %v488
        %v3184 = vmul.f32 %v3152, %v489
        %v3185 = vmul.f32 %v3153, %v488
        %v3186 = vmul.f32 %v3154, %v489
        %v3187 = vmul.f32 %v3155, %v488
        %v3188 = vmul.f32 %v3156, %v489
        %v3189 = vmul.f32 %v3157, %v488
        %v3190 = vmul.f32 %v3158, %v489
        %v3191 = vmul.f32 %v3159, %v488
        %v3192 = vmul.f32 %v3160, %v489
        %v3193 = vmul.f32 %v3161, %v488
        %v3194 = vmul.f32 %v3162, %v489
        %v3195 = vmul.f32 %v3163, %v488
        %v3196 = vmul.f32 %v3164, %v489
        %v3197 = vmul.f32 %v3165, %v488
        %v3198 = vmul.f32 %v3166, %v489
        %v3199 = vmul.f32 %v3167, %v488
        %v3200 = vmul.f32 %v3168, %v489
        %v3201 = vmul.f32 %v3169, %v488
        %v3202 = vmul.f32 %v3170, %v489
        %v3203 = vmul.f32 %v3171, %v488
        %v3204 = vmul.f32 %v3172, %v489
        %v3205 = vmul.f32 %v3173, %v488
        %v3206 = vmul.f32 %v3174, %v489
        %v3207 = vmul.f32 %v3175, %v488
        %v3208 = vmul.f32 %v3176, %v489
        %v3209 = vmul.f32 %v3177, %v488
        %v3210 = vmul.f32 %v3178, %v489
        %v3211 = vpack.c.bf16 %v3180, %v3179
        %v3212 = vpack.c.bf16 %v3182, %v3181
        %v3213 = vpack.c.bf16 %v3184, %v3183
        %v3214 = vpack.c.bf16 %v3186, %v3185
        %v3215 = vpack.c.bf16 %v3188, %v3187
        %v3216 = vpack.c.bf16 %v3190, %v3189
        %v3217 = vpack.c.bf16 %v3192, %v3191
        %v3218 = vpack.c.bf16 %v3194, %v3193
        %v3219 = vpack.c.bf16 %v3196, %v3195
        %v3220 = vpack.c.bf16 %v3198, %v3197
        %v3221 = vpack.c.bf16 %v3200, %v3199
        %v3222 = vpack.c.bf16 %v3202, %v3201
        %v3223 = vpack.c.bf16 %v3204, %v3203
        %v3224 = vpack.c.bf16 %v3206, %v3205
        %v3225 = vpack.c.bf16 %v3208, %v3207
        %v3226 = vpack.c.bf16 %v3210, %v3209
        %3227 = vrot.lane.b32.xlu0 %v1071, 112
        %v3228 = vpop.permute.xlu0 %3227
        %3229 = vrot.lane.b32.xlu0 %v1072, 112
        %v3230 = vpop.permute.xlu0 %3229
        %3231 = vrot.lane.b32.xlu0 %v1073, 112
        %v3232 = vpop.permute.xlu0 %3231
        %3233 = vrot.lane.b32.xlu0 %v1074, 112
        %v3234 = vpop.permute.xlu0 %3233
        %3235 = vrot.lane.b32.xlu0 %v1075, 112
        %v3236 = vpop.permute.xlu0 %3235
        %3237 = vrot.lane.b32.xlu0 %v1076, 112
        %v3238 = vpop.permute.xlu0 %3237
        %3239 = vrot.lane.b32.xlu0 %v1077, 112
        %v3240 = vpop.permute.xlu0 %3239
        %3241 = vrot.lane.b32.xlu0 %v1078, 112
        %v3242 = vpop.permute.xlu0 %3241
        %3243 = vrot.lane.b32.xlu0 %v1079, 112
        %v3244 = vpop.permute.xlu0 %3243
        %3245 = vrot.lane.b32.xlu0 %v1080, 112
        %v3246 = vpop.permute.xlu0 %3245
        %3247 = vrot.lane.b32.xlu0 %v1081, 112
        %v3248 = vpop.permute.xlu0 %3247
        %3249 = vrot.lane.b32.xlu0 %v1082, 112
        %v3250 = vpop.permute.xlu0 %3249
        %3251 = vrot.lane.b32.xlu0 %v1083, 112
        %v3252 = vpop.permute.xlu0 %3251
        %3253 = vrot.lane.b32.xlu0 %v1084, 112
        %v3254 = vpop.permute.xlu0 %3253
        %3255 = vrot.lane.b32.xlu0 %v1085, 112
        %v3256 = vpop.permute.xlu0 %3255
        %3257 = vrot.lane.b32.xlu0 %v1086, 112
        %v3258 = vpop.permute.xlu0 %3257
        %v3259 = vsel %vm602, %v3228, %v3230
        %v3260 = vsel %vm602, %v3232, %v3234
        %v3261 = vsel %vm602, %v3236, %v3238
        %v3262 = vsel %vm602, %v3240, %v3242
        %v3263 = vsel %vm602, %v3244, %v3246
        %v3264 = vsel %vm602, %v3248, %v3250
        %v3265 = vsel %vm602, %v3252, %v3254
        %v3266 = vsel %vm602, %v3256, %v3258
        %v3276 = vsel %vm604, %v3230, 0
        %v3279 = vsel %vm604, %v3234, 0
        %v3282 = vsel %vm604, %v3238, 0
        %v3285 = vsel %vm604, %v3242, 0
        %v3288 = vsel %vm604, %v3246, 0
        %v3291 = vsel %vm604, %v3250, 0
        %v3294 = vsel %vm604, %v3254, 0
        %v3297 = vsel %vm604, %v3258, 0
        %v3315 = vunpack.c.l.b16 %v3211
        %v3316 = vunpack.c.h.b16 %v3211
        %v3317 = vunpack.c.l.b16 %v3212
        %v3318 = vunpack.c.h.b16 %v3212
        %v3319 = vunpack.c.l.b16 %v3213
        %v3320 = vunpack.c.h.b16 %v3213
        %v3321 = vunpack.c.l.b16 %v3214
        %v3322 = vunpack.c.h.b16 %v3214
        %v3323 = vunpack.c.l.b16 %v3215
        %v3324 = vunpack.c.h.b16 %v3215
        %v3325 = vunpack.c.l.b16 %v3216
        %v3326 = vunpack.c.h.b16 %v3216
        %v3327 = vunpack.c.l.b16 %v3217
        %v3328 = vunpack.c.h.b16 %v3217
        %v3329 = vunpack.c.l.b16 %v3218
        %v3330 = vunpack.c.h.b16 %v3218
        %v3331 = vunpack.c.l.b16 %v3219
        %v3332 = vunpack.c.h.b16 %v3219
        %v3333 = vunpack.c.l.b16 %v3220
        %v3334 = vunpack.c.h.b16 %v3220
        %v3335 = vunpack.c.l.b16 %v3221
        %v3336 = vunpack.c.h.b16 %v3221
        %v3337 = vunpack.c.l.b16 %v3222
        %v3338 = vunpack.c.h.b16 %v3222
        %v3339 = vunpack.c.l.b16 %v3223
        %v3340 = vunpack.c.h.b16 %v3223
        %v3341 = vunpack.c.l.b16 %v3224
        %v3342 = vunpack.c.h.b16 %v3224
        %v3343 = vunpack.c.l.b16 %v3225
        %v3344 = vunpack.c.h.b16 %v3225
        %v3345 = vunpack.c.l.b16 %v3226
        %v3346 = vunpack.c.h.b16 %v3226
        %v3347 = vpack.c.b16 %v3317, %v3315
        %v3348 = vpack.c.b16 %v3318, %v3316
        %v3349 = vpack.c.b16 %v3321, %v3319
        %v3350 = vpack.c.b16 %v3322, %v3320
        %v3351 = vpack.c.b16 %v3325, %v3323
        %v3352 = vpack.c.b16 %v3326, %v3324
        %v3353 = vpack.c.b16 %v3329, %v3327
        %v3354 = vpack.c.b16 %v3330, %v3328
        %v3355 = vpack.c.b16 %v3333, %v3331
        %v3356 = vpack.c.b16 %v3334, %v3332
        %v3357 = vpack.c.b16 %v3337, %v3335
        %v3358 = vpack.c.b16 %v3338, %v3336
        %v3359 = vpack.c.b16 %v3341, %v3339
        %v3360 = vpack.c.b16 %v3342, %v3340
        %v3361 = vpack.c.b16 %v3345, %v3343
        %v3362 = vpack.c.b16 %v3346, %v3344
        %v3379 = vld [vmem:[#allocation2 + $0x18] sm:$0xff]
        %v3380 = vld [vmem:[#allocation2 + $0x3c] sm:$0xff]
        %v3381 = vld [vmem:[#allocation2 + $0x60] sm:$0xff]
        %v3382 = vld [vmem:[#allocation2 + $0x84] sm:$0xff]
        %v3383 = vld [vmem:[#allocation2 + $0xa8] sm:$0xff]
        %v3384 = vld [vmem:[#allocation2 + $0xcc] sm:$0xff]
        %v3385 = vld [vmem:[#allocation2 + $0xf0] sm:$0xff]
        %v3386 = vld [vmem:[#allocation2 + $0x114] sm:$0xff]
        %v3387 = vld [vmem:[#allocation2 + $0x138] sm:$0xff]
        %v3388 = vld [vmem:[#allocation2 + $0x15c] sm:$0xff]
        %v3389 = vld [vmem:[#allocation2 + $0x180] sm:$0xff]
        %v3390 = vld [vmem:[#allocation2 + $0x1a4] sm:$0xff]
        %v3391 = vld [vmem:[#allocation2 + $0x1c8] sm:$0xff]
        %v3392 = vld [vmem:[#allocation2 + $0x1ec] sm:$0xff]
        %v3393 = vld [vmem:[#allocation2 + $0x210] sm:$0xff]
        %v3394 = vld [vmem:[#allocation2 + $0x234] sm:$0xff]
        %v3411 = vunpack.c.l.b16 %v3379
        %v3412 = vunpack.c.h.b16 %v3379
        %v3413 = vunpack.c.l.b16 %v3380
        %v3414 = vunpack.c.h.b16 %v3380
        %v3415 = vunpack.c.l.b16 %v3381
        %v3416 = vunpack.c.h.b16 %v3381
        %v3417 = vunpack.c.l.b16 %v3382
        %v3418 = vunpack.c.h.b16 %v3382
        %v3419 = vunpack.c.l.b16 %v3383
        %v3420 = vunpack.c.h.b16 %v3383
        %v3421 = vunpack.c.l.b16 %v3384
        %v3422 = vunpack.c.h.b16 %v3384
        %v3423 = vunpack.c.l.b16 %v3385
        %v3424 = vunpack.c.h.b16 %v3385
        %v3425 = vunpack.c.l.b16 %v3386
        %v3426 = vunpack.c.h.b16 %v3386
        %v3427 = vunpack.c.l.b16 %v3387
        %v3428 = vunpack.c.h.b16 %v3387
        %v3429 = vunpack.c.l.b16 %v3388
        %v3430 = vunpack.c.h.b16 %v3388
        %v3431 = vunpack.c.l.b16 %v3389
        %v3432 = vunpack.c.h.b16 %v3389
        %v3433 = vunpack.c.l.b16 %v3390
        %v3434 = vunpack.c.h.b16 %v3390
        %v3435 = vunpack.c.l.b16 %v3391
        %v3436 = vunpack.c.h.b16 %v3391
        %v3437 = vunpack.c.l.b16 %v3392
        %v3438 = vunpack.c.h.b16 %v3392
        %v3439 = vunpack.c.l.b16 %v3393
        %v3440 = vunpack.c.h.b16 %v3393
        %v3441 = vunpack.c.l.b16 %v3394
        %v3442 = vunpack.c.h.b16 %v3394
        %v3443 = vpack.c.b16 %v3413, %v3411
        %v3444 = vpack.c.b16 %v3414, %v3412
        %v3445 = vpack.c.b16 %v3417, %v3415
        %v3446 = vpack.c.b16 %v3418, %v3416
        %v3447 = vpack.c.b16 %v3421, %v3419
        %v3448 = vpack.c.b16 %v3422, %v3420
        %v3449 = vpack.c.b16 %v3425, %v3423
        %v3450 = vpack.c.b16 %v3426, %v3424
        %v3451 = vpack.c.b16 %v3429, %v3427
        %v3452 = vpack.c.b16 %v3430, %v3428
        %v3453 = vpack.c.b16 %v3433, %v3431
        %v3454 = vpack.c.b16 %v3434, %v3432
        %v3455 = vpack.c.b16 %v3437, %v3435
        %v3456 = vpack.c.b16 %v3438, %v3436
        %v3457 = vpack.c.b16 %v3441, %v3439
        %v3458 = vpack.c.b16 %v3442, %v3440
        %3475 = vmatpush.bf16.msra.mxu0 %v3361
        %3476 = vmatpush.bf16.msra.mxu0 %v3359
        %3477 = vmatpush.bf16.msra.mxu0 %v3357
        %3478 = vmatpush.bf16.msra.mxu0 %v3355
        %3479 = vmatpush.bf16.msra.mxu0 %v3353
        %3480 = vmatpush.bf16.msra.mxu0 %v3351
        %3481 = vmatpush.bf16.msra.mxu0 %v3349
        %3482 = vmatpush.bf16.msra.mxu0 %v3347
        %3483 = vmatmul.bf16.gmra.mxu0 %v3443
        %v3484 = vpop.f32.mrf.mxu0
        %v3485 = vadd.f32 0.0, %v3484
        %v3486 = vpop.f32.mrf.mxu0
        %v3487 = vadd.f32 0.0, %v3486
        %3488 = vmatmul.bf16.gmra.mxu0 %v3445
        %v3489 = vpop.f32.mrf.mxu0
        %v3490 = vadd.f32 0.0, %v3489
        %v3491 = vpop.f32.mrf.mxu0
        %v3492 = vadd.f32 0.0, %v3491
        %3493 = vmatmul.bf16.gmra.mxu0 %v3447
        %v3494 = vpop.f32.mrf.mxu0
        %v3495 = vadd.f32 0.0, %v3494
        %v3496 = vpop.f32.mrf.mxu0
        %v3497 = vadd.f32 0.0, %v3496
        %3498 = vmatmul.bf16.gmra.mxu0 %v3449
        %v3499 = vpop.f32.mrf.mxu0
        %v3500 = vadd.f32 0.0, %v3499
        %v3501 = vpop.f32.mrf.mxu0
        %v3502 = vadd.f32 0.0, %v3501
        %3503 = vmatmul.bf16.gmra.mxu0 %v3451
        %v3504 = vpop.f32.mrf.mxu0
        %v3505 = vadd.f32 0.0, %v3504
        %v3506 = vpop.f32.mrf.mxu0
        %v3507 = vadd.f32 0.0, %v3506
        %3508 = vmatmul.bf16.gmra.mxu0 %v3453
        %v3509 = vpop.f32.mrf.mxu0
        %v3510 = vadd.f32 0.0, %v3509
        %v3511 = vpop.f32.mrf.mxu0
        %v3512 = vadd.f32 0.0, %v3511
        %3513 = vmatmul.bf16.gmra.mxu0 %v3455
        %v3514 = vpop.f32.mrf.mxu0
        %v3515 = vadd.f32 0.0, %v3514
        %v3516 = vpop.f32.mrf.mxu0
        %v3517 = vadd.f32 0.0, %v3516
        %3518 = vmatmul.bf16.gmra.mxu0 %v3457
        %v3519 = vpop.f32.mrf.mxu0
        %v3520 = vadd.f32 0.0, %v3519
        %v3521 = vpop.f32.mrf.mxu0
        %v3522 = vadd.f32 0.0, %v3521
        %3523 = vdwg.mxu0
        %3524 = vmatpush.bf16.msra.mxu0 %v3266
        %3525 = vmatpush.bf16.msra.mxu0 %v3265
        %3526 = vmatpush.bf16.msra.mxu0 %v3264
        %3527 = vmatpush.bf16.msra.mxu0 %v3263
        %3528 = vmatpush.bf16.msra.mxu0 %v3262
        %3529 = vmatpush.bf16.msra.mxu0 %v3261
        %3530 = vmatpush.bf16.msra.mxu0 %v3260
        %3531 = vmatpush.bf16.msra.mxu0 %v3259
        %3532 = vmatmul.bf16.gmra.mxu0 %v3444
        %v3533 = vpop.f32.mrf.mxu0
        %v3534 = vadd.f32 %v3485, %v3533
        %v3535 = vpop.f32.mrf.mxu0
        %v3536 = vadd.f32 %v3487, %v3535
        %3537 = vmatmul.bf16.gmra.mxu0 %v3446
        %v3538 = vpop.f32.mrf.mxu0
        %v3539 = vadd.f32 %v3490, %v3538
        %v3540 = vpop.f32.mrf.mxu0
        %v3541 = vadd.f32 %v3492, %v3540
        %3542 = vmatmul.bf16.gmra.mxu0 %v3448
        %v3543 = vpop.f32.mrf.mxu0
        %v3544 = vadd.f32 %v3495, %v3543
        %v3545 = vpop.f32.mrf.mxu0
        %v3546 = vadd.f32 %v3497, %v3545
        %3547 = vmatmul.bf16.gmra.mxu0 %v3450
        %v3548 = vpop.f32.mrf.mxu0
        %v3549 = vadd.f32 %v3500, %v3548
        %v3550 = vpop.f32.mrf.mxu0
        %v3551 = vadd.f32 %v3502, %v3550
        %3552 = vmatmul.bf16.gmra.mxu0 %v3452
        %v3553 = vpop.f32.mrf.mxu0
        %v3554 = vadd.f32 %v3505, %v3553
        %v3555 = vpop.f32.mrf.mxu0
        %v3556 = vadd.f32 %v3507, %v3555
        %3557 = vmatmul.bf16.gmra.mxu0 %v3454
        %v3558 = vpop.f32.mrf.mxu0
        %v3559 = vadd.f32 %v3510, %v3558
        %v3560 = vpop.f32.mrf.mxu0
        %v3561 = vadd.f32 %v3512, %v3560
        %3562 = vmatmul.bf16.gmra.mxu0 %v3456
        %v3563 = vpop.f32.mrf.mxu0
        %v3564 = vadd.f32 %v3515, %v3563
        %v3565 = vpop.f32.mrf.mxu0
        %v3566 = vadd.f32 %v3517, %v3565
        %3567 = vmatmul.bf16.gmra.mxu0 %v3458
        %v3568 = vpop.f32.mrf.mxu0
        %v3569 = vadd.f32 %v3520, %v3568
        %v3570 = vpop.f32.mrf.mxu0
        %v3571 = vadd.f32 %v3522, %v3570
        %3572 = vdwg.mxu0
        %3573 = vmatpush.bf16.msra.mxu0 %v3362
        %3574 = vmatpush.bf16.msra.mxu0 %v3360
        %3575 = vmatpush.bf16.msra.mxu0 %v3358
        %3576 = vmatpush.bf16.msra.mxu0 %v3356
        %3577 = vmatpush.bf16.msra.mxu0 %v3354
        %3578 = vmatpush.bf16.msra.mxu0 %v3352
        %3579 = vmatpush.bf16.msra.mxu0 %v3350
        %3580 = vmatpush.bf16.msra.mxu0 %v3348
        %3581 = vmatmul.bf16.gmra.mxu0 %v3443
        %v3582 = vpop.f32.mrf.mxu0
        %v3583 = vadd.f32 0.0, %v3582
        %v3584 = vpop.f32.mrf.mxu0
        %v3585 = vadd.f32 0.0, %v3584
        %3586 = vmatmul.bf16.gmra.mxu0 %v3445
        %v3587 = vpop.f32.mrf.mxu0
        %v3588 = vadd.f32 0.0, %v3587
        %v3589 = vpop.f32.mrf.mxu0
        %v3590 = vadd.f32 0.0, %v3589
        %3591 = vmatmul.bf16.gmra.mxu0 %v3447
        %v3592 = vpop.f32.mrf.mxu0
        %v3593 = vadd.f32 0.0, %v3592
        %v3594 = vpop.f32.mrf.mxu0
        %v3595 = vadd.f32 0.0, %v3594
        %3596 = vmatmul.bf16.gmra.mxu0 %v3449
        %v3597 = vpop.f32.mrf.mxu0
        %v3598 = vadd.f32 0.0, %v3597
        %v3599 = vpop.f32.mrf.mxu0
        %v3600 = vadd.f32 0.0, %v3599
        %3601 = vmatmul.bf16.gmra.mxu0 %v3451
        %v3602 = vpop.f32.mrf.mxu0
        %v3603 = vadd.f32 0.0, %v3602
        %v3604 = vpop.f32.mrf.mxu0
        %v3605 = vadd.f32 0.0, %v3604
        %3606 = vmatmul.bf16.gmra.mxu0 %v3453
        %v3607 = vpop.f32.mrf.mxu0
        %v3608 = vadd.f32 0.0, %v3607
        %v3609 = vpop.f32.mrf.mxu0
        %v3610 = vadd.f32 0.0, %v3609
        %3611 = vmatmul.bf16.gmra.mxu0 %v3455
        %v3612 = vpop.f32.mrf.mxu0
        %v3613 = vadd.f32 0.0, %v3612
        %v3614 = vpop.f32.mrf.mxu0
        %v3615 = vadd.f32 0.0, %v3614
        %3616 = vmatmul.bf16.gmra.mxu0 %v3457
        %v3617 = vpop.f32.mrf.mxu0
        %v3618 = vadd.f32 0.0, %v3617
        %v3619 = vpop.f32.mrf.mxu0
        %v3620 = vadd.f32 0.0, %v3619
        %3621 = vdwg.mxu0
        %3622 = vmatpush.bf16.msra.mxu0 %v3297
        %3623 = vmatpush.bf16.msra.mxu0 %v3294
        %3624 = vmatpush.bf16.msra.mxu0 %v3291
        %3625 = vmatpush.bf16.msra.mxu0 %v3288
        %3626 = vmatpush.bf16.msra.mxu0 %v3285
        %3627 = vmatpush.bf16.msra.mxu0 %v3282
        %3628 = vmatpush.bf16.msra.mxu0 %v3279
        %3629 = vmatpush.bf16.msra.mxu0 %v3276
        %3630 = vmatmul.bf16.gmra.mxu0 %v3444
        %v3631 = vpop.f32.mrf.mxu0
        %v3632 = vadd.f32 %v3583, %v3631
        %v3633 = vpop.f32.mrf.mxu0
        %v3634 = vadd.f32 %v3585, %v3633
        %3635 = vmatmul.bf16.gmra.mxu0 %v3446
        %v3636 = vpop.f32.mrf.mxu0
        %v3637 = vadd.f32 %v3588, %v3636
        %v3638 = vpop.f32.mrf.mxu0
        %v3639 = vadd.f32 %v3590, %v3638
        %3640 = vmatmul.bf16.gmra.mxu0 %v3448
        %v3641 = vpop.f32.mrf.mxu0
        %v3642 = vadd.f32 %v3593, %v3641
        %v3643 = vpop.f32.mrf.mxu0
        %v3644 = vadd.f32 %v3595, %v3643
        %3645 = vmatmul.bf16.gmra.mxu0 %v3450
        %v3646 = vpop.f32.mrf.mxu0
        %v3647 = vadd.f32 %v3598, %v3646
        %v3648 = vpop.f32.mrf.mxu0
        %v3649 = vadd.f32 %v3600, %v3648
        %3650 = vmatmul.bf16.gmra.mxu0 %v3452
        %v3651 = vpop.f32.mrf.mxu0
        %v3652 = vadd.f32 %v3603, %v3651
        %v3653 = vpop.f32.mrf.mxu0
        %v3654 = vadd.f32 %v3605, %v3653
        %3655 = vmatmul.bf16.gmra.mxu0 %v3454
        %v3656 = vpop.f32.mrf.mxu0
        %v3657 = vadd.f32 %v3608, %v3656
        %v3658 = vpop.f32.mrf.mxu0
        %v3659 = vadd.f32 %v3610, %v3658
        %3660 = vmatmul.bf16.gmra.mxu0 %v3456
        %v3661 = vpop.f32.mrf.mxu0
        %v3662 = vadd.f32 %v3613, %v3661
        %v3663 = vpop.f32.mrf.mxu0
        %v3664 = vadd.f32 %v3615, %v3663
        %3665 = vmatmul.bf16.gmra.mxu0 %v3458
        %v3666 = vpop.f32.mrf.mxu0
        %v3667 = vadd.f32 %v3618, %v3666
        %v3668 = vpop.f32.mrf.mxu0
        %v3669 = vadd.f32 %v3620, %v3668
        %3670 = vdwg.mxu0
        %v3671 = vadd.f32 %v3043, %v3534
        %v3672 = vadd.f32 %v3044, %v3632
        %v3673 = vadd.f32 %v3045, %v3536
        %v3674 = vadd.f32 %v3046, %v3634
        %v3675 = vadd.f32 %v3047, %v3539
        %v3676 = vadd.f32 %v3048, %v3637
        %v3677 = vadd.f32 %v3049, %v3541
        %v3678 = vadd.f32 %v3050, %v3639
        %v3679 = vadd.f32 %v3051, %v3544
        %v3680 = vadd.f32 %v3052, %v3642
        %v3681 = vadd.f32 %v3053, %v3546
        %v3682 = vadd.f32 %v3054, %v3644
        %v3683 = vadd.f32 %v3055, %v3549
        %v3684 = vadd.f32 %v3056, %v3647
        %v3685 = vadd.f32 %v3057, %v3551
        %v3686 = vadd.f32 %v3058, %v3649
        %v3687 = vadd.f32 %v3059, %v3554
        %v3688 = vadd.f32 %v3060, %v3652
        %v3689 = vadd.f32 %v3061, %v3556
        %v3690 = vadd.f32 %v3062, %v3654
        %v3691 = vadd.f32 %v3063, %v3559
        %v3692 = vadd.f32 %v3064, %v3657
        %v3693 = vadd.f32 %v3065, %v3561
        %v3694 = vadd.f32 %v3066, %v3659
        %v3695 = vadd.f32 %v3067, %v3564
        %v3696 = vadd.f32 %v3068, %v3662
        %v3697 = vadd.f32 %v3069, %v3566
        %v3698 = vadd.f32 %v3070, %v3664
        %v3699 = vadd.f32 %v3071, %v3569
        %v3700 = vadd.f32 %v3072, %v3667
        %v3701 = vadd.f32 %v3073, %v3571
        %v3702 = vadd.f32 %v3074, %v3669
        %v3703 = vld [vmem:[#allocation2 + $0x20] sm:$0xf]
        %v3704 = vld [vmem:[#allocation2 + $0x44] sm:$0xf]
        %v3705 = vld [vmem:[#allocation2 + $0x68] sm:$0xf]
        %v3706 = vld [vmem:[#allocation2 + $0x8c] sm:$0xf]
        %v3707 = vld [vmem:[#allocation2 + $0xb0] sm:$0xf]
        %v3708 = vld [vmem:[#allocation2 + $0xd4] sm:$0xf]
        %v3709 = vld [vmem:[#allocation2 + $0xf8] sm:$0xf]
        %v3710 = vld [vmem:[#allocation2 + $0x11c] sm:$0xf]
        %v3711 = vld [vmem:[#allocation2 + $0x140] sm:$0xf]
        %v3712 = vld [vmem:[#allocation2 + $0x164] sm:$0xf]
        %v3713 = vld [vmem:[#allocation2 + $0x188] sm:$0xf]
        %v3714 = vld [vmem:[#allocation2 + $0x1ac] sm:$0xf]
        %v3715 = vld [vmem:[#allocation2 + $0x1d0] sm:$0xf]
        %v3716 = vld [vmem:[#allocation2 + $0x1f4] sm:$0xf]
        %v3717 = vld [vmem:[#allocation2 + $0x218] sm:$0xf]
        %v3718 = vld [vmem:[#allocation2 + $0x23c] sm:$0xf]
        %3719 = vrot.lane.b32.xlu0 %v1071, 111
        %v3720 = vpop.permute.xlu0 %3719
        %3721 = vrot.lane.b32.xlu0 %v1072, 111
        %v3722 = vpop.permute.xlu0 %3721
        %3723 = vrot.lane.b32.xlu0 %v1073, 111
        %v3724 = vpop.permute.xlu0 %3723
        %3725 = vrot.lane.b32.xlu0 %v1074, 111
        %v3726 = vpop.permute.xlu0 %3725
        %3727 = vrot.lane.b32.xlu0 %v1075, 111
        %v3728 = vpop.permute.xlu0 %3727
        %3729 = vrot.lane.b32.xlu0 %v1076, 111
        %v3730 = vpop.permute.xlu0 %3729
        %3731 = vrot.lane.b32.xlu0 %v1077, 111
        %v3732 = vpop.permute.xlu0 %3731
        %3733 = vrot.lane.b32.xlu0 %v1078, 111
        %v3734 = vpop.permute.xlu0 %3733
        %3735 = vrot.lane.b32.xlu0 %v1079, 111
        %v3736 = vpop.permute.xlu0 %3735
        %3737 = vrot.lane.b32.xlu0 %v1080, 111
        %v3738 = vpop.permute.xlu0 %3737
        %3739 = vrot.lane.b32.xlu0 %v1081, 111
        %v3740 = vpop.permute.xlu0 %3739
        %3741 = vrot.lane.b32.xlu0 %v1082, 111
        %v3742 = vpop.permute.xlu0 %3741
        %3743 = vrot.lane.b32.xlu0 %v1083, 111
        %v3744 = vpop.permute.xlu0 %3743
        %3745 = vrot.lane.b32.xlu0 %v1084, 111
        %v3746 = vpop.permute.xlu0 %3745
        %3747 = vrot.lane.b32.xlu0 %v1085, 111
        %v3748 = vpop.permute.xlu0 %3747
        %3749 = vrot.lane.b32.xlu0 %v1086, 111
        %v3750 = vpop.permute.xlu0 %3749
        %v3751 = vsel %vm616, %v3720, %v3722
        %v3752 = vsel %vm616, %v3724, %v3726
        %v3753 = vsel %vm616, %v3728, %v3730
        %v3754 = vsel %vm616, %v3732, %v3734
        %v3755 = vsel %vm616, %v3736, %v3738
        %v3756 = vsel %vm616, %v3740, %v3742
        %v3757 = vsel %vm616, %v3744, %v3746
        %v3758 = vsel %vm616, %v3748, %v3750
        %v3768 = vsel %vm619, %v3722, 0
        %v3771 = vsel %vm619, %v3726, 0
        %v3774 = vsel %vm619, %v3730, 0
        %v3777 = vsel %vm619, %v3734, 0
        %v3780 = vsel %vm619, %v3738, 0
        %v3783 = vsel %vm619, %v3742, 0
        %v3786 = vsel %vm619, %v3746, 0
        %v3789 = vsel %vm619, %v3750, 0
        %v3791 = vunpack.c.l.bf16 %v3751
        %v3792 = vunpack.c.l.bf16 %v3768
        %v3793 = vunpack.c.h.bf16 %v3751
        %v3794 = vunpack.c.h.bf16 %v3768
        %v3795 = vunpack.c.l.bf16 %v3752
        %v3796 = vunpack.c.l.bf16 %v3771
        %v3797 = vunpack.c.h.bf16 %v3752
        %v3798 = vunpack.c.h.bf16 %v3771
        %v3799 = vunpack.c.l.bf16 %v3753
        %v3800 = vunpack.c.l.bf16 %v3774
        %v3801 = vunpack.c.h.bf16 %v3753
        %v3802 = vunpack.c.h.bf16 %v3774
        %v3803 = vunpack.c.l.bf16 %v3754
        %v3804 = vunpack.c.l.bf16 %v3777
        %v3805 = vunpack.c.h.bf16 %v3754
        %v3806 = vunpack.c.h.bf16 %v3777
        %v3807 = vunpack.c.l.bf16 %v3755
        %v3808 = vunpack.c.l.bf16 %v3780
        %v3809 = vunpack.c.h.bf16 %v3755
        %v3810 = vunpack.c.h.bf16 %v3780
        %v3811 = vunpack.c.l.bf16 %v3756
        %v3812 = vunpack.c.l.bf16 %v3783
        %v3813 = vunpack.c.h.bf16 %v3756
        %v3814 = vunpack.c.h.bf16 %v3783
        %v3815 = vunpack.c.l.bf16 %v3757
        %v3816 = vunpack.c.l.bf16 %v3786
        %v3817 = vunpack.c.h.bf16 %v3757
        %v3818 = vunpack.c.h.bf16 %v3786
        %v3819 = vunpack.c.l.bf16 %v3758
        %v3820 = vunpack.c.l.bf16 %v3789
        %v3821 = vunpack.c.h.bf16 %v3758
        %v3822 = vunpack.c.h.bf16 %v3789
        %v3823 = vmul.f32 %v3791, %v525
        %v3824 = vmul.f32 %v3792, %v526
        %v3825 = vmul.f32 %v3793, %v525
        %v3826 = vmul.f32 %v3794, %v526
        %v3827 = vmul.f32 %v3795, %v525
        %v3828 = vmul.f32 %v3796, %v526
        %v3829 = vmul.f32 %v3797, %v525
        %v3830 = vmul.f32 %v3798, %v526
        %v3831 = vmul.f32 %v3799, %v525
        %v3832 = vmul.f32 %v3800, %v526
        %v3833 = vmul.f32 %v3801, %v525
        %v3834 = vmul.f32 %v3802, %v526
        %v3835 = vmul.f32 %v3803, %v525
        %v3836 = vmul.f32 %v3804, %v526
        %v3837 = vmul.f32 %v3805, %v525
        %v3838 = vmul.f32 %v3806, %v526
        %v3839 = vmul.f32 %v3807, %v525
        %v3840 = vmul.f32 %v3808, %v526
        %v3841 = vmul.f32 %v3809, %v525
        %v3842 = vmul.f32 %v3810, %v526
        %v3843 = vmul.f32 %v3811, %v525
        %v3844 = vmul.f32 %v3812, %v526
        %v3845 = vmul.f32 %v3813, %v525
        %v3846 = vmul.f32 %v3814, %v526
        %v3847 = vmul.f32 %v3815, %v525
        %v3848 = vmul.f32 %v3816, %v526
        %v3849 = vmul.f32 %v3817, %v525
        %v3850 = vmul.f32 %v3818, %v526
        %v3851 = vmul.f32 %v3819, %v525
        %v3852 = vmul.f32 %v3820, %v526
        %v3853 = vmul.f32 %v3821, %v525
        %v3854 = vmul.f32 %v3822, %v526
        %v3855 = vpack.c.bf16 %v3825, %v3823
        %v3856 = vpack.c.bf16 %v3826, %v3824
        %v3857 = vpack.c.bf16 %v3829, %v3827
        %v3858 = vpack.c.bf16 %v3830, %v3828
        %v3859 = vpack.c.bf16 %v3833, %v3831
        %v3860 = vpack.c.bf16 %v3834, %v3832
        %v3861 = vpack.c.bf16 %v3837, %v3835
        %v3862 = vpack.c.bf16 %v3838, %v3836
        %v3863 = vpack.c.bf16 %v3841, %v3839
        %v3864 = vpack.c.bf16 %v3842, %v3840
        %v3865 = vpack.c.bf16 %v3845, %v3843
        %v3866 = vpack.c.bf16 %v3846, %v3844
        %v3867 = vpack.c.bf16 %v3849, %v3847
        %v3868 = vpack.c.bf16 %v3850, %v3848
        %v3869 = vpack.c.bf16 %v3853, %v3851
        %v3870 = vpack.c.bf16 %v3854, %v3852
        %v3887 = vunpack.c.l.b16 %v3703
        %v3888 = vunpack.c.l.b16 %v3704
        %v3889 = vunpack.c.l.b16 %v3705
        %v3890 = vunpack.c.l.b16 %v3706
        %v3891 = vunpack.c.l.b16 %v3707
        %v3892 = vunpack.c.l.b16 %v3708
        %v3893 = vunpack.c.l.b16 %v3709
        %v3894 = vunpack.c.l.b16 %v3710
        %v3895 = vunpack.c.l.b16 %v3711
        %v3896 = vunpack.c.l.b16 %v3712
        %v3897 = vunpack.c.l.b16 %v3713
        %v3898 = vunpack.c.l.b16 %v3714
        %v3899 = vunpack.c.l.b16 %v3715
        %v3900 = vunpack.c.l.b16 %v3716
        %v3901 = vunpack.c.l.b16 %v3717
        %v3902 = vunpack.c.l.b16 %v3718
        %v3903 = vpack.c.b16 %v3888, %v3887
        %v3904 = vpack.c.b16 %v3890, %v3889
        %v3905 = vpack.c.b16 %v3892, %v3891
        %v3906 = vpack.c.b16 %v3894, %v3893
        %v3907 = vpack.c.b16 %v3896, %v3895
        %v3908 = vpack.c.b16 %v3898, %v3897
        %v3909 = vpack.c.b16 %v3900, %v3899
        %v3910 = vpack.c.b16 %v3902, %v3901
        %3919 = vmatpush.bf16.msra.mxu0 %v3869
        %3920 = vmatpush.bf16.msra.mxu0 %v3867
        %3921 = vmatpush.bf16.msra.mxu0 %v3865
        %3922 = vmatpush.bf16.msra.mxu0 %v3863
        %3923 = vmatpush.bf16.msra.mxu0 %v3861
        %3924 = vmatpush.bf16.msra.mxu0 %v3859
        %3925 = vmatpush.bf16.msra.mxu0 %v3857
        %3926 = vmatpush.bf16.msra.mxu0 %v3855
        %3927 = vmatmul.bf16.gmra.mxu0 %v3903
        %v3928 = vpop.f32.mrf.mxu0
        %v3929 = vadd.f32 0.0, %v3928
        %v3930 = vpop.f32.mrf.mxu0
        %v3931 = vadd.f32 0.0, %v3930
        %3932 = vmatmul.bf16.gmra.mxu0 %v3904
        %v3933 = vpop.f32.mrf.mxu0
        %v3934 = vadd.f32 0.0, %v3933
        %v3935 = vpop.f32.mrf.mxu0
        %v3936 = vadd.f32 0.0, %v3935
        %3937 = vmatmul.bf16.gmra.mxu0 %v3905
        %v3938 = vpop.f32.mrf.mxu0
        %v3939 = vadd.f32 0.0, %v3938
        %v3940 = vpop.f32.mrf.mxu0
        %v3941 = vadd.f32 0.0, %v3940
        %3942 = vmatmul.bf16.gmra.mxu0 %v3906
        %v3943 = vpop.f32.mrf.mxu0
        %v3944 = vadd.f32 0.0, %v3943
        %v3945 = vpop.f32.mrf.mxu0
        %v3946 = vadd.f32 0.0, %v3945
        %3947 = vmatmul.bf16.gmra.mxu0 %v3907
        %v3948 = vpop.f32.mrf.mxu0
        %v3949 = vadd.f32 0.0, %v3948
        %v3950 = vpop.f32.mrf.mxu0
        %v3951 = vadd.f32 0.0, %v3950
        %3952 = vmatmul.bf16.gmra.mxu0 %v3908
        %v3953 = vpop.f32.mrf.mxu0
        %v3954 = vadd.f32 0.0, %v3953
        %v3955 = vpop.f32.mrf.mxu0
        %v3956 = vadd.f32 0.0, %v3955
        %3957 = vmatmul.bf16.gmra.mxu0 %v3909
        %v3958 = vpop.f32.mrf.mxu0
        %v3959 = vadd.f32 0.0, %v3958
        %v3960 = vpop.f32.mrf.mxu0
        %v3961 = vadd.f32 0.0, %v3960
        %3962 = vmatmul.bf16.gmra.mxu0 %v3910
        %v3963 = vpop.f32.mrf.mxu0
        %v3964 = vadd.f32 0.0, %v3963
        %v3965 = vpop.f32.mrf.mxu0
        %v3966 = vadd.f32 0.0, %v3965
        %3967 = vdwg.mxu0
        %3968 = vmatpush.bf16.msra.mxu0 %v3870
        %3969 = vmatpush.bf16.msra.mxu0 %v3868
        %3970 = vmatpush.bf16.msra.mxu0 %v3866
        %3971 = vmatpush.bf16.msra.mxu0 %v3864
        %3972 = vmatpush.bf16.msra.mxu0 %v3862
        %3973 = vmatpush.bf16.msra.mxu0 %v3860
        %3974 = vmatpush.bf16.msra.mxu0 %v3858
        %3975 = vmatpush.bf16.msra.mxu0 %v3856
        %3976 = vmatmul.bf16.gmra.mxu0 %v3903
        %v3977 = vpop.f32.mrf.mxu0
        %v3978 = vadd.f32 0.0, %v3977
        %v3979 = vpop.f32.mrf.mxu0
        %v3980 = vadd.f32 0.0, %v3979
        %3981 = vmatmul.bf16.gmra.mxu0 %v3904
        %v3982 = vpop.f32.mrf.mxu0
        %v3983 = vadd.f32 0.0, %v3982
        %v3984 = vpop.f32.mrf.mxu0
        %v3985 = vadd.f32 0.0, %v3984
        %3986 = vmatmul.bf16.gmra.mxu0 %v3905
        %v3987 = vpop.f32.mrf.mxu0
        %v3988 = vadd.f32 0.0, %v3987
        %v3989 = vpop.f32.mrf.mxu0
        %v3990 = vadd.f32 0.0, %v3989
        %3991 = vmatmul.bf16.gmra.mxu0 %v3906
        %v3992 = vpop.f32.mrf.mxu0
        %v3993 = vadd.f32 0.0, %v3992
        %v3994 = vpop.f32.mrf.mxu0
        %v3995 = vadd.f32 0.0, %v3994
        %3996 = vmatmul.bf16.gmra.mxu0 %v3907
        %v3997 = vpop.f32.mrf.mxu0
        %v3998 = vadd.f32 0.0, %v3997
        %v3999 = vpop.f32.mrf.mxu0
        %v4000 = vadd.f32 0.0, %v3999
        %4001 = vmatmul.bf16.gmra.mxu0 %v3908
        %v4002 = vpop.f32.mrf.mxu0
        %v4003 = vadd.f32 0.0, %v4002
        %v4004 = vpop.f32.mrf.mxu0
        %v4005 = vadd.f32 0.0, %v4004
        %4006 = vmatmul.bf16.gmra.mxu0 %v3909
        %v4007 = vpop.f32.mrf.mxu0
        %v4008 = vadd.f32 0.0, %v4007
        %v4009 = vpop.f32.mrf.mxu0
        %v4010 = vadd.f32 0.0, %v4009
        %4011 = vmatmul.bf16.gmra.mxu0 %v3910
        %v4012 = vpop.f32.mrf.mxu0
        %v4013 = vadd.f32 0.0, %v4012
        %v4014 = vpop.f32.mrf.mxu0
        %v4015 = vadd.f32 0.0, %v4014
        %4016 = vdwg.mxu0
        %v4017 = vadd.f32 %v3671, %v3929
        %v4018 = vadd.f32 %v3672, %v3978
        %v4019 = vadd.f32 %v3673, %v3931
        %v4020 = vadd.f32 %v3674, %v3980
        %v4021 = vadd.f32 %v3675, %v3934
        %v4022 = vadd.f32 %v3676, %v3983
        %v4023 = vadd.f32 %v3677, %v3936
        %v4024 = vadd.f32 %v3678, %v3985
        %v4025 = vadd.f32 %v3679, %v3939
        %v4026 = vadd.f32 %v3680, %v3988
        %v4027 = vadd.f32 %v3681, %v3941
        %v4028 = vadd.f32 %v3682, %v3990
        %v4029 = vadd.f32 %v3683, %v3944
        %v4030 = vadd.f32 %v3684, %v3993
        %v4031 = vadd.f32 %v3685, %v3946
        %v4032 = vadd.f32 %v3686, %v3995
        %v4033 = vadd.f32 %v3687, %v3949
        %v4034 = vadd.f32 %v3688, %v3998
        %v4035 = vadd.f32 %v3689, %v3951
        %v4036 = vadd.f32 %v3690, %v4000
        %v4037 = vadd.f32 %v3691, %v3954
        %v4038 = vadd.f32 %v3692, %v4003
        %v4039 = vadd.f32 %v3693, %v3956
        %v4040 = vadd.f32 %v3694, %v4005
        %v4041 = vadd.f32 %v3695, %v3959
        %v4042 = vadd.f32 %v3696, %v4008
        %v4043 = vadd.f32 %v3697, %v3961
        %v4044 = vadd.f32 %v3698, %v4010
        %v4045 = vadd.f32 %v3699, %v3964
        %v4046 = vadd.f32 %v3700, %v4013
        %v4047 = vadd.f32 %v3701, %v3966
        %v4048 = vadd.f32 %v3702, %v4015
        %v4049 = vmax.f32 %v4017, 0.0
        %v4050 = vmax.f32 %v4018, 0.0
        %v4051 = vmax.f32 %v4019, 0.0
        %v4052 = vmax.f32 %v4020, 0.0
        %v4053 = vmax.f32 %v4021, 0.0
        %v4054 = vmax.f32 %v4022, 0.0
        %v4055 = vmax.f32 %v4023, 0.0
        %v4056 = vmax.f32 %v4024, 0.0
        %v4057 = vmax.f32 %v4025, 0.0
        %v4058 = vmax.f32 %v4026, 0.0
        %v4059 = vmax.f32 %v4027, 0.0
        %v4060 = vmax.f32 %v4028, 0.0
        %v4061 = vmax.f32 %v4029, 0.0
        %v4062 = vmax.f32 %v4030, 0.0
        %v4063 = vmax.f32 %v4031, 0.0
        %v4064 = vmax.f32 %v4032, 0.0
        %v4065 = vmax.f32 %v4033, 0.0
        %v4066 = vmax.f32 %v4034, 0.0
        %v4067 = vmax.f32 %v4035, 0.0
        %v4068 = vmax.f32 %v4036, 0.0
        %v4069 = vmax.f32 %v4037, 0.0
        %v4070 = vmax.f32 %v4038, 0.0
        %v4071 = vmax.f32 %v4039, 0.0
        %v4072 = vmax.f32 %v4040, 0.0
        %v4073 = vmax.f32 %v4041, 0.0
        %v4074 = vmax.f32 %v4042, 0.0
        %v4075 = vmax.f32 %v4043, 0.0
        %v4076 = vmax.f32 %v4044, 0.0
        %v4077 = vmax.f32 %v4045, 0.0
        %v4078 = vmax.f32 %v4046, 0.0
        %v4079 = vmax.f32 %v4047, 0.0
        %v4080 = vmax.f32 %v4048, 0.0
        %v4081 = vpack.c.bf16 %v4051, %v4049
        %v4082 = vpack.c.bf16 %v4052, %v4050
        %v4083 = vpack.c.bf16 %v4055, %v4053
        %v4084 = vpack.c.bf16 %v4056, %v4054
        %v4085 = vpack.c.bf16 %v4059, %v4057
        %v4086 = vpack.c.bf16 %v4060, %v4058
        %v4087 = vpack.c.bf16 %v4063, %v4061
        %v4088 = vpack.c.bf16 %v4064, %v4062
        %v4089 = vpack.c.bf16 %v4067, %v4065
        %v4090 = vpack.c.bf16 %v4068, %v4066
        %v4091 = vpack.c.bf16 %v4071, %v4069
        %v4092 = vpack.c.bf16 %v4072, %v4070
        %v4093 = vpack.c.bf16 %v4075, %v4073
        %v4094 = vpack.c.bf16 %v4076, %v4074
        %v4095 = vpack.c.bf16 %v4079, %v4077
        %v4096 = vpack.c.bf16 %v4080, %v4078
        %v4097 = vld [vmem:[%s5] sm:$0xf]
        %4098 = vmatpush.bf16.msra.mxu0 %v4095
        %4099 = vmatpush.bf16.msra.mxu0 %v4093
        %4100 = vmatpush.bf16.msra.mxu0 %v4091
        %4101 = vmatpush.bf16.msra.mxu0 %v4089
        %4102 = vmatpush.bf16.msra.mxu0 %v4087
        %4103 = vmatpush.bf16.msra.mxu0 %v4085
        %4104 = vmatpush.bf16.msra.mxu0 %v4083
        %4105 = vmatpush.bf16.msra.mxu0 %v4081
        %4106 = vmatmul.bf16.gmra.mxu0 %v4097
        %v4107 = vpop.f32.mrf.mxu0
        %v4108 = vadd.f32 0.0, %v4107
        %v4109 = vpop.f32.mrf.mxu0
        %4110 = vdwg.mxu0
        %4111 = vmatpush.bf16.msra.mxu0 %v4096
        %4112 = vmatpush.bf16.msra.mxu0 %v4094
        %4113 = vmatpush.bf16.msra.mxu0 %v4092
        %4114 = vmatpush.bf16.msra.mxu0 %v4090
        %4115 = vmatpush.bf16.msra.mxu0 %v4088
        %4116 = vmatpush.bf16.msra.mxu0 %v4086
        %4117 = vmatpush.bf16.msra.mxu0 %v4084
        %4118 = vmatpush.bf16.msra.mxu0 %v4082
        %4119 = vmatmul.bf16.gmra.mxu0 %v4097
        %v4120 = vpop.f32.mrf.mxu0
        %v4121 = vadd.f32 0.0, %v4120
        %v4122 = vpop.f32.mrf.mxu0
        %4123 = vdwg.mxu0
        %v4124 = vxor.u32 %v4108, 2147483648
        %v4125 = vxor.u32 %v4121, 2147483648
        %v4126 = vmul.f32 %v4124, 1.442695
        %v4127 = vpow.pop %v4126
        %v4128 = vmul.f32 %v4125, 1.442695
        %v4129 = vpow.pop %v4128
        %v4130 = vadd.f32 %v4127, 1.0
        %v4131 = vadd.f32 %v4129, 1.0
        %v4132 = vrcp.pop %v4130
        %v4133 = vmul.f32 %v4130, %v4132
        %v4134 = vsub.f32 1.0, %v4133
        %v4135 = vmul.f32 %v4132, %v4134
        %v4136 = vadd.f32 %v4132, %v4135
        %vm4137 = vweird.f32 %v4130
        %vm4138 = vweird.f32 %v4132
        %vm4139 = vmor %vm4137, %vm4138
        %v4140 = vsel %vm4139, %v4132, %v4136
        %v4141 = vand.u32 2147483647, %v4130
        %vm4142 = vcmp.eq.f32.partialorder %v4141, 8.507059e+37
        %v4143 = vand.u32 %v4130, 2147483648
        %v4144 = vor.u32 1.1754944e-38, %v4143
        %v4145 = vsel %vm4142, %v4144, %v4140
        %v4146 = vmul.f32 1.0, %v4145
        %v4147 = vrcp.pop %v4131
        %v4148 = vmul.f32 %v4131, %v4147
        %v4149 = vsub.f32 1.0, %v4148
        %v4150 = vmul.f32 %v4147, %v4149
        %v4151 = vadd.f32 %v4147, %v4150
        %vm4152 = vweird.f32 %v4131
        %vm4153 = vweird.f32 %v4147
        %vm4154 = vmor %vm4152, %vm4153
        %v4155 = vsel %vm4154, %v4147, %v4151
        %v4156 = vand.u32 2147483647, %v4131
        %vm4157 = vcmp.eq.f32.partialorder %v4156, 8.507059e+37
        %v4158 = vand.u32 %v4131, 2147483648
        %v4159 = vor.u32 1.1754944e-38, %v4158
        %v4160 = vsel %vm4157, %v4159, %v4155
        %v4161 = vmul.f32 1.0, %v4160
        %v4162 = vadd.f32 %v4146, 0.2
        %v4163 = vadd.f32 %v4161, 0.2
        %vm4164 = vcmp.ge.f32.partialorder %v1151, %v4162
        %vm4165 = vcmp.ge.f32.partialorder %v1166, %v4163
        %v4166 = vsel %vm4164, 1.0, 0.0
        %v4167 = vsel %vm4165, 1.0, 0.0
        %v4170 = vrot.slane %v4163, 7
        %v4171 = vsel %vm767, %v4162, %v4170
        %v4173 = vlaneseq
        %vm4174 = vcmp.ge.s32.totalorder %v4173, 0
        %vm4175 = vcmp.lt.s32.totalorder %v4173, 256
        %vm4176 = vmand %vm4174, %vm4175
        %4177 = vst.msk [vmem:[%s389] sm:$0x3] %vm4176, %v4171
        %v4180 = vrot.slane %v1166, 7
        %v4181 = vsel %vm767, %v1151, %v4180
        %4183 = vst.msk [vmem:[%s396] sm:$0x3] %vm4176, %v4181
        %v4186 = vrot.slane %v4167, 7
        %v4187 = vsel %vm767, %v4166, %v4186
        %4189 = vst.msk [vmem:[%s403] sm:$0x3] %vm4176, %v4187
        %v4190 = vld [vmem:[%s424] sm:$0x3]
        %v4192 = vperm.slane %v4190, 0
        %v4193 = vperm.slane %v4190, 1
        %v4196 = vsub.f32 %v4166, %v4192
        %v4197 = vsub.f32 %v4167, %v4193
        %v4198 = vand.u32 2147483647, %v4196
        %v4199 = vand.u32 2147483647, %v4197
        %v4200 = vsel %vm767, %v4198, 0.0
        %v4201 = vsel %vm767, %v4199, 0.0
        %v4202 = vadd.f32 %v4200, %v4201
        %4203 = vadd.xlane.f32.xlu0 %v4202
        %v4204 = vpop.xlane.xlu0 %4203
        %v4205 = vrot.slane %v4204, 4
        %v4206 = vadd.f32 %v4204, %v4205
        %v4207 = vrot.slane %v4206, 2
        %v4208 = vadd.f32 %v4206, %v4207
        %v4209 = vrot.slane %v4208, 1
        %v4210 = vadd.f32 %v4208, %v4209
        %s4211 = vtos %v4210
        %v4212 = vstv %s4211
        %v4213 = vadd.f32 %v4212, 0.0
        %4214 = vst [vmem:[%s409] sm:$0x1] %v4213
        %v4215 = vsub.f32 %v1151, %v4192
        %v4216 = vsub.f32 %v1166, %v4193
        %v4217 = vmul.f32 %v4215, %v4215
        %v4218 = vmul.f32 %v4216, %v4216
        %v4219 = vsel %vm767, %v4217, 0.0
        %v4220 = vsel %vm767, %v4218, 0.0
        %v4221 = vadd.f32 %v4219, %v4220
        %4222 = vadd.xlane.f32.xlu0 %v4221
        %v4223 = vpop.xlane.xlu0 %4222
        %v4224 = vrot.slane %v4223, 4
        %v4225 = vadd.f32 %v4223, %v4224
        %v4226 = vrot.slane %v4225, 2
        %v4227 = vadd.f32 %v4225, %v4226
        %v4228 = vrot.slane %v4227, 1
        %v4229 = vadd.f32 %v4227, %v4228
        %s4230 = vtos %v4229
        %v4231 = vstv %s4230
        %v4232 = vadd.f32 %v4231, 0.0
        %4233 = vst [vmem:[%s415] sm:$0x1] %v4232
        %s4234 = sand.u32 %s176, 1
        %s4235 = scalar_lea.sflag [#allocation4], %s4234
        %s4236 = sand.u32 %s176, 1
        %s4237 = smul.addr %s4236, 2
        %s4238 = scalar_lea.vmem [#allocation5], %s4237
        %s4239 = sand.u32 %s32, 1
        %s4240 = scalar_lea.sflag [#allocation7], %s4239
        %s4241 = sand.u32 %s202, 1
        %s4242 = smul.addr %s4241, 2
        %s4243 = scalar_lea.vmem [#allocation6], %s4242
        %s4244 = sand.u32 %s32, 1
        %s4245 = scalar_lea.sflag [#allocation7], %s4244
        %s4246 = sand.u32 %s228, 1
        %s4247 = smul.addr %s4246, 2
        %s4248 = scalar_lea.vmem [#allocation8], %s4247
        %s4249 = sand.u32 %s32, 1
        %s4250 = scalar_lea.sflag [#allocation10], %s4249
        %s4251 = sand.u32 %s254, 1
        %s4252 = scalar_lea.vmem [#allocation9], %s4251
        %s4253 = sand.u32 %s32, 1
        %s4254 = scalar_lea.sflag [#allocation10], %s4253
        %s4255 = sand.u32 %s280, 1
        %s4256 = scalar_lea.vmem [#allocation11], %s4255
        // Predicated region
        $region49: #{tpu_custom_call.1} parent=43 // pred_check
          %p4257 = pneg %p186
        $region50: #{tpu_custom_call.1} parent=43 // pred_check_branch
          %4259 = sbr.rel (%p4257) target = $region52
        $region51: #{tpu_custom_call.1} parent=43 // pred_region
          %4261 = vsyncadd %s4235, 0
          %s4262 = smul.addr %s32, 2
          %s4263 = scalar_lea.hbm %s6, %s4262
          %s4265 = sshll.u32 %s4238, 4
          %s4266 = int_to_ptr.vmem [resolvable:$true] %s4265
          %s4267 = sshll.u32 %s4263, 4
          %s4268 = int_to_ptr.hbm [resolvable:$true] %s4267
          %4270 = dma.vmem_to_hbm [thread:$0]  %s4266, 32, %s4268, %s4235
        $region52: #{tpu_custom_call.1} parent=43 // pred_fallthru
          _
        // Predicated region
        $region53: #{tpu_custom_call.1} parent=43 // pred_check
          %p4271 = pneg %p212
        $region54: #{tpu_custom_call.1} parent=43 // pred_check_branch
          %4273 = sbr.rel (%p4271) target = $region56
        $region55: #{tpu_custom_call.1} parent=43 // pred_region
          %4275 = vsyncadd %s4240, 0
          %s4276 = smul.addr %s32, 2
          %s4277 = scalar_lea.hbm %s7, %s4276
          %s4279 = sshll.u32 %s4243, 4
          %s4280 = int_to_ptr.vmem [resolvable:$true] %s4279
          %s4281 = sshll.u32 %s4277, 4
          %s4282 = int_to_ptr.hbm [resolvable:$true] %s4281
          %4284 = dma.vmem_to_hbm [thread:$0]  %s4280, 32, %s4282, %s4240
        $region56: #{tpu_custom_call.1} parent=43 // pred_fallthru
          _
        // Predicated region
        $region57: #{tpu_custom_call.1} parent=43 // pred_check
          %p4285 = pneg %p238
        $region58: #{tpu_custom_call.1} parent=43 // pred_check_branch
          %4287 = sbr.rel (%p4285) target = $region60
        $region59: #{tpu_custom_call.1} parent=43 // pred_region
          %4289 = vsyncadd %s4245, 0
          %s4290 = smul.addr %s32, 2
          %s4291 = scalar_lea.hbm %s8, %s4290
          %s4293 = sshll.u32 %s4248, 4
          %s4294 = int_to_ptr.vmem [resolvable:$true] %s4293
          %s4295 = sshll.u32 %s4291, 4
          %s4296 = int_to_ptr.hbm [resolvable:$true] %s4295
          %4298 = dma.vmem_to_hbm [thread:$0]  %s4294, 32, %s4296, %s4245
        $region60: #{tpu_custom_call.1} parent=43 // pred_fallthru
          _
        // Predicated region
        $region61: #{tpu_custom_call.1} parent=43 // pred_check
          %p4299 = pneg %p264
        $region62: #{tpu_custom_call.1} parent=43 // pred_check_branch
          %4301 = sbr.rel (%p4299) target = $region64
        $region63: #{tpu_custom_call.1} parent=43 // pred_region
          %4303 = vsyncadd %s4250, 0
          %s4304 = scalar_lea.hbm %s9, %s32
          %s4306 = sshll.u32 %s4252, 4
          %s4307 = int_to_ptr.vmem [resolvable:$true] %s4306
          %s4308 = sshll.u32 %s4304, 4
          %s4309 = int_to_ptr.hbm [resolvable:$true] %s4308
          %4311 = dma.vmem_to_hbm [thread:$0]  %s4307, 16, %s4309, %s4250
        $region64: #{tpu_custom_call.1} parent=43 // pred_fallthru
          _
        // Predicated region
        $region65: #{tpu_custom_call.1} parent=43 // pred_check
          %p4312 = pneg %p290
        $region66: #{tpu_custom_call.1} parent=43 // pred_check_branch
          %4314 = sbr.rel (%p4312) target = $region68
        $region67: #{tpu_custom_call.1} parent=43 // pred_region
          %4316 = vsyncadd %s4254, 0
          %s4317 = scalar_lea.hbm %s10, %s32
          %s4319 = sshll.u32 %s4256, 4
          %s4320 = int_to_ptr.vmem [resolvable:$true] %s4319
          %s4321 = sshll.u32 %s4317, 4
          %s4322 = int_to_ptr.hbm [resolvable:$true] %s4321
          %4324 = dma.vmem_to_hbm [thread:$0]  %s4320, 16, %s4322, %s4254
        $region68: #{tpu_custom_call.1} parent=43 // pred_fallthru
          _
      $region44: #{tpu_custom_call.1} parent=5 // pred_fallthru
        _
      %p4325 = scmp.le.s32.totalorder 2, %s27
      // Predicated region
      $region69: #{tpu_custom_call.1} parent=5 // pred_check
        %p4326 = pneg %p4325
      $region70: #{tpu_custom_call.1} parent=5 // pred_check_branch
        %4328 = sbr.rel (%p4326) target = $region72
      $region71: #{tpu_custom_call.1} parent=5 // pred_region
        %s4329 = ssub.s32 %s27, 2
        // Predicated region
        $region73: #{tpu_custom_call.1} parent=71 // pred_check
          %p4330 = pneg %p192
        $region74: #{tpu_custom_call.1} parent=71 // pred_check_branch
          %4332 = sbr.rel (%p4330) target = $region76
        $region75: #{tpu_custom_call.1} parent=71 // pred_region
          %s4333 = sand.u32 %s177, 1
          %s4334 = scalar_lea.sflag [#allocation4], %s4333
          %s4335 = sand.u32 %s177, 1
          %s4336 = smul.addr %s4335, 2
          %s4337 = scalar_lea.vmem [#allocation5], %s4336
          %4339 = dma.done %s4334, 32
        $region76: #{tpu_custom_call.1} parent=71 // pred_fallthru
          _
        // Predicated region
        $region77: #{tpu_custom_call.1} parent=71 // pred_check
          %p4340 = pneg %p218
        $region78: #{tpu_custom_call.1} parent=71 // pred_check_branch
          %4342 = sbr.rel (%p4340) target = $region80
        $region79: #{tpu_custom_call.1} parent=71 // pred_region
          %s4343 = sand.u32 %s33, 1
          %s4344 = scalar_lea.sflag [#allocation7], %s4343
          %s4345 = sand.u32 %s203, 1
          %s4346 = smul.addr %s4345, 2
          %s4347 = scalar_lea.vmem [#allocation6], %s4346
          %4349 = dma.done %s4344, 32
        $region80: #{tpu_custom_call.1} parent=71 // pred_fallthru
          _
        // Predicated region
        $region81: #{tpu_custom_call.1} parent=71 // pred_check
          %p4350 = pneg %p244
        $region82: #{tpu_custom_call.1} parent=71 // pred_check_branch
          %4352 = sbr.rel (%p4350) target = $region84
        $region83: #{tpu_custom_call.1} parent=71 // pred_region
          %s4353 = sand.u32 %s33, 1
          %s4354 = scalar_lea.sflag [#allocation7], %s4353
          %s4355 = sand.u32 %s229, 1
          %s4356 = smul.addr %s4355, 2
          %s4357 = scalar_lea.vmem [#allocation8], %s4356
          %4359 = dma.done %s4354, 32
        $region84: #{tpu_custom_call.1} parent=71 // pred_fallthru
          _
        // Predicated region
        $region85: #{tpu_custom_call.1} parent=71 // pred_check
          %p4360 = pneg %p270
        $region86: #{tpu_custom_call.1} parent=71 // pred_check_branch
          %4362 = sbr.rel (%p4360) target = $region88
        $region87: #{tpu_custom_call.1} parent=71 // pred_region
          %s4363 = sand.u32 %s33, 1
          %s4364 = scalar_lea.sflag [#allocation10], %s4363
          %s4365 = sand.u32 %s255, 1
          %s4366 = scalar_lea.vmem [#allocation9], %s4365
          %4368 = dma.done %s4364, 16
        $region88: #{tpu_custom_call.1} parent=71 // pred_fallthru
          _
        // Predicated region
        $region89: #{tpu_custom_call.1} parent=71 // pred_check
          %p4369 = pneg %p296
        $region90: #{tpu_custom_call.1} parent=71 // pred_check_branch
          %4371 = sbr.rel (%p4369) target = $region92
        $region91: #{tpu_custom_call.1} parent=71 // pred_region
          %s4372 = sand.u32 %s33, 1
          %s4373 = scalar_lea.sflag [#allocation10], %s4372
          %s4374 = sand.u32 %s281, 1
          %s4375 = scalar_lea.vmem [#allocation11], %s4374
          %4377 = dma.done %s4373, 16
        $region92: #{tpu_custom_call.1} parent=71 // pred_fallthru
          _
      $region72: #{tpu_custom_call.1} parent=5 // pred_fallthru
        _
    $region6: #{tpu_custom_call.1} parent=1 // loop_footer
      %s31 = sadd.s32 1, %s27
    $region7: #{tpu_custom_call.1} parent=1 // loop_footer_branch
      %26 = sbr.rel target = $region3
    $region8: #{tpu_custom_call.1} parent=1 // loop_exit
      _
    %4378 = vsyncpa [#allocation3], 1
    %s4379 = scalar_lea.sflag [#allocation3], 1
    %4380 = vsyncpa %s4379, 1
    %4381 = vsyncpa [#allocation4], 1
    %s4382 = scalar_lea.sflag [#allocation4], 1
    %4383 = vsyncpa %s4382, 1
    %4384 = vsyncpa [#allocation7], 1
    %s4385 = scalar_lea.sflag [#allocation7], 1
    %4386 = vsyncpa %s4385, 1
    %4387 = vsyncpa [#allocation10], 1
    %s4388 = scalar_lea.sflag [#allocation10], 1
    %4389 = vsyncpa %s4388, 1

</llo_original>
